<compile_context>
chip_gen: v5e
topology: v5e:2x2
jax: 0.10.0
libtpu: 0.0.40
codegen_flags: <defaults>
</compile_context>

<pallas_src>
import functools
import math

import jax
import jax.numpy as jnp
from jax import lax
from jax.experimental import pallas as pl
from jax.experimental.pallas import tpu as pltpu

EPS = 1e-5
ACTS = ("leaky_relu", "leaky_relu", "leaky_relu", "sigmoid")


def _round_up(x, m):
    return -(-x // m) * m


# -----------------------------------------------------------------------------
# Pallas kernel: fused 3x3 VALID conv (single im2col matmul) + shift + act.
# -----------------------------------------------------------------------------
def _conv3x3_kernel(x_ref, w_ref, shift_ref, o_ref, *, wp, act):
    """One batch element per grid step.

    x_ref:     (1, Cin_p, Lin)  padded+upsampled image, spatial flattened with
                                row stride `wp`; Lin % 128 == 0, Cin_p % 8 == 0.
    w_ref:     (Cout, 9*Cin_p)  conv weight, tap-major, BN scale folded in.
    shift_ref: (Cout, 1)        per-channel shift (conv bias + BN folded).
    o_ref:     (1, Cout, Lout)  wide conv output, Lout = Ho * wp.
    """
    x = x_ref[0]                                   # (Cin_p, Lin)
    lin = x.shape[1]
    lout = o_ref.shape[2]

    # im2col: one rolled + truncated copy per tap, stacked along the K axis.
    taps = []
    for kh in range(3):
        for kw in range(3):
            off = kh * wp + kw
            if off == 0:
                shifted = x
            else:
                # out[q] = x[q + off] for q < lout (wrap lands past lout only).
                shifted = pltpu.roll(x, (lin - off) % lin, axis=1)
            taps.append(shifted[:, :lout])
    patches = jnp.concatenate(taps, axis=0)        # (9*Cin_p, Lout)

    # Single fused MXU matmul: K = 9*Cin_p, N = Lout (lane-dense).
    acc = jnp.dot(w_ref[...], patches, preferred_element_type=jnp.float32)

    y = acc + shift_ref[...]                       # f32 epilogue, (Cout, Lout)
    if act == "leaky_relu":
        y = jnp.where(y > 0, y, 0.2 * y)
    elif act == "sigmoid":
        y = 1.0 / (1.0 + jnp.exp(-y))
    o_ref[0] = y.astype(o_ref.dtype)


# -----------------------------------------------------------------------------
# Plain-JAX prep ops (layout / resampling plumbing feeding the kernel).
# -----------------------------------------------------------------------------
def _upsample2x_bilinear_nchw(x):
    """nn.Upsample(scale_factor=2, mode='bilinear', align_corners=False)."""
    n, c, h, w = x.shape
    xm1 = jnp.concatenate([x[:, :, :1], x[:, :, :-1]], axis=2)
    xp1 = jnp.concatenate([x[:, :, 1:], x[:, :, -1:]], axis=2)
    even = 0.25 * xm1 + 0.75 * x
    odd = 0.75 * x + 0.25 * xp1
    x = jnp.stack([even, odd], axis=3).reshape(n, c, 2 * h, w)
    xm1 = jnp.concatenate([x[..., :1], x[..., :-1]], axis=3)
    xp1 = jnp.concatenate([x[..., 1:], x[..., -1:]], axis=3)
    even = 0.25 * xm1 + 0.75 * x
    odd = 0.75 * x + 0.25 * xp1
    return jnp.stack([even, odd], axis=4).reshape(n, c, 2 * h, 2 * w)


def dc_up_block(x, wmat, shift, act):
    """One DCUpBlock: upsample2x + reflect-pad(1) + conv3x3 + affine + act.

    x:     (N, Cin, H, W) f32, NCHW (PyTorch layout).
    wmat:  (Cout, 9*Cin_p) folded conv weight (tap-major, channel padded).
    shift: (Cout, 1) folded per-channel shift.
    """
    n, cin, h, w = x.shape
    cout, k9 = wmat.shape
    cin_p = k9 // 9
    ho, wo = 2 * h, 2 * w
    hp, wp = ho + 2, wo + 2
    lout = ho * wp                            # wide row-major output length
    lin = _round_up(hp * wp + 2, 128)         # covers max tap offset, lane aligned

    up = _upsample2x_bilinear_nchw(x)                                   # (N,Cin,Ho,Wo)
    xp = jnp.pad(up, ((0, 0), (0, 0), (1, 1), (1, 1)), mode="reflect")  # (N,Cin,Hp,Wp)
    xp = jnp.pad(xp, ((0, 0), (0, cin_p - cin), (0, 0), (0, 0)))        # channel pad
    xf = xp.reshape(n, cin_p, hp * wp)
    xf = jnp.pad(xf, ((0, 0), (0, 0), (0, lin - hp * wp)))              # lane pad

    kernel = functools.partial(_conv3x3_kernel, wp=wp, act=act)

    vmem_est = 4 * (2 * cin_p * lin + 11 * cin_p * lout
                    + 3 * cout * lout + 2 * cout * k9)
    vmem_limit = int(min(max(2 * vmem_est, 16 * 2**20), 48 * 2**20))

    out_wide = pl.pallas_call(
        kernel,
        out_shape=jax.ShapeDtypeStruct((n, cout, lout), jnp.float32),
        grid_spec=pltpu.PrefetchScalarGridSpec(
            num_scalar_prefetch=0,
            grid=(n,),
            in_specs=[
                pl.BlockSpec((1, cin_p, lin), lambda i: (i, 0, 0)),
                pl.BlockSpec((cout, k9), lambda i: (0, 0)),
                pl.BlockSpec((cout, 1), lambda i: (0, 0)),
            ],
            out_specs=pl.BlockSpec((1, cout, lout), lambda i: (i, 0, 0)),
        ),
        compiler_params=pltpu.CompilerParams(
            dimension_semantics=("parallel",),
            vmem_limit_bytes=vmem_limit,
        ),
    )(xf, wmat, shift)

    # Drop the 2 garbage columns per row (cheap; XLA fuses into next block prep).
    return out_wide.reshape(n, cout, ho, wp)[:, :, :, :wo]


@jax.jit
def dcgan_forward(z, params):
    x = z
    for (wmat, shift), act in zip(params, ACTS):
        x = dc_up_block(x, wmat, shift, act)
    return x


# -----------------------------------------------------------------------------
# Parameter construction / folding and a pure-JAX reference.
# -----------------------------------------------------------------------------
def make_block_params(key, cin, cout, with_bn):
    k = jax.random.split(key, 6)
    bound = 1.0 / math.sqrt(cin * 9)
    w = jax.random.uniform(k[0], (cout, cin, 3, 3), jnp.float32, -bound, bound)
    b = jax.random.uniform(k[1], (cout,), jnp.float32, -bound, bound)
    if with_bn:
        gamma = jax.random.uniform(k[2], (cout,), jnp.float32, 0.5, 1.5)
        beta = 0.1 * jax.random.normal(k[3], (cout,), jnp.float32)
        mean = 0.1 * jax.random.normal(k[4], (cout,), jnp.float32)
        var = jax.random.uniform(k[5], (cout,), jnp.float32, 0.5, 1.5)
    else:
        gamma = jnp.ones((cout,), jnp.float32)
        beta = jnp.zeros((cout,), jnp.float32)
        mean = jnp.zeros((cout,), jnp.float32)
        var = jnp.ones((cout,), jnp.float32)
    return dict(w=w, b=b, gamma=gamma, beta=beta, mean=mean, var=var)


def fold_block_params(p, cin):
    """Fold conv bias + eval-mode BatchNorm into (wmat, shift) for the kernel."""
    w, b = p["w"], p["b"]
    cout = w.shape[0]
    cin_p = _round_up(cin, 8)
    scale = p["gamma"] / jnp.sqrt(p["var"] + EPS)            # (Cout,)
    shift = p["beta"] - p["mean"] * scale + b * scale        # (Cout,)
    w_t = jnp.transpose(w, (0, 2, 3, 1))                     # (O, KH, KW, I)
    w_t = jnp.pad(w_t, ((0, 0), (0, 0), (0, 0), (0, cin_p - cin)))
    wmat = w_t.reshape(cout, 9 * cin_p) * scale[:, None]
    return wmat, shift.reshape(cout, 1)


def _reference_forward(z, raw_params):
    """Plain-JAX reference mirroring the PyTorch forward (NCHW, eval mode)."""
    x = z
    for i, p in enumerate(raw_params):
        up = _upsample2x_bilinear_nchw(x)
        xpad = jnp.pad(up, ((0, 0), (0, 0), (1, 1), (1, 1)), mode="reflect")
        y = lax.conv_general_dilated(
            xpad, p["w"], (1, 1), "VALID",
            dimension_numbers=("NCHW", "OIHW", "NCHW"),
            precision=lax.Precision.HIGHEST)
        y = y + p["b"].reshape(1, -1, 1, 1)
        y = (y - p["mean"].reshape(1, -1, 1, 1)) / jnp.sqrt(
            p["var"].reshape(1, -1, 1, 1) + EPS)
        y = y * p["gamma"].reshape(1, -1, 1, 1) + p["beta"].reshape(1, -1, 1, 1)
        if i < len(raw_params) - 1:
            y = jnp.where(y > 0, y, 0.2 * y)      # LeakyReLU(0.2)
        else:
            y = jax.nn.sigmoid(y)
        x = y
    return x


if __name__ == "__main__":
    key = jax.random.PRNGKey(0)
    kz, kp = jax.random.split(key)

    # DCGAN(in_channels=3, out_channels=3, ngf=8, num_blocks=4): 3->32->16->8->3.
    chans = [3, 32, 16, 8, 3]
    N, H, W = 2, 4, 4                      # small latent map; output 64x64
    z = jax.random.normal(kz, (N, chans[0], H, W), jnp.float32)

    pkeys = jax.random.split(kp, len(chans) - 1)
    raw_params = []
    for i in range(len(chans) - 1):
        with_bn = i < len(chans) - 2        # last block: norm='none'
        raw_params.append(make_block_params(pkeys[i], chans[i], chans[i + 1], with_bn))
    params = tuple(fold_block_params(p, chans[i]) for i, p in enumerate(raw_params))

    out = dcgan_forward(z, params)
    out = jax.block_until_ready(out)

    ref = _reference_forward(z, raw_params)
    assert out.shape == (N, chans[-1], H * 2 ** 4, W * 2 ** 4), out.shape
    max_err = float(jnp.max(jnp.abs(out - ref)))
    assert jnp.allclose(out, ref, atol=2e-3, rtol=2e-3), max_err

    print("KERNEL_OK")
</pallas_src>

<mosaic_0001>
module attributes {stable_mosaic.version = 11 : i64} {
  func.func @_conv3x3_kernel(%arg0: i32, %arg1: memref<1x8x128xf32, #tpu.memory_space<vmem>>, %arg2: memref<32x72xf32, #tpu.memory_space<vmem>>, %arg3: memref<32x1xf32, #tpu.memory_space<vmem>>, %arg4: memref<1x32x80xf32, #tpu.memory_space<vmem>>) attributes {dimension_semantics = [#tpu.dimension_semantics<parallel>], iteration_bounds = array<i64: 2>, scalar_prefetch = 0 : i64, scratch_operands = 0 : i64, tpu.core_type = #tpu.core_type<tc>, window_params = [{transform_indices = @transform_0, window_bounds = array<i64: 1, 8, 128>}, {pipeline_mode = #tpu.pipeline_mode<synchronous>, transform_indices = @transform_1, window_bounds = array<i64: 32, 72>}, {pipeline_mode = #tpu.pipeline_mode<synchronous>, transform_indices = @transform_2, window_bounds = array<i64: 32, 1>}, {transform_indices = @transform_3, window_bounds = array<i64: 1, 32, 80>}]} {
    %c0 = arith.constant 0 : index
    %c0_0 = arith.constant 0 : index
    %c0_1 = arith.constant 0 : index
    %0 = vector.load %arg1[%c0, %c0_0, %c0_1] : memref<1x8x128xf32, #tpu.memory_space<vmem>>, vector<1x8x128xf32>
    %1 = vector.shape_cast %0 : vector<1x8x128xf32> to vector<8x128xf32>
    %2 = vector.extract_strided_slice %1 {offsets = [0, 0], sizes = [8, 80], strides = [1, 1]} : vector<8x128xf32> to vector<8x80xf32>
    %c127_i32 = arith.constant 127 : i32
    %3 = tpu.dynamic_rotate %1 by %c127_i32 dim 1 : vector<8x128xf32>, i32 -> vector<8x128xf32>
    %4 = vector.extract_strided_slice %3 {offsets = [0, 0], sizes = [8, 80], strides = [1, 1]} : vector<8x128xf32> to vector<8x80xf32>
    %c126_i32 = arith.constant 126 : i32
    %5 = tpu.dynamic_rotate %1 by %c126_i32 dim 1 : vector<8x128xf32>, i32 -> vector<8x128xf32>
    %6 = vector.extract_strided_slice %5 {offsets = [0, 0], sizes = [8, 80], strides = [1, 1]} : vector<8x128xf32> to vector<8x80xf32>
    %c118_i32 = arith.constant 118 : i32
    %7 = tpu.dynamic_rotate %1 by %c118_i32 dim 1 : vector<8x128xf32>, i32 -> vector<8x128xf32>
    %8 = vector.extract_strided_slice %7 {offsets = [0, 0], sizes = [8, 80], strides = [1, 1]} : vector<8x128xf32> to vector<8x80xf32>
    %c117_i32 = arith.constant 117 : i32
    %9 = tpu.dynamic_rotate %1 by %c117_i32 dim 1 : vector<8x128xf32>, i32 -> vector<8x128xf32>
    %10 = vector.extract_strided_slice %9 {offsets = [0, 0], sizes = [8, 80], strides = [1, 1]} : vector<8x128xf32> to vector<8x80xf32>
    %c116_i32 = arith.constant 116 : i32
    %11 = tpu.dynamic_rotate %1 by %c116_i32 dim 1 : vector<8x128xf32>, i32 -> vector<8x128xf32>
    %12 = vector.extract_strided_slice %11 {offsets = [0, 0], sizes = [8, 80], strides = [1, 1]} : vector<8x128xf32> to vector<8x80xf32>
    %c108_i32 = arith.constant 108 : i32
    %13 = tpu.dynamic_rotate %1 by %c108_i32 dim 1 : vector<8x128xf32>, i32 -> vector<8x128xf32>
    %14 = vector.extract_strided_slice %13 {offsets = [0, 0], sizes = [8, 80], strides = [1, 1]} : vector<8x128xf32> to vector<8x80xf32>
    %c107_i32 = arith.constant 107 : i32
    %15 = tpu.dynamic_rotate %1 by %c107_i32 dim 1 : vector<8x128xf32>, i32 -> vector<8x128xf32>
    %16 = vector.extract_strided_slice %15 {offsets = [0, 0], sizes = [8, 80], strides = [1, 1]} : vector<8x128xf32> to vector<8x80xf32>
    %c106_i32 = arith.constant 106 : i32
    %17 = tpu.dynamic_rotate %1 by %c106_i32 dim 1 : vector<8x128xf32>, i32 -> vector<8x128xf32>
    %18 = vector.extract_strided_slice %17 {offsets = [0, 0], sizes = [8, 80], strides = [1, 1]} : vector<8x128xf32> to vector<8x80xf32>
    %19 = tpu.concatenate %2, %4, %6, %8, %10, %12, %14, %16, %18 in 0 : vector<8x80xf32>, vector<8x80xf32>, vector<8x80xf32>, vector<8x80xf32>, vector<8x80xf32>, vector<8x80xf32>, vector<8x80xf32>, vector<8x80xf32>, vector<8x80xf32> -> vector<72x80xf32>
    %c0_2 = arith.constant 0 : index
    %c0_3 = arith.constant 0 : index
    %20 = vector.load %arg2[%c0_2, %c0_3] : memref<32x72xf32, #tpu.memory_space<vmem>>, vector<32x72xf32>
    %cst = arith.constant dense<0.000000e+00> : vector<32x80xf32>
    %21 = tpu.matmul %20, %19, %cst {dimension_numbers = #tpu.dot_dimension_numbers<[1], [0], [0], [1], [0, 0, 1, 1], [], []>} : vector<32x72xf32>, vector<72x80xf32>, vector<32x80xf32> -> vector<32x80xf32>
    %c0_4 = arith.constant 0 : index
    %c0_5 = arith.constant 0 : index
    %22 = vector.load %arg3[%c0_4, %c0_5] : memref<32x1xf32, #tpu.memory_space<vmem>>, vector<32x1xf32>
    %23 = vector.broadcast %22 : vector<32x1xf32> to vector<32x80xf32>
    %24 = arith.addf %21, %23 : vector<32x80xf32>
    %cst_6 = arith.constant 0.000000e+00 : f32
    %25 = vector.broadcast %cst_6 : f32 to vector<32x80xf32>
    %26 = arith.cmpf ogt, %24, %25 : vector<32x80xf32>
    %cst_7 = arith.constant 2.000000e-01 : f32
    %27 = vector.broadcast %cst_7 : f32 to vector<32x80xf32>
    %28 = arith.mulf %27, %24 : vector<32x80xf32>
    %29 = arith.select %26, %24, %28 : vector<32x80xi1>, vector<32x80xf32>
    %c0_8 = arith.constant 0 : index
    %c0_9 = arith.constant 0 : index
    %c0_10 = arith.constant 0 : index
    %30 = vector.load %arg4[%c0_8, %c0_9, %c0_10] : memref<1x32x80xf32, #tpu.memory_space<vmem>>, vector<1x32x80xf32>
    %31 = vector.shape_cast %30 : vector<1x32x80xf32> to vector<32x80xf32>
    %32 = vector.shape_cast %29 : vector<32x80xf32> to vector<1x32x80xf32>
    tpu.vector_store %arg4[%c0_8, %c0_9, %c0_10], %32 {strides = array<i32>} : memref<1x32x80xf32, #tpu.memory_space<vmem>>, vector<1x32x80xf32>,
    return
  }
  func.func @transform_0(%arg0: i32) -> (i32, i32, i32) {
    %c0_i32 = arith.constant 0 : i32
    %c0_i32_0 = arith.constant 0 : i32
    %c0_i32_1 = arith.constant 0 : i32
    return %arg0, %c0_i32, %c0_i32_0 : i32, i32, i32
  }
  func.func @transform_1(%arg0: i32) -> (i32, i32) {
    %c0_i32 = arith.constant 0 : i32
    %c0_i32_0 = arith.constant 0 : i32
    %c0_i32_1 = arith.constant 0 : i32
    return %c0_i32, %c0_i32_0 : i32, i32
  }
  func.func @transform_2(%arg0: i32) -> (i32, i32) {
    %c0_i32 = arith.constant 0 : i32
    %c0_i32_0 = arith.constant 0 : i32
    %c0_i32_1 = arith.constant 0 : i32
    return %c0_i32, %c0_i32_0 : i32, i32
  }
  func.func @transform_3(%arg0: i32) -> (i32, i32, i32) {
    %c0_i32 = arith.constant 0 : i32
    %c0_i32_0 = arith.constant 0 : i32
    %c0_i32_1 = arith.constant 0 : i32
    return %arg0, %c0_i32, %c0_i32_0 : i32, i32, i32
  }
}

module attributes {stable_mosaic.version = 11 : i64} {
  func.func @_conv3x3_kernel(%arg0: i32, %arg1: memref<1x32x384xf32, #tpu.memory_space<vmem>>, %arg2: memref<16x288xf32, #tpu.memory_space<vmem>>, %arg3: memref<16x1xf32, #tpu.memory_space<vmem>>, %arg4: memref<1x16x288xf32, #tpu.memory_space<vmem>>) attributes {dimension_semantics = [#tpu.dimension_semantics<parallel>], iteration_bounds = array<i64: 2>, scalar_prefetch = 0 : i64, scratch_operands = 0 : i64, tpu.core_type = #tpu.core_type<tc>, window_params = [{transform_indices = @transform_0, window_bounds = array<i64: 1, 32, 384>}, {pipeline_mode = #tpu.pipeline_mode<synchronous>, transform_indices = @transform_1, window_bounds = array<i64: 16, 288>}, {pipeline_mode = #tpu.pipeline_mode<synchronous>, transform_indices = @transform_2, window_bounds = array<i64: 16, 1>}, {transform_indices = @transform_3, window_bounds = array<i64: 1, 16, 288>}]} {
    %c0 = arith.constant 0 : index
    %c0_0 = arith.constant 0 : index
    %c0_1 = arith.constant 0 : index
    %0 = vector.load %arg1[%c0, %c0_0, %c0_1] : memref<1x32x384xf32, #tpu.memory_space<vmem>>, vector<1x32x384xf32>
    %1 = vector.shape_cast %0 : vector<1x32x384xf32> to vector<32x384xf32>
    %2 = vector.extract_strided_slice %1 {offsets = [0, 0], sizes = [32, 288], strides = [1, 1]} : vector<32x384xf32> to vector<32x288xf32>
    %c383_i32 = arith.constant 383 : i32
    %3 = tpu.dynamic_rotate %1 by %c383_i32 dim 1 : vector<32x384xf32>, i32 -> vector<32x384xf32>
    %4 = vector.extract_strided_slice %3 {offsets = [0, 0], sizes = [32, 288], strides = [1, 1]} : vector<32x384xf32> to vector<32x288xf32>
    %c382_i32 = arith.constant 382 : i32
    %5 = tpu.dynamic_rotate %1 by %c382_i32 dim 1 : vector<32x384xf32>, i32 -> vector<32x384xf32>
    %6 = vector.extract_strided_slice %5 {offsets = [0, 0], sizes = [32, 288], strides = [1, 1]} : vector<32x384xf32> to vector<32x288xf32>
    %c366_i32 = arith.constant 366 : i32
    %7 = tpu.dynamic_rotate %1 by %c366_i32 dim 1 : vector<32x384xf32>, i32 -> vector<32x384xf32>
    %8 = vector.extract_strided_slice %7 {offsets = [0, 0], sizes = [32, 288], strides = [1, 1]} : vector<32x384xf32> to vector<32x288xf32>
    %c365_i32 = arith.constant 365 : i32
    %9 = tpu.dynamic_rotate %1 by %c365_i32 dim 1 : vector<32x384xf32>, i32 -> vector<32x384xf32>
    %10 = vector.extract_strided_slice %9 {offsets = [0, 0], sizes = [32, 288], strides = [1, 1]} : vector<32x384xf32> to vector<32x288xf32>
    %c364_i32 = arith.constant 364 : i32
    %11 = tpu.dynamic_rotate %1 by %c364_i32 dim 1 : vector<32x384xf32>, i32 -> vector<32x384xf32>
    %12 = vector.extract_strided_slice %11 {offsets = [0, 0], sizes = [32, 288], strides = [1, 1]} : vector<32x384xf32> to vector<32x288xf32>
    %c348_i32 = arith.constant 348 : i32
    %13 = tpu.dynamic_rotate %1 by %c348_i32 dim 1 : vector<32x384xf32>, i32 -> vector<32x384xf32>
    %14 = vector.extract_strided_slice %13 {offsets = [0, 0], sizes = [32, 288], strides = [1, 1]} : vector<32x384xf32> to vector<32x288xf32>
    %c347_i32 = arith.constant 347 : i32
    %15 = tpu.dynamic_rotate %1 by %c347_i32 dim 1 : vector<32x384xf32>, i32 -> vector<32x384xf32>
    %16 = vector.extract_strided_slice %15 {offsets = [0, 0], sizes = [32, 288], strides = [1, 1]} : vector<32x384xf32> to vector<32x288xf32>
    %c346_i32 = arith.constant 346 : i32
    %17 = tpu.dynamic_rotate %1 by %c346_i32 dim 1 : vector<32x384xf32>, i32 -> vector<32x384xf32>
    %18 = vector.extract_strided_slice %17 {offsets = [0, 0], sizes = [32, 288], strides = [1, 1]} : vector<32x384xf32> to vector<32x288xf32>
    %19 = tpu.concatenate %2, %4, %6, %8, %10, %12, %14, %16, %18 in 0 : vector<32x288xf32>, vector<32x288xf32>, vector<32x288xf32>, vector<32x288xf32>, vector<32x288xf32>, vector<32x288xf32>, vector<32x288xf32>, vector<32x288xf32>, vector<32x288xf32> -> vector<288x288xf32>
    %c0_2 = arith.constant 0 : index
    %c0_3 = arith.constant 0 : index
    %20 = vector.load %arg2[%c0_2, %c0_3] : memref<16x288xf32, #tpu.memory_space<vmem>>, vector<16x288xf32>
    %cst = arith.constant dense<0.000000e+00> : vector<16x288xf32>
    %21 = tpu.matmul %20, %19, %cst {dimension_numbers = #tpu.dot_dimension_numbers<[1], [0], [0], [1], [0, 0, 1, 1], [], []>} : vector<16x288xf32>, vector<288x288xf32>, vector<16x288xf32> -> vector<16x288xf32>
    %c0_4 = arith.constant 0 : index
    %c0_5 = arith.constant 0 : index
    %22 = vector.load %arg3[%c0_4, %c0_5] : memref<16x1xf32, #tpu.memory_space<vmem>>, vector<16x1xf32>
    %23 = vector.broadcast %22 : vector<16x1xf32> to vector<16x288xf32>
    %24 = arith.addf %21, %23 : vector<16x288xf32>
    %cst_6 = arith.constant 0.000000e+00 : f32
    %25 = vector.broadcast %cst_6 : f32 to vector<16x288xf32>
    %26 = arith.cmpf ogt, %24, %25 : vector<16x288xf32>
    %cst_7 = arith.constant 2.000000e-01 : f32
    %27 = vector.broadcast %cst_7 : f32 to vector<16x288xf32>
    %28 = arith.mulf %27, %24 : vector<16x288xf32>
    %29 = arith.select %26, %24, %28 : vector<16x288xi1>, vector<16x288xf32>
    %c0_8 = arith.constant 0 : index
    %c0_9 = arith.constant 0 : index
    %c0_10 = arith.constant 0 : index
    %30 = vector.load %arg4[%c0_8, %c0_9, %c0_10] : memref<1x16x288xf32, #tpu.memory_space<vmem>>, vector<1x16x288xf32>
    %31 = vector.shape_cast %30 : vector<1x16x288xf32> to vector<16x288xf32>
    %32 = vector.shape_cast %29 : vector<16x288xf32> to vector<1x16x288xf32>
    tpu.vector_store %arg4[%c0_8, %c0_9, %c0_10], %32 {strides = array<i32>} : memref<1x16x288xf32, #tpu.memory_space<vmem>>, vector<1x16x288xf32>,
    return
  }
  func.func @transform_0(%arg0: i32) -> (i32, i32, i32) {
    %c0_i32 = arith.constant 0 : i32
    %c0_i32_0 = arith.constant 0 : i32
    %c0_i32_1 = arith.constant 0 : i32
    return %arg0, %c0_i32, %c0_i32_0 : i32, i32, i32
  }
  func.func @transform_1(%arg0: i32) -> (i32, i32) {
    %c0_i32 = arith.constant 0 : i32
    %c0_i32_0 = arith.constant 0 : i32
    %c0_i32_1 = arith.constant 0 : i32
    return %c0_i32, %c0_i32_0 : i32, i32
  }
  func.func @transform_2(%arg0: i32) -> (i32, i32) {
    %c0_i32 = arith.constant 0 : i32
    %c0_i32_0 = arith.constant 0 : i32
    %c0_i32_1 = arith.constant 0 : i32
    return %c0_i32, %c0_i32_0 : i32, i32
  }
  func.func @transform_3(%arg0: i32) -> (i32, i32, i32) {
    %c0_i32 = arith.constant 0 : i32
    %c0_i32_0 = arith.constant 0 : i32
    %c0_i32_1 = arith.constant 0 : i32
    return %arg0, %c0_i32, %c0_i32_0 : i32, i32, i32
  }
}

module attributes {stable_mosaic.version = 11 : i64} {
  func.func @_conv3x3_kernel(%arg0: i32, %arg1: memref<1x16x1280xf32, #tpu.memory_space<vmem>>, %arg2: memref<8x144xf32, #tpu.memory_space<vmem>>, %arg3: memref<8x1xf32, #tpu.memory_space<vmem>>, %arg4: memref<1x8x1088xf32, #tpu.memory_space<vmem>>) attributes {dimension_semantics = [#tpu.dimension_semantics<parallel>], iteration_bounds = array<i64: 2>, scalar_prefetch = 0 : i64, scratch_operands = 0 : i64, tpu.core_type = #tpu.core_type<tc>, window_params = [{transform_indices = @transform_0, window_bounds = array<i64: 1, 16, 1280>}, {pipeline_mode = #tpu.pipeline_mode<synchronous>, transform_indices = @transform_1, window_bounds = array<i64: 8, 144>}, {pipeline_mode = #tpu.pipeline_mode<synchronous>, transform_indices = @transform_2, window_bounds = array<i64: 8, 1>}, {transform_indices = @transform_3, window_bounds = array<i64: 1, 8, 1088>}]} {
    %c0 = arith.constant 0 : index
    %c0_0 = arith.constant 0 : index
    %c0_1 = arith.constant 0 : index
    %0 = vector.load %arg1[%c0, %c0_0, %c0_1] : memref<1x16x1280xf32, #tpu.memory_space<vmem>>, vector<1x16x1280xf32>
    %1 = vector.shape_cast %0 : vector<1x16x1280xf32> to vector<16x1280xf32>
    %2 = vector.extract_strided_slice %1 {offsets = [0, 0], sizes = [16, 1088], strides = [1, 1]} : vector<16x1280xf32> to vector<16x1088xf32>
    %c1279_i32 = arith.constant 1279 : i32
    %3 = tpu.dynamic_rotate %1 by %c1279_i32 dim 1 : vector<16x1280xf32>, i32 -> vector<16x1280xf32>
    %4 = vector.extract_strided_slice %3 {offsets = [0, 0], sizes = [16, 1088], strides = [1, 1]} : vector<16x1280xf32> to vector<16x1088xf32>
    %c1278_i32 = arith.constant 1278 : i32
    %5 = tpu.dynamic_rotate %1 by %c1278_i32 dim 1 : vector<16x1280xf32>, i32 -> vector<16x1280xf32>
    %6 = vector.extract_strided_slice %5 {offsets = [0, 0], sizes = [16, 1088], strides = [1, 1]} : vector<16x1280xf32> to vector<16x1088xf32>
    %c1246_i32 = arith.constant 1246 : i32
    %7 = tpu.dynamic_rotate %1 by %c1246_i32 dim 1 : vector<16x1280xf32>, i32 -> vector<16x1280xf32>
    %8 = vector.extract_strided_slice %7 {offsets = [0, 0], sizes = [16, 1088], strides = [1, 1]} : vector<16x1280xf32> to vector<16x1088xf32>
    %c1245_i32 = arith.constant 1245 : i32
    %9 = tpu.dynamic_rotate %1 by %c1245_i32 dim 1 : vector<16x1280xf32>, i32 -> vector<16x1280xf32>
    %10 = vector.extract_strided_slice %9 {offsets = [0, 0], sizes = [16, 1088], strides = [1, 1]} : vector<16x1280xf32> to vector<16x1088xf32>
    %c1244_i32 = arith.constant 1244 : i32
    %11 = tpu.dynamic_rotate %1 by %c1244_i32 dim 1 : vector<16x1280xf32>, i32 -> vector<16x1280xf32>
    %12 = vector.extract_strided_slice %11 {offsets = [0, 0], sizes = [16, 1088], strides = [1, 1]} : vector<16x1280xf32> to vector<16x1088xf32>
    %c1212_i32 = arith.constant 1212 : i32
    %13 = tpu.dynamic_rotate %1 by %c1212_i32 dim 1 : vector<16x1280xf32>, i32 -> vector<16x1280xf32>
    %14 = vector.extract_strided_slice %13 {offsets = [0, 0], sizes = [16, 1088], strides = [1, 1]} : vector<16x1280xf32> to vector<16x1088xf32>
    %c1211_i32 = arith.constant 1211 : i32
    %15 = tpu.dynamic_rotate %1 by %c1211_i32 dim 1 : vector<16x1280xf32>, i32 -> vector<16x1280xf32>
    %16 = vector.extract_strided_slice %15 {offsets = [0, 0], sizes = [16, 1088], strides = [1, 1]} : vector<16x1280xf32> to vector<16x1088xf32>
    %c1210_i32 = arith.constant 1210 : i32
    %17 = tpu.dynamic_rotate %1 by %c1210_i32 dim 1 : vector<16x1280xf32>, i32 -> vector<16x1280xf32>
    %18 = vector.extract_strided_slice %17 {offsets = [0, 0], sizes = [16, 1088], strides = [1, 1]} : vector<16x1280xf32> to vector<16x1088xf32>
    %19 = tpu.concatenate %2, %4, %6, %8, %10, %12, %14, %16, %18 in 0 : vector<16x1088xf32>, vector<16x1088xf32>, vector<16x1088xf32>, vector<16x1088xf32>, vector<16x1088xf32>, vector<16x1088xf32>, vector<16x1088xf32>, vector<16x1088xf32>, vector<16x1088xf32> -> vector<144x1088xf32>
    %c0_2 = arith.constant 0 : index
    %c0_3 = arith.constant 0 : index
    %20 = vector.load %arg2[%c0_2, %c0_3] : memref<8x144xf32, #tpu.memory_space<vmem>>, vector<8x144xf32>
    %cst = arith.constant dense<0.000000e+00> : vector<8x1088xf32>
    %21 = tpu.matmul %20, %19, %cst {dimension_numbers = #tpu.dot_dimension_numbers<[1], [0], [0], [1], [0, 0, 1, 1], [], []>} : vector<8x144xf32>, vector<144x1088xf32>, vector<8x1088xf32> -> vector<8x1088xf32>
    %c0_4 = arith.constant 0 : index
    %c0_5 = arith.constant 0 : index
    %22 = vector.load %arg3[%c0_4, %c0_5] : memref<8x1xf32, #tpu.memory_space<vmem>>, vector<8x1xf32>
    %23 = vector.broadcast %22 : vector<8x1xf32> to vector<8x1088xf32>
    %24 = arith.addf %21, %23 : vector<8x1088xf32>
    %cst_6 = arith.constant 0.000000e+00 : f32
    %25 = vector.broadcast %cst_6 : f32 to vector<8x1088xf32>
    %26 = arith.cmpf ogt, %24, %25 : vector<8x1088xf32>
    %cst_7 = arith.constant 2.000000e-01 : f32
    %27 = vector.broadcast %cst_7 : f32 to vector<8x1088xf32>
    %28 = arith.mulf %27, %24 : vector<8x1088xf32>
    %29 = arith.select %26, %24, %28 : vector<8x1088xi1>, vector<8x1088xf32>
    %c0_8 = arith.constant 0 : index
    %c0_9 = arith.constant 0 : index
    %c0_10 = arith.constant 0 : index
    %30 = vector.load %arg4[%c0_8, %c0_9, %c0_10] : memref<1x8x1088xf32, #tpu.memory_space<vmem>>, vector<1x8x1088xf32>
    %31 = vector.shape_cast %30 : vector<1x8x1088xf32> to vector<8x1088xf32>
    %32 = vector.shape_cast %29 : vector<8x1088xf32> to vector<1x8x1088xf32>
    tpu.vector_store %arg4[%c0_8, %c0_9, %c0_10], %32 {strides = array<i32>} : memref<1x8x1088xf32, #tpu.memory_space<vmem>>, vector<1x8x1088xf32>,
    return
  }
  func.func @transform_0(%arg0: i32) -> (i32, i32, i32) {
    %c0_i32 = arith.constant 0 : i32
    %c0_i32_0 = arith.constant 0 : i32
    %c0_i32_1 = arith.constant 0 : i32
    return %arg0, %c0_i32, %c0_i32_0 : i32, i32, i32
  }
  func.func @transform_1(%arg0: i32) -> (i32, i32) {
    %c0_i32 = arith.constant 0 : i32
    %c0_i32_0 = arith.constant 0 : i32
    %c0_i32_1 = arith.constant 0 : i32
    return %c0_i32, %c0_i32_0 : i32, i32
  }
  func.func @transform_2(%arg0: i32) -> (i32, i32) {
    %c0_i32 = arith.constant 0 : i32
    %c0_i32_0 = arith.constant 0 : i32
    %c0_i32_1 = arith.constant 0 : i32
    return %c0_i32, %c0_i32_0 : i32, i32
  }
  func.func @transform_3(%arg0: i32) -> (i32, i32, i32) {
    %c0_i32 = arith.constant 0 : i32
    %c0_i32_0 = arith.constant 0 : i32
    %c0_i32_1 = arith.constant 0 : i32
    return %arg0, %c0_i32, %c0_i32_0 : i32, i32, i32
  }
}

module attributes {stable_mosaic.version = 11 : i64} {
  func.func @_conv3x3_kernel(%arg0: i32, %arg1: memref<1x8x4480xf32, #tpu.memory_space<vmem>>, %arg2: memref<3x72xf32, #tpu.memory_space<vmem>>, %arg3: memref<3x1xf32, #tpu.memory_space<vmem>>, %arg4: memref<1x3x4224xf32, #tpu.memory_space<vmem>>) attributes {dimension_semantics = [#tpu.dimension_semantics<parallel>], iteration_bounds = array<i64: 2>, scalar_prefetch = 0 : i64, scratch_operands = 0 : i64, tpu.core_type = #tpu.core_type<tc>, window_params = [{transform_indices = @transform_0, window_bounds = array<i64: 1, 8, 4480>}, {pipeline_mode = #tpu.pipeline_mode<synchronous>, transform_indices = @transform_1, window_bounds = array<i64: 3, 72>}, {pipeline_mode = #tpu.pipeline_mode<synchronous>, transform_indices = @transform_2, window_bounds = array<i64: 3, 1>}, {transform_indices = @transform_3, window_bounds = array<i64: 1, 3, 4224>}]} {
    %c0 = arith.constant 0 : index
    %c0_0 = arith.constant 0 : index
    %c0_1 = arith.constant 0 : index
    %0 = vector.load %arg1[%c0, %c0_0, %c0_1] : memref<1x8x4480xf32, #tpu.memory_space<vmem>>, vector<1x8x4480xf32>
    %1 = vector.shape_cast %0 : vector<1x8x4480xf32> to vector<8x4480xf32>
    %2 = vector.extract_strided_slice %1 {offsets = [0, 0], sizes = [8, 4224], strides = [1, 1]} : vector<8x4480xf32> to vector<8x4224xf32>
    %c4479_i32 = arith.constant 4479 : i32
    %3 = tpu.dynamic_rotate %1 by %c4479_i32 dim 1 : vector<8x4480xf32>, i32 -> vector<8x4480xf32>
    %4 = vector.extract_strided_slice %3 {offsets = [0, 0], sizes = [8, 4224], strides = [1, 1]} : vector<8x4480xf32> to vector<8x4224xf32>
    %c4478_i32 = arith.constant 4478 : i32
    %5 = tpu.dynamic_rotate %1 by %c4478_i32 dim 1 : vector<8x4480xf32>, i32 -> vector<8x4480xf32>
    %6 = vector.extract_strided_slice %5 {offsets = [0, 0], sizes = [8, 4224], strides = [1, 1]} : vector<8x4480xf32> to vector<8x4224xf32>
    %c4414_i32 = arith.constant 4414 : i32
    %7 = tpu.dynamic_rotate %1 by %c4414_i32 dim 1 : vector<8x4480xf32>, i32 -> vector<8x4480xf32>
    %8 = vector.extract_strided_slice %7 {offsets = [0, 0], sizes = [8, 4224], strides = [1, 1]} : vector<8x4480xf32> to vector<8x4224xf32>
    %c4413_i32 = arith.constant 4413 : i32
    %9 = tpu.dynamic_rotate %1 by %c4413_i32 dim 1 : vector<8x4480xf32>, i32 -> vector<8x4480xf32>
    %10 = vector.extract_strided_slice %9 {offsets = [0, 0], sizes = [8, 4224], strides = [1, 1]} : vector<8x4480xf32> to vector<8x4224xf32>
    %c4412_i32 = arith.constant 4412 : i32
    %11 = tpu.dynamic_rotate %1 by %c4412_i32 dim 1 : vector<8x4480xf32>, i32 -> vector<8x4480xf32>
    %12 = vector.extract_strided_slice %11 {offsets = [0, 0], sizes = [8, 4224], strides = [1, 1]} : vector<8x4480xf32> to vector<8x4224xf32>
    %c4348_i32 = arith.constant 4348 : i32
    %13 = tpu.dynamic_rotate %1 by %c4348_i32 dim 1 : vector<8x4480xf32>, i32 -> vector<8x4480xf32>
    %14 = vector.extract_strided_slice %13 {offsets = [0, 0], sizes = [8, 4224], strides = [1, 1]} : vector<8x4480xf32> to vector<8x4224xf32>
    %c4347_i32 = arith.constant 4347 : i32
    %15 = tpu.dynamic_rotate %1 by %c4347_i32 dim 1 : vector<8x4480xf32>, i32 -> vector<8x4480xf32>
    %16 = vector.extract_strided_slice %15 {offsets = [0, 0], sizes = [8, 4224], strides = [1, 1]} : vector<8x4480xf32> to vector<8x4224xf32>
    %c4346_i32 = arith.constant 4346 : i32
    %17 = tpu.dynamic_rotate %1 by %c4346_i32 dim 1 : vector<8x4480xf32>, i32 -> vector<8x4480xf32>
    %18 = vector.extract_strided_slice %17 {offsets = [0, 0], sizes = [8, 4224], strides = [1, 1]} : vector<8x4480xf32> to vector<8x4224xf32>
    %19 = tpu.concatenate %2, %4, %6, %8, %10, %12, %14, %16, %18 in 0 : vector<8x4224xf32>, vector<8x4224xf32>, vector<8x4224xf32>, vector<8x4224xf32>, vector<8x4224xf32>, vector<8x4224xf32>, vector<8x4224xf32>, vector<8x4224xf32>, vector<8x4224xf32> -> vector<72x4224xf32>
    %c0_2 = arith.constant 0 : index
    %c0_3 = arith.constant 0 : index
    %20 = vector.load %arg2[%c0_2, %c0_3] : memref<3x72xf32, #tpu.memory_space<vmem>>, vector<3x72xf32>
    %cst = arith.constant dense<0.000000e+00> : vector<3x4224xf32>
    %21 = tpu.matmul %20, %19, %cst {dimension_numbers = #tpu.dot_dimension_numbers<[1], [0], [0], [1], [0, 0, 1, 1], [], []>} : vector<3x72xf32>, vector<72x4224xf32>, vector<3x4224xf32> -> vector<3x4224xf32>
    %c0_4 = arith.constant 0 : index
    %c0_5 = arith.constant 0 : index
    %22 = vector.load %arg3[%c0_4, %c0_5] : memref<3x1xf32, #tpu.memory_space<vmem>>, vector<3x1xf32>
    %23 = vector.broadcast %22 : vector<3x1xf32> to vector<3x4224xf32>
    %24 = arith.addf %21, %23 : vector<3x4224xf32>
    %cst_6 = arith.constant 0.000000e+00 : f32
    %25 = vector.broadcast %cst_6 : f32 to vector<3x4224xf32>
    %26 = arith.subf %25, %24 : vector<3x4224xf32>
    %27 = math.exp %26 : vector<3x4224xf32>
    %cst_7 = arith.constant 1.000000e+00 : f32
    %28 = vector.broadcast %cst_7 : f32 to vector<3x4224xf32>
    %29 = arith.addf %28, %27 : vector<3x4224xf32>
    %cst_8 = arith.constant 1.000000e+00 : f32
    %30 = vector.broadcast %cst_8 : f32 to vector<3x4224xf32>
    %31 = arith.divf %30, %29 : vector<3x4224xf32>
    %c0_9 = arith.constant 0 : index
    %c0_10 = arith.constant 0 : index
    %c0_11 = arith.constant 0 : index
    %32 = vector.load %arg4[%c0_9, %c0_10, %c0_11] : memref<1x3x4224xf32, #tpu.memory_space<vmem>>, vector<1x3x4224xf32>
    %33 = vector.shape_cast %32 : vector<1x3x4224xf32> to vector<3x4224xf32>
    %34 = vector.shape_cast %31 : vector<3x4224xf32> to vector<1x3x4224xf32>
    tpu.vector_store %arg4[%c0_9, %c0_10, %c0_11], %34 {strides = array<i32>} : memref<1x3x4224xf32, #tpu.memory_space<vmem>>, vector<1x3x4224xf32>,
    return
  }
  func.func @transform_0(%arg0: i32) -> (i32, i32, i32) {
    %c0_i32 = arith.constant 0 : i32
    %c0_i32_0 = arith.constant 0 : i32
    %c0_i32_1 = arith.constant 0 : i32
    return %arg0, %c0_i32, %c0_i32_0 : i32, i32, i32
  }
  func.func @transform_1(%arg0: i32) -> (i32, i32) {
    %c0_i32 = arith.constant 0 : i32
    %c0_i32_0 = arith.constant 0 : i32
    %c0_i32_1 = arith.constant 0 : i32
    return %c0_i32, %c0_i32_0 : i32, i32
  }
  func.func @transform_2(%arg0: i32) -> (i32, i32) {
    %c0_i32 = arith.constant 0 : i32
    %c0_i32_0 = arith.constant 0 : i32
    %c0_i32_1 = arith.constant 0 : i32
    return %c0_i32, %c0_i32_0 : i32, i32
  }
  func.func @transform_3(%arg0: i32) -> (i32, i32, i32) {
    %c0_i32 = arith.constant 0 : i32
    %c0_i32_0 = arith.constant 0 : i32
    %c0_i32_1 = arith.constant 0 : i32
    return %arg0, %c0_i32, %c0_i32_0 : i32, i32, i32
  }
}

</mosaic_0001>

<llo_original>
// kernel: dcgan_forward.4
$region0: #{dcgan_forward.4}
  #allocation0 [shape = 'u32[]', space=smem, size = 0x4, offset = 0x4, fixed_abs, tag = 'smem constant byte address 0x4 - core index']
  #allocation1 [shape = 'u32[72,128]{1,0:T(1,128)}', space=vmem, size = 0x9000, scoped, tag = 'internal scratch']
  %s0 = inlined_call_operand.vmem [shape: f32[2,8,128], index: 0, kind: input, shape index: {}]
  %s1 = inlined_call_operand.vmem [shape: f32[32,72], index: 1, kind: input, shape index: {}]
  %s2 = inlined_call_operand.vmem [shape: f32[32,1], index: 2, kind: input, shape index: {}]
  %s3 = inlined_call_operand.vmem [shape: f32[2,32,80], index: 3, kind: output, shape index: {}]
  %s4 = sld [smem:[#allocation0]]
  $region45: #{dcgan_forward.4} parent=0
    _
  %s6 = ssub.s32 1, %s4
  %s7 = scalar_select 0, %s6, %s4
  loop: start=0, step=1, limit=4
  $region2: #{dcgan_forward.4} parent=0 // loop_pre_header
    _
  $region3: #{dcgan_forward.4} parent=0 // loop_header
    %s9 = sphi 0, %s13
    %p10 = scmp.ge.s32.totalorder %s9, 4
    %s19 = sphi 0, %s21
    %s22 = sphi 0, %s19
    %s23 = sphi 0, %s22
    %s39 = sphi 0, %s23
    %s43 = sphi 0, %s43
    %s45 = sphi 0, %s43
    %s46 = sphi 0, %s45
    %s60 = sphi 0, %s46
    %s64 = sphi 0, %s64
    %s66 = sphi 0, %s64
    %s67 = sphi 0, %s66
    %s81 = sphi 0, %s67
    %s87 = sphi 0, %s89
    %s90 = sphi 0, %s87
    %s91 = sphi 0, %s90
    %s107 = sphi 0, %s91
  $region4: #{dcgan_forward.4} parent=0 // loop_header_branch
    %12 = sbr.rel (%p10) target = $region8
  $region5: #{dcgan_forward.4} parent=0 // loop_body
    %s14 = ssub.s32 %s9, 1
    %s15 = ssub.s32 %s9, 2
    %s16 = sadd.s32 %s9, 1
    %s17 = ssub.s32 %s9, %s16
    %p18 = scmp.eq.s32.totalorder %s17, 0
    %s20 = sadd.s32 %s19, 1
    %s21 = scalar_select %p18, %s19, %s20
    %p24 = pneg %p18
    %p25 = scmp.eq.s32.totalorder %s9, 1
    %p26 = por %p24, %p25
    %p27 = scmp.ne.s32.totalorder %s19, %s22
    %p28 = scmp.eq.s32.totalorder %s9, 0
    %p29 = por %p27, %p28
    %p30 = scmp.ne.s32.totalorder %s19, %s22
    %p31 = scmp.eq.s32.totalorder %s14, 1
    %p32 = por %p30, %p31
    %p33 = scmp.ne.s32.totalorder %s22, %s23
    %p34 = scmp.eq.s32.totalorder %s14, 0
    %p35 = por %p33, %p34
    %p36 = scmp.ne.s32.totalorder %s22, %s23
    %p37 = scmp.eq.s32.totalorder %s15, 1
    %p38 = por %p36, %p37
    %p40 = scmp.ne.s32.totalorder %s23, %s39
    %p41 = scmp.eq.s32.totalorder %s15, 0
    %p42 = por %p40, %p41
    %s44 = sadd.s32 %s43, 1
    %p47 = scmp.eq.s32.totalorder %s9, 1
    %p48 = scmp.ne.s32.totalorder %s43, %s45
    %p49 = scmp.eq.s32.totalorder %s9, 0
    %p50 = por %p48, %p49
    %p51 = scmp.ne.s32.totalorder %s43, %s45
    %p52 = scmp.eq.s32.totalorder %s14, 1
    %p53 = por %p51, %p52
    %p54 = scmp.ne.s32.totalorder %s45, %s46
    %p55 = scmp.eq.s32.totalorder %s14, 0
    %p56 = por %p54, %p55
    %p57 = scmp.ne.s32.totalorder %s45, %s46
    %p58 = scmp.eq.s32.totalorder %s15, 1
    %p59 = por %p57, %p58
    %p61 = scmp.ne.s32.totalorder %s46, %s60
    %p62 = scmp.eq.s32.totalorder %s15, 0
    %p63 = por %p61, %p62
    %s65 = sadd.s32 %s64, 1
    %p68 = scmp.eq.s32.totalorder %s9, 1
    %p69 = scmp.ne.s32.totalorder %s64, %s66
    %p70 = scmp.eq.s32.totalorder %s9, 0
    %p71 = por %p69, %p70
    %p72 = scmp.ne.s32.totalorder %s64, %s66
    %p73 = scmp.eq.s32.totalorder %s14, 1
    %p74 = por %p72, %p73
    %p75 = scmp.ne.s32.totalorder %s66, %s67
    %p76 = scmp.eq.s32.totalorder %s14, 0
    %p77 = por %p75, %p76
    %p78 = scmp.ne.s32.totalorder %s66, %s67
    %p79 = scmp.eq.s32.totalorder %s15, 1
    %p80 = por %p78, %p79
    %p82 = scmp.ne.s32.totalorder %s67, %s81
    %p83 = scmp.eq.s32.totalorder %s15, 0
    %p84 = por %p82, %p83
    %s85 = ssub.s32 %s9, %s16
    %p86 = scmp.eq.s32.totalorder %s85, 0
    %s88 = sadd.s32 %s87, 1
    %s89 = scalar_select %p86, %s87, %s88
    %p92 = pneg %p86
    %p93 = scmp.eq.s32.totalorder %s9, 1
    %p94 = por %p92, %p93
    %p95 = scmp.ne.s32.totalorder %s87, %s90
    %p96 = scmp.eq.s32.totalorder %s9, 0
    %p97 = por %p95, %p96
    %p98 = scmp.ne.s32.totalorder %s87, %s90
    %p99 = scmp.eq.s32.totalorder %s14, 1
    %p100 = por %p98, %p99
    %p101 = scmp.ne.s32.totalorder %s90, %s91
    %p102 = scmp.eq.s32.totalorder %s14, 0
    %p103 = por %p101, %p102
    %p104 = scmp.ne.s32.totalorder %s90, %s91
    %p105 = scmp.eq.s32.totalorder %s15, 1
    %p106 = por %p104, %p105
    %p108 = scmp.ne.s32.totalorder %s91, %s107
    %p109 = scmp.eq.s32.totalorder %s15, 0
    %p110 = por %p108, %p109
    %p111 = scmp.le.s32.totalorder 1, %s9
    %p112 = scmp.lt.s32.totalorder %s9, 3
    %p113 = pnand %p111, %p112
    %p114 = pneg %p113
    // Predicated region
    $region9: #{dcgan_forward.4} parent=5 // pred_check
      _
    $region10: #{dcgan_forward.4} parent=5 // pred_check_branch
      %116 = sbr.rel (%p113) target = $region12
    $region11: #{dcgan_forward.4} parent=5 // pred_region
      %s117 = ssub.s32 %s9, 1
      // Predicated region
      $region13: #{dcgan_forward.4} parent=11 // pred_check
        %p118 = pneg %p56
      $region14: #{dcgan_forward.4} parent=11 // pred_check_branch
        %120 = sbr.rel (%p118) target = $region16
      $region15: #{dcgan_forward.4} parent=11 // pred_region
        _
      $region16: #{dcgan_forward.4} parent=11 // pred_fallthru
        _
      // Predicated region
      $region17: #{dcgan_forward.4} parent=11 // pred_check
        %p121 = pneg %p77
      $region18: #{dcgan_forward.4} parent=11 // pred_check_branch
        %123 = sbr.rel (%p121) target = $region20
      $region19: #{dcgan_forward.4} parent=11 // pred_region
        _
      $region20: #{dcgan_forward.4} parent=11 // pred_fallthru
        _
    $region12: #{dcgan_forward.4} parent=5 // pred_fallthru
      _
    %p124 = scmp.lt.s32.totalorder %s9, 2
    // Predicated region
    $region21: #{dcgan_forward.4} parent=5 // pred_check
      %p125 = pneg %p124
    $region22: #{dcgan_forward.4} parent=5 // pred_check_branch
      %127 = sbr.rel (%p125) target = $region24
    $region23: #{dcgan_forward.4} parent=5 // pred_region
      // Predicated region
      $region25: #{dcgan_forward.4} parent=23 // pred_check
        %p128 = pneg %p29
      $region26: #{dcgan_forward.4} parent=23 // pred_check_branch
        %130 = sbr.rel (%p128) target = $region28
      $region27: #{dcgan_forward.4} parent=23 // pred_region
        %p131 = scmp.lt.s32.totalorder %s9, 1
        %s132 = scalar_select %p131, %s9, 1
        %s133 = smul.addr %s132, 8
        %s134 = scalar_lea.vmem %s0, %s133
      $region28: #{dcgan_forward.4} parent=23 // pred_fallthru
        _
    $region24: #{dcgan_forward.4} parent=5 // pred_fallthru
      _
    %p135 = scmp.le.s32.totalorder 1, %s9
    %p136 = scmp.lt.s32.totalorder %s9, 3
    %p137 = pnand %p135, %p136
    %p138 = pneg %p137
    // Predicated region
    $region29: #{dcgan_forward.4} parent=5 // pred_check
      _
    $region30: #{dcgan_forward.4} parent=5 // pred_check_branch
      %140 = sbr.rel (%p137) target = $region32
    $region31: #{dcgan_forward.4} parent=5 // pred_region
      %s141 = ssub.s32 %s9, 1
      %p142 = scmp.lt.s32.totalorder %s14, 1
      %s143 = scalar_select %p142, %s14, 1
      %s144 = smul.addr %s143, 8
      %s145 = scalar_lea.vmem %s0, %s144
      %p146 = pneg %p35
      %p147 = pneg %p32
      %p148 = pneg %p56
      %p149 = pneg %p53
      %p150 = pneg %p77
      %p151 = pneg %p74
      %p152 = pneg %p103
      %p153 = pneg %p100
      %p154 = scmp.lt.s32.totalorder %s14, 1
      %s155 = scalar_select %p154, %s14, 1
      %s156 = smul.addr %s155, 4
      %s157 = smul.addr %s156, 8
      %s158 = scalar_lea.vmem %s3, %s157
      %p159 = scmp.lt.s32.totalorder %s14, 1
      %s160 = scalar_select %p159, %s14, 1
      %s161 = smul.addr %s160, 8
      %s162 = scalar_lea.vmem %s0, %s161
      %p163 = scmp.lt.s32.totalorder %s14, 1
      %s164 = scalar_select %p163, %s14, 1
      %s165 = smul.addr %s164, 4
      %s166 = smul.addr %s165, 8
      %s167 = scalar_lea.vmem %s3, %s166
      %v168 = vld [vmem:[%s162] sm:$0xff]
      %169 = vrot.lane.b32.xlu0 %v168, 127
      %v170 = vpop.permute.xlu0 %169
      %171 = vrot.lane.b32.xlu0 %v168, 126
      %v172 = vpop.permute.xlu0 %171
      %173 = vrot.lane.b32.xlu0 %v168, 118
      %v174 = vpop.permute.xlu0 %173
      %175 = vrot.lane.b32.xlu0 %v168, 117
      %v176 = vpop.permute.xlu0 %175
      %177 = vrot.lane.b32.xlu0 %v168, 116
      %v178 = vpop.permute.xlu0 %177
      %179 = vrot.lane.b32.xlu0 %v168, 108
      %v180 = vpop.permute.xlu0 %179
      %181 = vrot.lane.b32.xlu0 %v168, 107
      %v182 = vpop.permute.xlu0 %181
      %183 = vrot.lane.b32.xlu0 %v168, 106
      %v184 = vpop.permute.xlu0 %183
      %v185 = vld [vmem:[%s1] sm:$0xff]
      %v186 = vld [vmem:[%s1 + $0x8] sm:$0xff]
      %v187 = vld [vmem:[%s1 + $0x10] sm:$0xff]
      %v188 = vld [vmem:[%s1 + $0x18] sm:$0xff]
      %v189 = vld [vmem:[%s2] sm:$0xff]
      %v190 = vld [vmem:[%s2 + $0x8] sm:$0xff]
      %v191 = vld [vmem:[%s2 + $0x10] sm:$0xff]
      %v192 = vld [vmem:[%s2 + $0x18] sm:$0xff]
      %194 = vset.pattern.permute.xlu0 0
      %195 = vperm.xlu0 %194, %v189
      %v196 = vpop.permute.xlu0 %195
      %199 = vset.pattern.permute.xlu0 0
      %200 = vperm.xlu0 %199, %v190
      %v201 = vpop.permute.xlu0 %200
      %204 = vset.pattern.permute.xlu0 0
      %205 = vperm.xlu0 %204, %v191
      %v206 = vpop.permute.xlu0 %205
      %209 = vset.pattern.permute.xlu0 0
      %210 = vperm.xlu0 %209, %v192
      %v211 = vpop.permute.xlu0 %210
      %vm213 = vcmask 588800
      %v215 = vsel %vm213, %v185, 0
      %v218 = vsel %vm213, %v186, 0
      %v221 = vsel %vm213, %v187, 0
      %v224 = vsel %vm213, %v188, 0
      %226 = vmatpush.msra.mxu0 0.0
      %227 = vmatpush.msra.mxu0 0.0
      %228 = vmatpush.msra.mxu0 0.0
      %229 = vmatpush.msra.mxu0 0.0
      %230 = vmatpush.msra.mxu0 0.0
      %231 = vmatpush.msra.mxu0 0.0
      %232 = vmatpush.msra.mxu0 0.0
      %233 = vmatpush.msra.mxu0 %v184
      %234 = vmatpush.msra.mxu0 %v182
      %235 = vmatpush.msra.mxu0 %v180
      %236 = vmatpush.msra.mxu0 %v178
      %237 = vmatpush.msra.mxu0 %v176
      %238 = vmatpush.msra.mxu0 %v174
      %239 = vmatpush.msra.mxu0 %v172
      %240 = vmatpush.msra.mxu0 %v170
      %241 = vmatpush.msra.mxu0 %v168
      %242 = vmatmul.f32.gmra.mxu0 %v215
      %v243 = vpop.f32.mrf.mxu0
      %v244 = vadd.f32 %v196, %v243
      %245 = vmatmul.f32.gmra.mxu0 %v218
      %v246 = vpop.f32.mrf.mxu0
      %v247 = vadd.f32 %v201, %v246
      %248 = vmatmul.f32.gmra.mxu0 %v221
      %v249 = vpop.f32.mrf.mxu0
      %v250 = vadd.f32 %v206, %v249
      %251 = vmatmul.f32.gmra.mxu0 %v224
      %v252 = vpop.f32.mrf.mxu0
      %v253 = vadd.f32 %v211, %v252
      %254 = vdwg.mxu0
      %vm255 = vcmp.gt.f32.partialorder %v244, 0.0
      %vm256 = vcmp.gt.f32.partialorder %v247, 0.0
      %vm257 = vcmp.gt.f32.partialorder %v250, 0.0
      %vm258 = vcmp.gt.f32.partialorder %v253, 0.0
      %v259 = vmul.f32 %v244, 0.2
      %v260 = vmul.f32 %v247, 0.2
      %v261 = vmul.f32 %v250, 0.2
      %v262 = vmul.f32 %v253, 0.2
      %v263 = vsel %vm255, %v244, %v259
      %v264 = vsel %vm256, %v247, %v260
      %v265 = vsel %vm257, %v250, %v261
      %v266 = vsel %vm258, %v253, %v262
      %vm267 = vcmask 654336
      %268 = vst.msk [vmem:[%s167] sm:$0xff] %vm267, %v263
      %269 = vst.msk [vmem:[%s167 + $0x8] sm:$0xff] %vm267, %v264
      %270 = vst.msk [vmem:[%s167 + $0x10] sm:$0xff] %vm267, %v265
      %271 = vst.msk [vmem:[%s167 + $0x18] sm:$0xff] %vm267, %v266
      %p272 = scmp.lt.s32.totalorder %s14, 1
      %s273 = scalar_select %p272, %s14, 1
      %s274 = smul.addr %s273, 4
      %s275 = smul.addr %s274, 8
      %s276 = scalar_lea.vmem %s3, %s275
      // Predicated region
      $region33: #{dcgan_forward.4} parent=31 // pred_check
        %p277 = pneg %p100
      $region34: #{dcgan_forward.4} parent=31 // pred_check_branch
        %279 = sbr.rel (%p277) target = $region36
      $region35: #{dcgan_forward.4} parent=31 // pred_region
        _
      $region36: #{dcgan_forward.4} parent=31 // pred_fallthru
        _
    $region32: #{dcgan_forward.4} parent=5 // pred_fallthru
      _
    %p280 = scmp.le.s32.totalorder 2, %s9
    // Predicated region
    $region37: #{dcgan_forward.4} parent=5 // pred_check
      %p281 = pneg %p280
    $region38: #{dcgan_forward.4} parent=5 // pred_check_branch
      %283 = sbr.rel (%p281) target = $region40
    $region39: #{dcgan_forward.4} parent=5 // pred_region
      %s284 = ssub.s32 %s9, 2
      // Predicated region
      $region41: #{dcgan_forward.4} parent=39 // pred_check
        %p285 = pneg %p106
      $region42: #{dcgan_forward.4} parent=39 // pred_check_branch
        %287 = sbr.rel (%p285) target = $region44
      $region43: #{dcgan_forward.4} parent=39 // pred_region
        %p288 = scmp.lt.s32.totalorder %s15, 1
        %s289 = scalar_select %p288, %s15, 1
        %s290 = smul.addr %s289, 4
        %s291 = smul.addr %s290, 8
        %s292 = scalar_lea.vmem %s3, %s291
      $region44: #{dcgan_forward.4} parent=39 // pred_fallthru
        _
    $region40: #{dcgan_forward.4} parent=5 // pred_fallthru
      _
  $region6: #{dcgan_forward.4} parent=0 // loop_footer
    %s13 = sadd.s32 1, %s9
  $region7: #{dcgan_forward.4} parent=0 // loop_footer_branch
    %8 = sbr.rel target = $region3
  $region8: #{dcgan_forward.4} parent=0 // loop_exit
    _

// kernel: dcgan_forward.5
$region0: #{dcgan_forward.5}
  #allocation0 [shape = 'u32[]', space=smem, size = 0x4, offset = 0x4, fixed_abs, tag = 'smem constant byte address 0x4 - core index']
  #allocation1 [shape = 'u32[72,128]{1,0:T(1,128)}', space=vmem, size = 0x9000, scoped, tag = 'internal scratch']
  %s0 = inlined_call_operand.vmem [shape: f32[2,32,384], index: 0, kind: input, shape index: {}]
  %s1 = inlined_call_operand.vmem [shape: f32[16,288], index: 1, kind: input, shape index: {}]
  %s2 = inlined_call_operand.vmem [shape: f32[16,1], index: 2, kind: input, shape index: {}]
  %s3 = inlined_call_operand.vmem [shape: f32[2,16,288], index: 3, kind: output, shape index: {}]
  %s4 = sld [smem:[#allocation0]]
  $region45: #{dcgan_forward.5} parent=0
    _
  %s6 = ssub.s32 1, %s4
  %s7 = scalar_select 0, %s6, %s4
  loop: start=0, step=1, limit=4
  $region2: #{dcgan_forward.5} parent=0 // loop_pre_header
    _
  $region3: #{dcgan_forward.5} parent=0 // loop_header
    %s9 = sphi 0, %s13
    %p10 = scmp.ge.s32.totalorder %s9, 4
    %s19 = sphi 0, %s21
    %s22 = sphi 0, %s19
    %s23 = sphi 0, %s22
    %s39 = sphi 0, %s23
    %s43 = sphi 0, %s43
    %s45 = sphi 0, %s43
    %s46 = sphi 0, %s45
    %s60 = sphi 0, %s46
    %s64 = sphi 0, %s64
    %s66 = sphi 0, %s64
    %s67 = sphi 0, %s66
    %s81 = sphi 0, %s67
    %s87 = sphi 0, %s89
    %s90 = sphi 0, %s87
    %s91 = sphi 0, %s90
    %s107 = sphi 0, %s91
  $region4: #{dcgan_forward.5} parent=0 // loop_header_branch
    %12 = sbr.rel (%p10) target = $region8
  $region5: #{dcgan_forward.5} parent=0 // loop_body
    %s14 = ssub.s32 %s9, 1
    %s15 = ssub.s32 %s9, 2
    %s16 = sadd.s32 %s9, 1
    %s17 = ssub.s32 %s9, %s16
    %p18 = scmp.eq.s32.totalorder %s17, 0
    %s20 = sadd.s32 %s19, 1
    %s21 = scalar_select %p18, %s19, %s20
    %p24 = pneg %p18
    %p25 = scmp.eq.s32.totalorder %s9, 1
    %p26 = por %p24, %p25
    %p27 = scmp.ne.s32.totalorder %s19, %s22
    %p28 = scmp.eq.s32.totalorder %s9, 0
    %p29 = por %p27, %p28
    %p30 = scmp.ne.s32.totalorder %s19, %s22
    %p31 = scmp.eq.s32.totalorder %s14, 1
    %p32 = por %p30, %p31
    %p33 = scmp.ne.s32.totalorder %s22, %s23
    %p34 = scmp.eq.s32.totalorder %s14, 0
    %p35 = por %p33, %p34
    %p36 = scmp.ne.s32.totalorder %s22, %s23
    %p37 = scmp.eq.s32.totalorder %s15, 1
    %p38 = por %p36, %p37
    %p40 = scmp.ne.s32.totalorder %s23, %s39
    %p41 = scmp.eq.s32.totalorder %s15, 0
    %p42 = por %p40, %p41
    %s44 = sadd.s32 %s43, 1
    %p47 = scmp.eq.s32.totalorder %s9, 1
    %p48 = scmp.ne.s32.totalorder %s43, %s45
    %p49 = scmp.eq.s32.totalorder %s9, 0
    %p50 = por %p48, %p49
    %p51 = scmp.ne.s32.totalorder %s43, %s45
    %p52 = scmp.eq.s32.totalorder %s14, 1
    %p53 = por %p51, %p52
    %p54 = scmp.ne.s32.totalorder %s45, %s46
    %p55 = scmp.eq.s32.totalorder %s14, 0
    %p56 = por %p54, %p55
    %p57 = scmp.ne.s32.totalorder %s45, %s46
    %p58 = scmp.eq.s32.totalorder %s15, 1
    %p59 = por %p57, %p58
    %p61 = scmp.ne.s32.totalorder %s46, %s60
    %p62 = scmp.eq.s32.totalorder %s15, 0
    %p63 = por %p61, %p62
    %s65 = sadd.s32 %s64, 1
    %p68 = scmp.eq.s32.totalorder %s9, 1
    %p69 = scmp.ne.s32.totalorder %s64, %s66
    %p70 = scmp.eq.s32.totalorder %s9, 0
    %p71 = por %p69, %p70
    %p72 = scmp.ne.s32.totalorder %s64, %s66
    %p73 = scmp.eq.s32.totalorder %s14, 1
    %p74 = por %p72, %p73
    %p75 = scmp.ne.s32.totalorder %s66, %s67
    %p76 = scmp.eq.s32.totalorder %s14, 0
    %p77 = por %p75, %p76
    %p78 = scmp.ne.s32.totalorder %s66, %s67
    %p79 = scmp.eq.s32.totalorder %s15, 1
    %p80 = por %p78, %p79
    %p82 = scmp.ne.s32.totalorder %s67, %s81
    %p83 = scmp.eq.s32.totalorder %s15, 0
    %p84 = por %p82, %p83
    %s85 = ssub.s32 %s9, %s16
    %p86 = scmp.eq.s32.totalorder %s85, 0
    %s88 = sadd.s32 %s87, 1
    %s89 = scalar_select %p86, %s87, %s88
    %p92 = pneg %p86
    %p93 = scmp.eq.s32.totalorder %s9, 1
    %p94 = por %p92, %p93
    %p95 = scmp.ne.s32.totalorder %s87, %s90
    %p96 = scmp.eq.s32.totalorder %s9, 0
    %p97 = por %p95, %p96
    %p98 = scmp.ne.s32.totalorder %s87, %s90
    %p99 = scmp.eq.s32.totalorder %s14, 1
    %p100 = por %p98, %p99
    %p101 = scmp.ne.s32.totalorder %s90, %s91
    %p102 = scmp.eq.s32.totalorder %s14, 0
    %p103 = por %p101, %p102
    %p104 = scmp.ne.s32.totalorder %s90, %s91
    %p105 = scmp.eq.s32.totalorder %s15, 1
    %p106 = por %p104, %p105
    %p108 = scmp.ne.s32.totalorder %s91, %s107
    %p109 = scmp.eq.s32.totalorder %s15, 0
    %p110 = por %p108, %p109
    %p111 = scmp.le.s32.totalorder 1, %s9
    %p112 = scmp.lt.s32.totalorder %s9, 3
    %p113 = pnand %p111, %p112
    %p114 = pneg %p113
    // Predicated region
    $region9: #{dcgan_forward.5} parent=5 // pred_check
      _
    $region10: #{dcgan_forward.5} parent=5 // pred_check_branch
      %116 = sbr.rel (%p113) target = $region12
    $region11: #{dcgan_forward.5} parent=5 // pred_region
      %s117 = ssub.s32 %s9, 1
      // Predicated region
      $region13: #{dcgan_forward.5} parent=11 // pred_check
        %p118 = pneg %p56
      $region14: #{dcgan_forward.5} parent=11 // pred_check_branch
        %120 = sbr.rel (%p118) target = $region16
      $region15: #{dcgan_forward.5} parent=11 // pred_region
        _
      $region16: #{dcgan_forward.5} parent=11 // pred_fallthru
        _
      // Predicated region
      $region17: #{dcgan_forward.5} parent=11 // pred_check
        %p121 = pneg %p77
      $region18: #{dcgan_forward.5} parent=11 // pred_check_branch
        %123 = sbr.rel (%p121) target = $region20
      $region19: #{dcgan_forward.5} parent=11 // pred_region
        _
      $region20: #{dcgan_forward.5} parent=11 // pred_fallthru
        _
    $region12: #{dcgan_forward.5} parent=5 // pred_fallthru
      _
    %p124 = scmp.lt.s32.totalorder %s9, 2
    // Predicated region
    $region21: #{dcgan_forward.5} parent=5 // pred_check
      %p125 = pneg %p124
    $region22: #{dcgan_forward.5} parent=5 // pred_check_branch
      %127 = sbr.rel (%p125) target = $region24
    $region23: #{dcgan_forward.5} parent=5 // pred_region
      // Predicated region
      $region25: #{dcgan_forward.5} parent=23 // pred_check
        %p128 = pneg %p29
      $region26: #{dcgan_forward.5} parent=23 // pred_check_branch
        %130 = sbr.rel (%p128) target = $region28
      $region27: #{dcgan_forward.5} parent=23 // pred_region
        %p131 = scmp.lt.s32.totalorder %s9, 1
        %s132 = scalar_select %p131, %s9, 1
        %s133 = smul.addr %s132, 12
        %s134 = smul.addr %s133, 8
        %s135 = scalar_lea.vmem %s0, %s134
      $region28: #{dcgan_forward.5} parent=23 // pred_fallthru
        _
    $region24: #{dcgan_forward.5} parent=5 // pred_fallthru
      _
    %p136 = scmp.le.s32.totalorder 1, %s9
    %p137 = scmp.lt.s32.totalorder %s9, 3
    %p138 = pnand %p136, %p137
    %p139 = pneg %p138
    // Predicated region
    $region29: #{dcgan_forward.5} parent=5 // pred_check
      _
    $region30: #{dcgan_forward.5} parent=5 // pred_check_branch
      %141 = sbr.rel (%p138) target = $region32
    $region31: #{dcgan_forward.5} parent=5 // pred_region
      %s142 = ssub.s32 %s9, 1
      %p143 = scmp.lt.s32.totalorder %s14, 1
      %s144 = scalar_select %p143, %s14, 1
      %s145 = smul.addr %s144, 12
      %s146 = smul.addr %s145, 8
      %s147 = scalar_lea.vmem %s0, %s146
      %p148 = pneg %p35
      %p149 = pneg %p32
      %p150 = pneg %p56
      %p151 = pneg %p53
      %p152 = pneg %p77
      %p153 = pneg %p74
      %p154 = pneg %p103
      %p155 = pneg %p100
      %p156 = scmp.lt.s32.totalorder %s14, 1
      %s157 = scalar_select %p156, %s14, 1
      %s158 = smul.addr %s157, 6
      %s159 = smul.addr %s158, 8
      %s160 = scalar_lea.vmem %s3, %s159
      %p161 = scmp.lt.s32.totalorder %s14, 1
      %s162 = scalar_select %p161, %s14, 1
      %s163 = smul.addr %s162, 12
      %s164 = smul.addr %s163, 8
      %s165 = scalar_lea.vmem %s0, %s164
      %p166 = scmp.lt.s32.totalorder %s14, 1
      %s167 = scalar_select %p166, %s14, 1
      %s168 = smul.addr %s167, 6
      %s169 = smul.addr %s168, 8
      %s170 = scalar_lea.vmem %s3, %s169
      %v171 = vld [vmem:[%s165] sm:$0xff]
      %v172 = vld [vmem:[%s165 + $0x8] sm:$0xff]
      %v173 = vld [vmem:[%s165 + $0x10] sm:$0xff]
      %v174 = vld [vmem:[%s165 + $0x18] sm:$0xff]
      %v175 = vld [vmem:[%s165 + $0x20] sm:$0xff]
      %v176 = vld [vmem:[%s165 + $0x28] sm:$0xff]
      %v177 = vld [vmem:[%s165 + $0x30] sm:$0xff]
      %v178 = vld [vmem:[%s165 + $0x38] sm:$0xff]
      %v179 = vld [vmem:[%s165 + $0x40] sm:$0xff]
      %v180 = vld [vmem:[%s165 + $0x48] sm:$0xff]
      %v181 = vld [vmem:[%s165 + $0x50] sm:$0xff]
      %v182 = vld [vmem:[%s165 + $0x58] sm:$0xff]
      %183 = vrot.lane.b32.xlu0 %v171, 127
      %v184 = vpop.permute.xlu0 %183
      %185 = vrot.lane.b32.xlu0 %v174, 127
      %v186 = vpop.permute.xlu0 %185
      %187 = vrot.lane.b32.xlu0 %v177, 127
      %v188 = vpop.permute.xlu0 %187
      %189 = vrot.lane.b32.xlu0 %v180, 127
      %v190 = vpop.permute.xlu0 %189
      %191 = vrot.lane.b32.xlu0 %v172, 127
      %v192 = vpop.permute.xlu0 %191
      %193 = vrot.lane.b32.xlu0 %v175, 127
      %v194 = vpop.permute.xlu0 %193
      %195 = vrot.lane.b32.xlu0 %v178, 127
      %v196 = vpop.permute.xlu0 %195
      %197 = vrot.lane.b32.xlu0 %v181, 127
      %v198 = vpop.permute.xlu0 %197
      %199 = vrot.lane.b32.xlu0 %v173, 127
      %v200 = vpop.permute.xlu0 %199
      %201 = vrot.lane.b32.xlu0 %v176, 127
      %v202 = vpop.permute.xlu0 %201
      %203 = vrot.lane.b32.xlu0 %v179, 127
      %v204 = vpop.permute.xlu0 %203
      %205 = vrot.lane.b32.xlu0 %v182, 127
      %v206 = vpop.permute.xlu0 %205
      %v207 = vlaneseq
      %v208 = vand.u32 %v207, 127
      %vm209 = vcmp.lt.s32.totalorder %v208, 127
      %v210 = vsel %vm209, %v192, %v200
      %v211 = vsel %vm209, %v194, %v202
      %v212 = vsel %vm209, %v196, %v204
      %v213 = vsel %vm209, %v198, %v206
      %v214 = vsel %vm209, %v184, %v192
      %v215 = vsel %vm209, %v186, %v194
      %v216 = vsel %vm209, %v188, %v196
      %v217 = vsel %vm209, %v190, %v198
      %v218 = vsel %vm209, %v200, %v184
      %v219 = vsel %vm209, %v202, %v186
      %v220 = vsel %vm209, %v204, %v188
      %v221 = vsel %vm209, %v206, %v190
      %222 = vrot.lane.b32.xlu0 %v171, 126
      %v223 = vpop.permute.xlu0 %222
      %224 = vrot.lane.b32.xlu0 %v174, 126
      %v225 = vpop.permute.xlu0 %224
      %226 = vrot.lane.b32.xlu0 %v177, 126
      %v227 = vpop.permute.xlu0 %226
      %228 = vrot.lane.b32.xlu0 %v180, 126
      %v229 = vpop.permute.xlu0 %228
      %230 = vrot.lane.b32.xlu0 %v172, 126
      %v231 = vpop.permute.xlu0 %230
      %232 = vrot.lane.b32.xlu0 %v175, 126
      %v233 = vpop.permute.xlu0 %232
      %234 = vrot.lane.b32.xlu0 %v178, 126
      %v235 = vpop.permute.xlu0 %234
      %236 = vrot.lane.b32.xlu0 %v181, 126
      %v237 = vpop.permute.xlu0 %236
      %238 = vrot.lane.b32.xlu0 %v173, 126
      %v239 = vpop.permute.xlu0 %238
      %240 = vrot.lane.b32.xlu0 %v176, 126
      %v241 = vpop.permute.xlu0 %240
      %242 = vrot.lane.b32.xlu0 %v179, 126
      %v243 = vpop.permute.xlu0 %242
      %244 = vrot.lane.b32.xlu0 %v182, 126
      %v245 = vpop.permute.xlu0 %244
      %vm246 = vcmp.lt.s32.totalorder %v208, 126
      %v247 = vsel %vm246, %v231, %v239
      %v248 = vsel %vm246, %v233, %v241
      %v249 = vsel %vm246, %v235, %v243
      %v250 = vsel %vm246, %v237, %v245
      %v251 = vsel %vm246, %v223, %v231
      %v252 = vsel %vm246, %v225, %v233
      %v253 = vsel %vm246, %v227, %v235
      %v254 = vsel %vm246, %v229, %v237
      %v255 = vsel %vm246, %v239, %v223
      %v256 = vsel %vm246, %v241, %v225
      %v257 = vsel %vm246, %v243, %v227
      %v258 = vsel %vm246, %v245, %v229
      %259 = vrot.lane.b32.xlu0 %v171, 110
      %v260 = vpop.permute.xlu0 %259
      %261 = vrot.lane.b32.xlu0 %v174, 110
      %v262 = vpop.permute.xlu0 %261
      %263 = vrot.lane.b32.xlu0 %v177, 110
      %v264 = vpop.permute.xlu0 %263
      %265 = vrot.lane.b32.xlu0 %v180, 110
      %v266 = vpop.permute.xlu0 %265
      %267 = vrot.lane.b32.xlu0 %v172, 110
      %v268 = vpop.permute.xlu0 %267
      %269 = vrot.lane.b32.xlu0 %v175, 110
      %v270 = vpop.permute.xlu0 %269
      %271 = vrot.lane.b32.xlu0 %v178, 110
      %v272 = vpop.permute.xlu0 %271
      %273 = vrot.lane.b32.xlu0 %v181, 110
      %v274 = vpop.permute.xlu0 %273
      %275 = vrot.lane.b32.xlu0 %v173, 110
      %v276 = vpop.permute.xlu0 %275
      %277 = vrot.lane.b32.xlu0 %v176, 110
      %v278 = vpop.permute.xlu0 %277
      %279 = vrot.lane.b32.xlu0 %v179, 110
      %v280 = vpop.permute.xlu0 %279
      %281 = vrot.lane.b32.xlu0 %v182, 110
      %v282 = vpop.permute.xlu0 %281
      %vm283 = vcmp.lt.s32.totalorder %v208, 110
      %v284 = vsel %vm283, %v268, %v276
      %v285 = vsel %vm283, %v270, %v278
      %v286 = vsel %vm283, %v272, %v280
      %v287 = vsel %vm283, %v274, %v282
      %v288 = vsel %vm283, %v260, %v268
      %v289 = vsel %vm283, %v262, %v270
      %v290 = vsel %vm283, %v264, %v272
      %v291 = vsel %vm283, %v266, %v274
      %v292 = vsel %vm283, %v276, %v260
      %v293 = vsel %vm283, %v278, %v262
      %v294 = vsel %vm283, %v280, %v264
      %v295 = vsel %vm283, %v282, %v266
      %296 = vrot.lane.b32.xlu0 %v171, 109
      %v297 = vpop.permute.xlu0 %296
      %298 = vrot.lane.b32.xlu0 %v174, 109
      %v299 = vpop.permute.xlu0 %298
      %300 = vrot.lane.b32.xlu0 %v177, 109
      %v301 = vpop.permute.xlu0 %300
      %302 = vrot.lane.b32.xlu0 %v180, 109
      %v303 = vpop.permute.xlu0 %302
      %304 = vrot.lane.b32.xlu0 %v172, 109
      %v305 = vpop.permute.xlu0 %304
      %306 = vrot.lane.b32.xlu0 %v175, 109
      %v307 = vpop.permute.xlu0 %306
      %308 = vrot.lane.b32.xlu0 %v178, 109
      %v309 = vpop.permute.xlu0 %308
      %310 = vrot.lane.b32.xlu0 %v181, 109
      %v311 = vpop.permute.xlu0 %310
      %312 = vrot.lane.b32.xlu0 %v173, 109
      %v313 = vpop.permute.xlu0 %312
      %314 = vrot.lane.b32.xlu0 %v176, 109
      %v315 = vpop.permute.xlu0 %314
      %316 = vrot.lane.b32.xlu0 %v179, 109
      %v317 = vpop.permute.xlu0 %316
      %318 = vrot.lane.b32.xlu0 %v182, 109
      %v319 = vpop.permute.xlu0 %318
      %vm320 = vcmp.lt.s32.totalorder %v208, 109
      %v321 = vsel %vm320, %v305, %v313
      %v322 = vsel %vm320, %v307, %v315
      %v323 = vsel %vm320, %v309, %v317
      %v324 = vsel %vm320, %v311, %v319
      %v325 = vsel %vm320, %v297, %v305
      %v326 = vsel %vm320, %v299, %v307
      %v327 = vsel %vm320, %v301, %v309
      %v328 = vsel %vm320, %v303, %v311
      %v329 = vsel %vm320, %v313, %v297
      %v330 = vsel %vm320, %v315, %v299
      %v331 = vsel %vm320, %v317, %v301
      %v332 = vsel %vm320, %v319, %v303
      %333 = vrot.lane.b32.xlu0 %v171, 108
      %v334 = vpop.permute.xlu0 %333
      %335 = vrot.lane.b32.xlu0 %v174, 108
      %v336 = vpop.permute.xlu0 %335
      %337 = vrot.lane.b32.xlu0 %v177, 108
      %v338 = vpop.permute.xlu0 %337
      %339 = vrot.lane.b32.xlu0 %v180, 108
      %v340 = vpop.permute.xlu0 %339
      %341 = vrot.lane.b32.xlu0 %v172, 108
      %v342 = vpop.permute.xlu0 %341
      %343 = vrot.lane.b32.xlu0 %v175, 108
      %v344 = vpop.permute.xlu0 %343
      %345 = vrot.lane.b32.xlu0 %v178, 108
      %v346 = vpop.permute.xlu0 %345
      %347 = vrot.lane.b32.xlu0 %v181, 108
      %v348 = vpop.permute.xlu0 %347
      %349 = vrot.lane.b32.xlu0 %v173, 108
      %v350 = vpop.permute.xlu0 %349
      %351 = vrot.lane.b32.xlu0 %v176, 108
      %v352 = vpop.permute.xlu0 %351
      %353 = vrot.lane.b32.xlu0 %v179, 108
      %v354 = vpop.permute.xlu0 %353
      %355 = vrot.lane.b32.xlu0 %v182, 108
      %v356 = vpop.permute.xlu0 %355
      %vm357 = vcmp.lt.s32.totalorder %v208, 108
      %v358 = vsel %vm357, %v342, %v350
      %v359 = vsel %vm357, %v344, %v352
      %v360 = vsel %vm357, %v346, %v354
      %v361 = vsel %vm357, %v348, %v356
      %v362 = vsel %vm357, %v334, %v342
      %v363 = vsel %vm357, %v336, %v344
      %v364 = vsel %vm357, %v338, %v346
      %v365 = vsel %vm357, %v340, %v348
      %v366 = vsel %vm357, %v350, %v334
      %v367 = vsel %vm357, %v352, %v336
      %v368 = vsel %vm357, %v354, %v338
      %v369 = vsel %vm357, %v356, %v340
      %370 = vrot.lane.b32.xlu0 %v171, 92
      %v371 = vpop.permute.xlu0 %370
      %372 = vrot.lane.b32.xlu0 %v174, 92
      %v373 = vpop.permute.xlu0 %372
      %374 = vrot.lane.b32.xlu0 %v177, 92
      %v375 = vpop.permute.xlu0 %374
      %376 = vrot.lane.b32.xlu0 %v180, 92
      %v377 = vpop.permute.xlu0 %376
      %378 = vrot.lane.b32.xlu0 %v172, 92
      %v379 = vpop.permute.xlu0 %378
      %380 = vrot.lane.b32.xlu0 %v175, 92
      %v381 = vpop.permute.xlu0 %380
      %382 = vrot.lane.b32.xlu0 %v178, 92
      %v383 = vpop.permute.xlu0 %382
      %384 = vrot.lane.b32.xlu0 %v181, 92
      %v385 = vpop.permute.xlu0 %384
      %386 = vrot.lane.b32.xlu0 %v173, 92
      %v387 = vpop.permute.xlu0 %386
      %388 = vrot.lane.b32.xlu0 %v176, 92
      %v389 = vpop.permute.xlu0 %388
      %390 = vrot.lane.b32.xlu0 %v179, 92
      %v391 = vpop.permute.xlu0 %390
      %392 = vrot.lane.b32.xlu0 %v182, 92
      %v393 = vpop.permute.xlu0 %392
      %vm394 = vcmp.lt.s32.totalorder %v208, 92
      %v395 = vsel %vm394, %v379, %v387
      %v396 = vsel %vm394, %v381, %v389
      %v397 = vsel %vm394, %v383, %v391
      %v398 = vsel %vm394, %v385, %v393
      %v399 = vsel %vm394, %v371, %v379
      %v400 = vsel %vm394, %v373, %v381
      %v401 = vsel %vm394, %v375, %v383
      %v402 = vsel %vm394, %v377, %v385
      %v403 = vsel %vm394, %v387, %v371
      %v404 = vsel %vm394, %v389, %v373
      %v405 = vsel %vm394, %v391, %v375
      %v406 = vsel %vm394, %v393, %v377
      %407 = vrot.lane.b32.xlu0 %v171, 91
      %v408 = vpop.permute.xlu0 %407
      %409 = vrot.lane.b32.xlu0 %v174, 91
      %v410 = vpop.permute.xlu0 %409
      %411 = vrot.lane.b32.xlu0 %v177, 91
      %v412 = vpop.permute.xlu0 %411
      %413 = vrot.lane.b32.xlu0 %v180, 91
      %v414 = vpop.permute.xlu0 %413
      %415 = vrot.lane.b32.xlu0 %v172, 91
      %v416 = vpop.permute.xlu0 %415
      %417 = vrot.lane.b32.xlu0 %v175, 91
      %v418 = vpop.permute.xlu0 %417
      %419 = vrot.lane.b32.xlu0 %v178, 91
      %v420 = vpop.permute.xlu0 %419
      %421 = vrot.lane.b32.xlu0 %v181, 91
      %v422 = vpop.permute.xlu0 %421
      %423 = vrot.lane.b32.xlu0 %v173, 91
      %v424 = vpop.permute.xlu0 %423
      %425 = vrot.lane.b32.xlu0 %v176, 91
      %v426 = vpop.permute.xlu0 %425
      %427 = vrot.lane.b32.xlu0 %v179, 91
      %v428 = vpop.permute.xlu0 %427
      %429 = vrot.lane.b32.xlu0 %v182, 91
      %v430 = vpop.permute.xlu0 %429
      %vm431 = vcmp.lt.s32.totalorder %v208, 91
      %v432 = vsel %vm431, %v416, %v424
      %v433 = vsel %vm431, %v418, %v426
      %v434 = vsel %vm431, %v420, %v428
      %v435 = vsel %vm431, %v422, %v430
      %v436 = vsel %vm431, %v408, %v416
      %v437 = vsel %vm431, %v410, %v418
      %v438 = vsel %vm431, %v412, %v420
      %v439 = vsel %vm431, %v414, %v422
      %v440 = vsel %vm431, %v424, %v408
      %v441 = vsel %vm431, %v426, %v410
      %v442 = vsel %vm431, %v428, %v412
      %v443 = vsel %vm431, %v430, %v414
      %444 = vrot.lane.b32.xlu0 %v171, 90
      %v445 = vpop.permute.xlu0 %444
      %446 = vrot.lane.b32.xlu0 %v174, 90
      %v447 = vpop.permute.xlu0 %446
      %448 = vrot.lane.b32.xlu0 %v177, 90
      %v449 = vpop.permute.xlu0 %448
      %450 = vrot.lane.b32.xlu0 %v180, 90
      %v451 = vpop.permute.xlu0 %450
      %452 = vrot.lane.b32.xlu0 %v172, 90
      %v453 = vpop.permute.xlu0 %452
      %454 = vrot.lane.b32.xlu0 %v175, 90
      %v455 = vpop.permute.xlu0 %454
      %456 = vrot.lane.b32.xlu0 %v178, 90
      %v457 = vpop.permute.xlu0 %456
      %458 = vrot.lane.b32.xlu0 %v181, 90
      %v459 = vpop.permute.xlu0 %458
      %460 = vrot.lane.b32.xlu0 %v173, 90
      %v461 = vpop.permute.xlu0 %460
      %462 = vrot.lane.b32.xlu0 %v176, 90
      %v463 = vpop.permute.xlu0 %462
      %464 = vrot.lane.b32.xlu0 %v179, 90
      %v465 = vpop.permute.xlu0 %464
      %466 = vrot.lane.b32.xlu0 %v182, 90
      %v467 = vpop.permute.xlu0 %466
      %vm468 = vcmp.lt.s32.totalorder %v208, 90
      %v469 = vsel %vm468, %v453, %v461
      %v470 = vsel %vm468, %v455, %v463
      %v471 = vsel %vm468, %v457, %v465
      %v472 = vsel %vm468, %v459, %v467
      %v473 = vsel %vm468, %v445, %v453
      %v474 = vsel %vm468, %v447, %v455
      %v475 = vsel %vm468, %v449, %v457
      %v476 = vsel %vm468, %v451, %v459
      %v477 = vsel %vm468, %v461, %v445
      %v478 = vsel %vm468, %v463, %v447
      %v479 = vsel %vm468, %v465, %v449
      %v480 = vsel %vm468, %v467, %v451
      %v481 = vld [vmem:[%s1] sm:$0xff]
      %v482 = vld [vmem:[%s1 + $0x8] sm:$0xff]
      %v483 = vld [vmem:[%s1 + $0x10] sm:$0xff]
      %v484 = vld [vmem:[%s1 + $0x18] sm:$0xff]
      %v485 = vld [vmem:[%s1 + $0x20] sm:$0xff]
      %v486 = vld [vmem:[%s1 + $0x28] sm:$0xff]
      %v487 = vld [vmem:[%s2] sm:$0xff]
      %v488 = vld [vmem:[%s2 + $0x8] sm:$0xff]
      %490 = vset.pattern.permute.xlu0 0
      %491 = vperm.xlu0 %490, %v487
      %v492 = vpop.permute.xlu0 %491
      %495 = vset.pattern.permute.xlu0 0
      %496 = vperm.xlu0 %495, %v488
      %v497 = vpop.permute.xlu0 %496
      %vm499 = vcmask 261120
      %v501 = vsel %vm499, %v483, 0
      %v504 = vsel %vm499, %v486, 0
      %506 = vmatpush.msra.mxu0 %v291
      %507 = vmatpush.msra.mxu0 %v290
      %508 = vmatpush.msra.mxu0 %v289
      %509 = vmatpush.msra.mxu0 %v288
      %510 = vmatpush.msra.mxu0 %v254
      %511 = vmatpush.msra.mxu0 %v253
      %512 = vmatpush.msra.mxu0 %v252
      %513 = vmatpush.msra.mxu0 %v251
      %514 = vmatpush.msra.mxu0 %v217
      %515 = vmatpush.msra.mxu0 %v216
      %516 = vmatpush.msra.mxu0 %v215
      %517 = vmatpush.msra.mxu0 %v214
      %518 = vmatpush.msra.mxu0 %v180
      %519 = vmatpush.msra.mxu0 %v177
      %520 = vmatpush.msra.mxu0 %v174
      %521 = vmatpush.msra.mxu0 %v171
      %522 = vmatmul.f32.gmra.mxu0 %v481
      %v523 = vpop.f32.mrf.mxu0
      %v524 = vadd.f32 %v492, %v523
      %525 = vmatmul.f32.gmra.mxu0 %v484
      %v526 = vpop.f32.mrf.mxu0
      %v527 = vadd.f32 %v497, %v526
      %528 = vdwg.mxu0
      %529 = vmatpush.msra.mxu0 %v439
      %530 = vmatpush.msra.mxu0 %v438
      %531 = vmatpush.msra.mxu0 %v437
      %532 = vmatpush.msra.mxu0 %v436
      %533 = vmatpush.msra.mxu0 %v402
      %534 = vmatpush.msra.mxu0 %v401
      %535 = vmatpush.msra.mxu0 %v400
      %536 = vmatpush.msra.mxu0 %v399
      %537 = vmatpush.msra.mxu0 %v365
      %538 = vmatpush.msra.mxu0 %v364
      %539 = vmatpush.msra.mxu0 %v363
      %540 = vmatpush.msra.mxu0 %v362
      %541 = vmatpush.msra.mxu0 %v328
      %542 = vmatpush.msra.mxu0 %v327
      %543 = vmatpush.msra.mxu0 %v326
      %544 = vmatpush.msra.mxu0 %v325
      %545 = vmatmul.f32.gmra.mxu0 %v482
      %v546 = vpop.f32.mrf.mxu0
      %v547 = vadd.f32 %v524, %v546
      %548 = vmatmul.f32.gmra.mxu0 %v485
      %v549 = vpop.f32.mrf.mxu0
      %v550 = vadd.f32 %v527, %v549
      %551 = vdwg.mxu0
      %552 = vmatpush.msra.mxu0 0.0
      %553 = vmatpush.msra.mxu0 0.0
      %554 = vmatpush.msra.mxu0 0.0
      %555 = vmatpush.msra.mxu0 0.0
      %556 = vmatpush.msra.mxu0 0.0
      %557 = vmatpush.msra.mxu0 0.0
      %558 = vmatpush.msra.mxu0 0.0
      %559 = vmatpush.msra.mxu0 0.0
      %560 = vmatpush.msra.mxu0 0.0
      %561 = vmatpush.msra.mxu0 0.0
      %562 = vmatpush.msra.mxu0 0.0
      %563 = vmatpush.msra.mxu0 0.0
      %564 = vmatpush.msra.mxu0 %v476
      %565 = vmatpush.msra.mxu0 %v475
      %566 = vmatpush.msra.mxu0 %v474
      %567 = vmatpush.msra.mxu0 %v473
      %568 = vmatmul.f32.gmra.mxu0 %v501
      %v569 = vpop.f32.mrf.mxu0
      %v570 = vadd.f32 %v547, %v569
      %571 = vmatmul.f32.gmra.mxu0 %v504
      %v572 = vpop.f32.mrf.mxu0
      %v573 = vadd.f32 %v550, %v572
      %574 = vdwg.mxu0
      %575 = vmatpush.msra.mxu0 %v287
      %576 = vmatpush.msra.mxu0 %v286
      %577 = vmatpush.msra.mxu0 %v285
      %578 = vmatpush.msra.mxu0 %v284
      %579 = vmatpush.msra.mxu0 %v250
      %580 = vmatpush.msra.mxu0 %v249
      %581 = vmatpush.msra.mxu0 %v248
      %582 = vmatpush.msra.mxu0 %v247
      %583 = vmatpush.msra.mxu0 %v213
      %584 = vmatpush.msra.mxu0 %v212
      %585 = vmatpush.msra.mxu0 %v211
      %586 = vmatpush.msra.mxu0 %v210
      %587 = vmatpush.msra.mxu0 %v181
      %588 = vmatpush.msra.mxu0 %v178
      %589 = vmatpush.msra.mxu0 %v175
      %590 = vmatpush.msra.mxu0 %v172
      %591 = vmatmul.f32.gmra.mxu0 %v481
      %v592 = vpop.f32.mrf.mxu0
      %v593 = vadd.f32 %v492, %v592
      %594 = vmatmul.f32.gmra.mxu0 %v484
      %v595 = vpop.f32.mrf.mxu0
      %v596 = vadd.f32 %v497, %v595
      %597 = vdwg.mxu0
      %598 = vmatpush.msra.mxu0 %v435
      %599 = vmatpush.msra.mxu0 %v434
      %600 = vmatpush.msra.mxu0 %v433
      %601 = vmatpush.msra.mxu0 %v432
      %602 = vmatpush.msra.mxu0 %v398
      %603 = vmatpush.msra.mxu0 %v397
      %604 = vmatpush.msra.mxu0 %v396
      %605 = vmatpush.msra.mxu0 %v395
      %606 = vmatpush.msra.mxu0 %v361
      %607 = vmatpush.msra.mxu0 %v360
      %608 = vmatpush.msra.mxu0 %v359
      %609 = vmatpush.msra.mxu0 %v358
      %610 = vmatpush.msra.mxu0 %v324
      %611 = vmatpush.msra.mxu0 %v323
      %612 = vmatpush.msra.mxu0 %v322
      %613 = vmatpush.msra.mxu0 %v321
      %614 = vmatmul.f32.gmra.mxu0 %v482
      %v615 = vpop.f32.mrf.mxu0
      %v616 = vadd.f32 %v593, %v615
      %617 = vmatmul.f32.gmra.mxu0 %v485
      %v618 = vpop.f32.mrf.mxu0
      %v619 = vadd.f32 %v596, %v618
      %620 = vdwg.mxu0
      %621 = vmatpush.msra.mxu0 0.0
      %622 = vmatpush.msra.mxu0 0.0
      %623 = vmatpush.msra.mxu0 0.0
      %624 = vmatpush.msra.mxu0 0.0
      %625 = vmatpush.msra.mxu0 0.0
      %626 = vmatpush.msra.mxu0 0.0
      %627 = vmatpush.msra.mxu0 0.0
      %628 = vmatpush.msra.mxu0 0.0
      %629 = vmatpush.msra.mxu0 0.0
      %630 = vmatpush.msra.mxu0 0.0
      %631 = vmatpush.msra.mxu0 0.0
      %632 = vmatpush.msra.mxu0 0.0
      %633 = vmatpush.msra.mxu0 %v472
      %634 = vmatpush.msra.mxu0 %v471
      %635 = vmatpush.msra.mxu0 %v470
      %636 = vmatpush.msra.mxu0 %v469
      %637 = vmatmul.f32.gmra.mxu0 %v501
      %v638 = vpop.f32.mrf.mxu0
      %v639 = vadd.f32 %v616, %v638
      %640 = vmatmul.f32.gmra.mxu0 %v504
      %v641 = vpop.f32.mrf.mxu0
      %v642 = vadd.f32 %v619, %v641
      %643 = vdwg.mxu0
      %644 = vmatpush.msra.mxu0 %v295
      %645 = vmatpush.msra.mxu0 %v294
      %646 = vmatpush.msra.mxu0 %v293
      %647 = vmatpush.msra.mxu0 %v292
      %648 = vmatpush.msra.mxu0 %v258
      %649 = vmatpush.msra.mxu0 %v257
      %650 = vmatpush.msra.mxu0 %v256
      %651 = vmatpush.msra.mxu0 %v255
      %652 = vmatpush.msra.mxu0 %v221
      %653 = vmatpush.msra.mxu0 %v220
      %654 = vmatpush.msra.mxu0 %v219
      %655 = vmatpush.msra.mxu0 %v218
      %656 = vmatpush.msra.mxu0 %v182
      %657 = vmatpush.msra.mxu0 %v179
      %658 = vmatpush.msra.mxu0 %v176
      %659 = vmatpush.msra.mxu0 %v173
      %660 = vmatmul.f32.gmra.mxu0 %v481
      %v661 = vpop.f32.mrf.mxu0
      %v662 = vadd.f32 %v492, %v661
      %663 = vmatmul.f32.gmra.mxu0 %v484
      %v664 = vpop.f32.mrf.mxu0
      %v665 = vadd.f32 %v497, %v664
      %666 = vdwg.mxu0
      %667 = vmatpush.msra.mxu0 %v443
      %668 = vmatpush.msra.mxu0 %v442
      %669 = vmatpush.msra.mxu0 %v441
      %670 = vmatpush.msra.mxu0 %v440
      %671 = vmatpush.msra.mxu0 %v406
      %672 = vmatpush.msra.mxu0 %v405
      %673 = vmatpush.msra.mxu0 %v404
      %674 = vmatpush.msra.mxu0 %v403
      %675 = vmatpush.msra.mxu0 %v369
      %676 = vmatpush.msra.mxu0 %v368
      %677 = vmatpush.msra.mxu0 %v367
      %678 = vmatpush.msra.mxu0 %v366
      %679 = vmatpush.msra.mxu0 %v332
      %680 = vmatpush.msra.mxu0 %v331
      %681 = vmatpush.msra.mxu0 %v330
      %682 = vmatpush.msra.mxu0 %v329
      %683 = vmatmul.f32.gmra.mxu0 %v482
      %v684 = vpop.f32.mrf.mxu0
      %v685 = vadd.f32 %v662, %v684
      %686 = vmatmul.f32.gmra.mxu0 %v485
      %v687 = vpop.f32.mrf.mxu0
      %v688 = vadd.f32 %v665, %v687
      %689 = vdwg.mxu0
      %690 = vmatpush.msra.mxu0 0.0
      %691 = vmatpush.msra.mxu0 0.0
      %692 = vmatpush.msra.mxu0 0.0
      %693 = vmatpush.msra.mxu0 0.0
      %694 = vmatpush.msra.mxu0 0.0
      %695 = vmatpush.msra.mxu0 0.0
      %696 = vmatpush.msra.mxu0 0.0
      %697 = vmatpush.msra.mxu0 0.0
      %698 = vmatpush.msra.mxu0 0.0
      %699 = vmatpush.msra.mxu0 0.0
      %700 = vmatpush.msra.mxu0 0.0
      %701 = vmatpush.msra.mxu0 0.0
      %702 = vmatpush.msra.mxu0 %v480
      %703 = vmatpush.msra.mxu0 %v479
      %704 = vmatpush.msra.mxu0 %v478
      %705 = vmatpush.msra.mxu0 %v477
      %706 = vmatmul.f32.gmra.mxu0 %v501
      %v707 = vpop.f32.mrf.mxu0
      %v708 = vadd.f32 %v685, %v707
      %709 = vmatmul.f32.gmra.mxu0 %v504
      %v710 = vpop.f32.mrf.mxu0
      %v711 = vadd.f32 %v688, %v710
      %712 = vdwg.mxu0
      %vm713 = vcmp.gt.f32.partialorder %v570, 0.0
      %vm714 = vcmp.gt.f32.partialorder %v639, 0.0
      %vm715 = vcmp.gt.f32.partialorder %v708, 0.0
      %vm716 = vcmp.gt.f32.partialorder %v573, 0.0
      %vm717 = vcmp.gt.f32.partialorder %v642, 0.0
      %vm718 = vcmp.gt.f32.partialorder %v711, 0.0
      %v719 = vmul.f32 %v570, 0.2
      %v720 = vmul.f32 %v639, 0.2
      %v721 = vmul.f32 %v708, 0.2
      %v722 = vmul.f32 %v573, 0.2
      %v723 = vmul.f32 %v642, 0.2
      %v724 = vmul.f32 %v711, 0.2
      %v725 = vsel %vm713, %v570, %v719
      %v726 = vsel %vm714, %v639, %v720
      %v727 = vsel %vm715, %v708, %v721
      %v728 = vsel %vm716, %v573, %v722
      %v729 = vsel %vm717, %v642, %v723
      %v730 = vsel %vm718, %v711, %v724
      %731 = vst [vmem:[%s170] sm:$0xff] %v725
      %732 = vst [vmem:[%s170 + $0x8] sm:$0xff] %v726
      %733 = vst.msk [vmem:[%s170 + $0x10] sm:$0xff] %vm499, %v727
      %734 = vst [vmem:[%s170 + $0x18] sm:$0xff] %v728
      %735 = vst [vmem:[%s170 + $0x20] sm:$0xff] %v729
      %736 = vst.msk [vmem:[%s170 + $0x28] sm:$0xff] %vm499, %v730
      %p737 = scmp.lt.s32.totalorder %s14, 1
      %s738 = scalar_select %p737, %s14, 1
      %s739 = smul.addr %s738, 6
      %s740 = smul.addr %s739, 8
      %s741 = scalar_lea.vmem %s3, %s740
      // Predicated region
      $region33: #{dcgan_forward.5} parent=31 // pred_check
        %p742 = pneg %p100
      $region34: #{dcgan_forward.5} parent=31 // pred_check_branch
        %744 = sbr.rel (%p742) target = $region36
      $region35: #{dcgan_forward.5} parent=31 // pred_region
        _
      $region36: #{dcgan_forward.5} parent=31 // pred_fallthru
        _
    $region32: #{dcgan_forward.5} parent=5 // pred_fallthru
      _
    %p745 = scmp.le.s32.totalorder 2, %s9
    // Predicated region
    $region37: #{dcgan_forward.5} parent=5 // pred_check
      %p746 = pneg %p745
    $region38: #{dcgan_forward.5} parent=5 // pred_check_branch
      %748 = sbr.rel (%p746) target = $region40
    $region39: #{dcgan_forward.5} parent=5 // pred_region
      %s749 = ssub.s32 %s9, 2
      // Predicated region
      $region41: #{dcgan_forward.5} parent=39 // pred_check
        %p750 = pneg %p106
      $region42: #{dcgan_forward.5} parent=39 // pred_check_branch
        %752 = sbr.rel (%p750) target = $region44
      $region43: #{dcgan_forward.5} parent=39 // pred_region
        %p753 = scmp.lt.s32.totalorder %s15, 1
        %s754 = scalar_select %p753, %s15, 1
        %s755 = smul.addr %s754, 6
        %s756 = smul.addr %s755, 8
        %s757 = scalar_lea.vmem %s3, %s756
      $region44: #{dcgan_forward.5} parent=39 // pred_fallthru
        _
    $region40: #{dcgan_forward.5} parent=5 // pred_fallthru
      _
  $region6: #{dcgan_forward.5} parent=0 // loop_footer
    %s13 = sadd.s32 1, %s9
  $region7: #{dcgan_forward.5} parent=0 // loop_footer_branch
    %8 = sbr.rel target = $region3
  $region8: #{dcgan_forward.5} parent=0 // loop_exit
    _

// kernel: dcgan_forward.6
$region0: #{dcgan_forward.6}
  #allocation0 [shape = 'u32[]', space=smem, size = 0x4, offset = 0x4, fixed_abs, tag = 'smem constant byte address 0x4 - core index']
  #allocation1 [shape = 'u32[72,128]{1,0:T(1,128)}', space=vmem, size = 0x9000, scoped, tag = 'internal scratch']
  %s0 = inlined_call_operand.vmem [shape: f32[2,16,1280], index: 0, kind: input, shape index: {}]
  %s1 = inlined_call_operand.vmem [shape: f32[8,144], index: 1, kind: input, shape index: {}]
  %s2 = inlined_call_operand.vmem [shape: f32[8,1], index: 2, kind: input, shape index: {}]
  %s3 = inlined_call_operand.vmem [shape: f32[2,8,1088], index: 3, kind: output, shape index: {}]
  %s4 = sld [smem:[#allocation0]]
  $region45: #{dcgan_forward.6} parent=0
    _
  %s6 = ssub.s32 1, %s4
  %s7 = scalar_select 0, %s6, %s4
  loop: start=0, step=1, limit=4
  $region2: #{dcgan_forward.6} parent=0 // loop_pre_header
    _
  $region3: #{dcgan_forward.6} parent=0 // loop_header
    %s9 = sphi 0, %s13
    %p10 = scmp.ge.s32.totalorder %s9, 4
    %s19 = sphi 0, %s21
    %s22 = sphi 0, %s19
    %s23 = sphi 0, %s22
    %s39 = sphi 0, %s23
    %s43 = sphi 0, %s43
    %s45 = sphi 0, %s43
    %s46 = sphi 0, %s45
    %s60 = sphi 0, %s46
    %s64 = sphi 0, %s64
    %s66 = sphi 0, %s64
    %s67 = sphi 0, %s66
    %s81 = sphi 0, %s67
    %s87 = sphi 0, %s89
    %s90 = sphi 0, %s87
    %s91 = sphi 0, %s90
    %s107 = sphi 0, %s91
  $region4: #{dcgan_forward.6} parent=0 // loop_header_branch
    %12 = sbr.rel (%p10) target = $region8
  $region5: #{dcgan_forward.6} parent=0 // loop_body
    %s14 = ssub.s32 %s9, 1
    %s15 = ssub.s32 %s9, 2
    %s16 = sadd.s32 %s9, 1
    %s17 = ssub.s32 %s9, %s16
    %p18 = scmp.eq.s32.totalorder %s17, 0
    %s20 = sadd.s32 %s19, 1
    %s21 = scalar_select %p18, %s19, %s20
    %p24 = pneg %p18
    %p25 = scmp.eq.s32.totalorder %s9, 1
    %p26 = por %p24, %p25
    %p27 = scmp.ne.s32.totalorder %s19, %s22
    %p28 = scmp.eq.s32.totalorder %s9, 0
    %p29 = por %p27, %p28
    %p30 = scmp.ne.s32.totalorder %s19, %s22
    %p31 = scmp.eq.s32.totalorder %s14, 1
    %p32 = por %p30, %p31
    %p33 = scmp.ne.s32.totalorder %s22, %s23
    %p34 = scmp.eq.s32.totalorder %s14, 0
    %p35 = por %p33, %p34
    %p36 = scmp.ne.s32.totalorder %s22, %s23
    %p37 = scmp.eq.s32.totalorder %s15, 1
    %p38 = por %p36, %p37
    %p40 = scmp.ne.s32.totalorder %s23, %s39
    %p41 = scmp.eq.s32.totalorder %s15, 0
    %p42 = por %p40, %p41
    %s44 = sadd.s32 %s43, 1
    %p47 = scmp.eq.s32.totalorder %s9, 1
    %p48 = scmp.ne.s32.totalorder %s43, %s45
    %p49 = scmp.eq.s32.totalorder %s9, 0
    %p50 = por %p48, %p49
    %p51 = scmp.ne.s32.totalorder %s43, %s45
    %p52 = scmp.eq.s32.totalorder %s14, 1
    %p53 = por %p51, %p52
    %p54 = scmp.ne.s32.totalorder %s45, %s46
    %p55 = scmp.eq.s32.totalorder %s14, 0
    %p56 = por %p54, %p55
    %p57 = scmp.ne.s32.totalorder %s45, %s46
    %p58 = scmp.eq.s32.totalorder %s15, 1
    %p59 = por %p57, %p58
    %p61 = scmp.ne.s32.totalorder %s46, %s60
    %p62 = scmp.eq.s32.totalorder %s15, 0
    %p63 = por %p61, %p62
    %s65 = sadd.s32 %s64, 1
    %p68 = scmp.eq.s32.totalorder %s9, 1
    %p69 = scmp.ne.s32.totalorder %s64, %s66
    %p70 = scmp.eq.s32.totalorder %s9, 0
    %p71 = por %p69, %p70
    %p72 = scmp.ne.s32.totalorder %s64, %s66
    %p73 = scmp.eq.s32.totalorder %s14, 1
    %p74 = por %p72, %p73
    %p75 = scmp.ne.s32.totalorder %s66, %s67
    %p76 = scmp.eq.s32.totalorder %s14, 0
    %p77 = por %p75, %p76
    %p78 = scmp.ne.s32.totalorder %s66, %s67
    %p79 = scmp.eq.s32.totalorder %s15, 1
    %p80 = por %p78, %p79
    %p82 = scmp.ne.s32.totalorder %s67, %s81
    %p83 = scmp.eq.s32.totalorder %s15, 0
    %p84 = por %p82, %p83
    %s85 = ssub.s32 %s9, %s16
    %p86 = scmp.eq.s32.totalorder %s85, 0
    %s88 = sadd.s32 %s87, 1
    %s89 = scalar_select %p86, %s87, %s88
    %p92 = pneg %p86
    %p93 = scmp.eq.s32.totalorder %s9, 1
    %p94 = por %p92, %p93
    %p95 = scmp.ne.s32.totalorder %s87, %s90
    %p96 = scmp.eq.s32.totalorder %s9, 0
    %p97 = por %p95, %p96
    %p98 = scmp.ne.s32.totalorder %s87, %s90
    %p99 = scmp.eq.s32.totalorder %s14, 1
    %p100 = por %p98, %p99
    %p101 = scmp.ne.s32.totalorder %s90, %s91
    %p102 = scmp.eq.s32.totalorder %s14, 0
    %p103 = por %p101, %p102
    %p104 = scmp.ne.s32.totalorder %s90, %s91
    %p105 = scmp.eq.s32.totalorder %s15, 1
    %p106 = por %p104, %p105
    %p108 = scmp.ne.s32.totalorder %s91, %s107
    %p109 = scmp.eq.s32.totalorder %s15, 0
    %p110 = por %p108, %p109
    %p111 = scmp.le.s32.totalorder 1, %s9
    %p112 = scmp.lt.s32.totalorder %s9, 3
    %p113 = pnand %p111, %p112
    %p114 = pneg %p113
    // Predicated region
    $region9: #{dcgan_forward.6} parent=5 // pred_check
      _
    $region10: #{dcgan_forward.6} parent=5 // pred_check_branch
      %116 = sbr.rel (%p113) target = $region12
    $region11: #{dcgan_forward.6} parent=5 // pred_region
      %s117 = ssub.s32 %s9, 1
      // Predicated region
      $region13: #{dcgan_forward.6} parent=11 // pred_check
        %p118 = pneg %p56
      $region14: #{dcgan_forward.6} parent=11 // pred_check_branch
        %120 = sbr.rel (%p118) target = $region16
      $region15: #{dcgan_forward.6} parent=11 // pred_region
        _
      $region16: #{dcgan_forward.6} parent=11 // pred_fallthru
        _
      // Predicated region
      $region17: #{dcgan_forward.6} parent=11 // pred_check
        %p121 = pneg %p77
      $region18: #{dcgan_forward.6} parent=11 // pred_check_branch
        %123 = sbr.rel (%p121) target = $region20
      $region19: #{dcgan_forward.6} parent=11 // pred_region
        _
      $region20: #{dcgan_forward.6} parent=11 // pred_fallthru
        _
    $region12: #{dcgan_forward.6} parent=5 // pred_fallthru
      _
    %p124 = scmp.lt.s32.totalorder %s9, 2
    // Predicated region
    $region21: #{dcgan_forward.6} parent=5 // pred_check
      %p125 = pneg %p124
    $region22: #{dcgan_forward.6} parent=5 // pred_check_branch
      %127 = sbr.rel (%p125) target = $region24
    $region23: #{dcgan_forward.6} parent=5 // pred_region
      // Predicated region
      $region25: #{dcgan_forward.6} parent=23 // pred_check
        %p128 = pneg %p29
      $region26: #{dcgan_forward.6} parent=23 // pred_check_branch
        %130 = sbr.rel (%p128) target = $region28
      $region27: #{dcgan_forward.6} parent=23 // pred_region
        %p131 = scmp.lt.s32.totalorder %s9, 1
        %s132 = scalar_select %p131, %s9, 1
        %s133 = smul.addr %s132, 20
        %s134 = smul.addr %s133, 8
        %s135 = scalar_lea.vmem %s0, %s134
      $region28: #{dcgan_forward.6} parent=23 // pred_fallthru
        _
    $region24: #{dcgan_forward.6} parent=5 // pred_fallthru
      _
    %p136 = scmp.le.s32.totalorder 1, %s9
    %p137 = scmp.lt.s32.totalorder %s9, 3
    %p138 = pnand %p136, %p137
    %p139 = pneg %p138
    // Predicated region
    $region29: #{dcgan_forward.6} parent=5 // pred_check
      _
    $region30: #{dcgan_forward.6} parent=5 // pred_check_branch
      %141 = sbr.rel (%p138) target = $region32
    $region31: #{dcgan_forward.6} parent=5 // pred_region
      %s142 = ssub.s32 %s9, 1
      %p143 = scmp.lt.s32.totalorder %s14, 1
      %s144 = scalar_select %p143, %s14, 1
      %s145 = smul.addr %s144, 20
      %s146 = smul.addr %s145, 8
      %s147 = scalar_lea.vmem %s0, %s146
      %p148 = pneg %p35
      %p149 = pneg %p32
      %p150 = pneg %p56
      %p151 = pneg %p53
      %p152 = pneg %p77
      %p153 = pneg %p74
      %p154 = pneg %p103
      %p155 = pneg %p100
      %p156 = scmp.lt.s32.totalorder %s14, 1
      %s157 = scalar_select %p156, %s14, 1
      %s158 = smul.addr %s157, 9
      %s159 = smul.addr %s158, 8
      %s160 = scalar_lea.vmem %s3, %s159
      %p161 = scmp.lt.s32.totalorder %s14, 1
      %s162 = scalar_select %p161, %s14, 1
      %s163 = smul.addr %s162, 20
      %s164 = smul.addr %s163, 8
      %s165 = scalar_lea.vmem %s0, %s164
      %p166 = scmp.lt.s32.totalorder %s14, 1
      %s167 = scalar_select %p166, %s14, 1
      %s168 = smul.addr %s167, 9
      %s169 = smul.addr %s168, 8
      %s170 = scalar_lea.vmem %s3, %s169
      %v171 = vld [vmem:[%s165] sm:$0xff]
      %v172 = vld [vmem:[%s165 + $0x8] sm:$0xff]
      %v173 = vld [vmem:[%s165 + $0x10] sm:$0xff]
      %v174 = vld [vmem:[%s165 + $0x18] sm:$0xff]
      %v175 = vld [vmem:[%s165 + $0x20] sm:$0xff]
      %v176 = vld [vmem:[%s165 + $0x28] sm:$0xff]
      %v177 = vld [vmem:[%s165 + $0x30] sm:$0xff]
      %v178 = vld [vmem:[%s165 + $0x38] sm:$0xff]
      %v179 = vld [vmem:[%s165 + $0x40] sm:$0xff]
      %v180 = vld [vmem:[%s165 + $0x48] sm:$0xff]
      %v181 = vld [vmem:[%s165 + $0x50] sm:$0xff]
      %v182 = vld [vmem:[%s165 + $0x58] sm:$0xff]
      %v183 = vld [vmem:[%s165 + $0x60] sm:$0xff]
      %v184 = vld [vmem:[%s165 + $0x68] sm:$0xff]
      %v185 = vld [vmem:[%s165 + $0x70] sm:$0xff]
      %v186 = vld [vmem:[%s165 + $0x78] sm:$0xff]
      %v187 = vld [vmem:[%s165 + $0x80] sm:$0xff]
      %v188 = vld [vmem:[%s165 + $0x88] sm:$0xff]
      %v189 = vld [vmem:[%s165 + $0x90] sm:$0xff]
      %v190 = vld [vmem:[%s165 + $0x98] sm:$0xff]
      %191 = vrot.lane.b32.xlu0 %v171, 127
      %v192 = vpop.permute.xlu0 %191
      %193 = vrot.lane.b32.xlu0 %v181, 127
      %v194 = vpop.permute.xlu0 %193
      %195 = vrot.lane.b32.xlu0 %v172, 127
      %v196 = vpop.permute.xlu0 %195
      %197 = vrot.lane.b32.xlu0 %v182, 127
      %v198 = vpop.permute.xlu0 %197
      %199 = vrot.lane.b32.xlu0 %v173, 127
      %v200 = vpop.permute.xlu0 %199
      %201 = vrot.lane.b32.xlu0 %v183, 127
      %v202 = vpop.permute.xlu0 %201
      %203 = vrot.lane.b32.xlu0 %v174, 127
      %v204 = vpop.permute.xlu0 %203
      %205 = vrot.lane.b32.xlu0 %v184, 127
      %v206 = vpop.permute.xlu0 %205
      %207 = vrot.lane.b32.xlu0 %v175, 127
      %v208 = vpop.permute.xlu0 %207
      %209 = vrot.lane.b32.xlu0 %v185, 127
      %v210 = vpop.permute.xlu0 %209
      %211 = vrot.lane.b32.xlu0 %v176, 127
      %v212 = vpop.permute.xlu0 %211
      %213 = vrot.lane.b32.xlu0 %v186, 127
      %v214 = vpop.permute.xlu0 %213
      %215 = vrot.lane.b32.xlu0 %v177, 127
      %v216 = vpop.permute.xlu0 %215
      %217 = vrot.lane.b32.xlu0 %v187, 127
      %v218 = vpop.permute.xlu0 %217
      %219 = vrot.lane.b32.xlu0 %v178, 127
      %v220 = vpop.permute.xlu0 %219
      %221 = vrot.lane.b32.xlu0 %v188, 127
      %v222 = vpop.permute.xlu0 %221
      %223 = vrot.lane.b32.xlu0 %v179, 127
      %v224 = vpop.permute.xlu0 %223
      %225 = vrot.lane.b32.xlu0 %v189, 127
      %v226 = vpop.permute.xlu0 %225
      %227 = vrot.lane.b32.xlu0 %v180, 127
      %v228 = vpop.permute.xlu0 %227
      %229 = vrot.lane.b32.xlu0 %v190, 127
      %v230 = vpop.permute.xlu0 %229
      %v231 = vlaneseq
      %v232 = vand.u32 %v231, 127
      %vm233 = vcmp.lt.s32.totalorder %v232, 127
      %v234 = vsel %vm233, %v224, %v228
      %v235 = vsel %vm233, %v226, %v230
      %v236 = vsel %vm233, %v220, %v224
      %v237 = vsel %vm233, %v222, %v226
      %v238 = vsel %vm233, %v216, %v220
      %v239 = vsel %vm233, %v218, %v222
      %v240 = vsel %vm233, %v212, %v216
      %v241 = vsel %vm233, %v214, %v218
      %v242 = vsel %vm233, %v208, %v212
      %v243 = vsel %vm233, %v210, %v214
      %v244 = vsel %vm233, %v204, %v208
      %v245 = vsel %vm233, %v206, %v210
      %v246 = vsel %vm233, %v200, %v204
      %v247 = vsel %vm233, %v202, %v206
      %v248 = vsel %vm233, %v196, %v200
      %v249 = vsel %vm233, %v198, %v202
      %v250 = vsel %vm233, %v192, %v196
      %v251 = vsel %vm233, %v194, %v198
      %252 = vrot.lane.b32.xlu0 %v171, 126
      %v253 = vpop.permute.xlu0 %252
      %254 = vrot.lane.b32.xlu0 %v181, 126
      %v255 = vpop.permute.xlu0 %254
      %256 = vrot.lane.b32.xlu0 %v172, 126
      %v257 = vpop.permute.xlu0 %256
      %258 = vrot.lane.b32.xlu0 %v182, 126
      %v259 = vpop.permute.xlu0 %258
      %260 = vrot.lane.b32.xlu0 %v173, 126
      %v261 = vpop.permute.xlu0 %260
      %262 = vrot.lane.b32.xlu0 %v183, 126
      %v263 = vpop.permute.xlu0 %262
      %264 = vrot.lane.b32.xlu0 %v174, 126
      %v265 = vpop.permute.xlu0 %264
      %266 = vrot.lane.b32.xlu0 %v184, 126
      %v267 = vpop.permute.xlu0 %266
      %268 = vrot.lane.b32.xlu0 %v175, 126
      %v269 = vpop.permute.xlu0 %268
      %270 = vrot.lane.b32.xlu0 %v185, 126
      %v271 = vpop.permute.xlu0 %270
      %272 = vrot.lane.b32.xlu0 %v176, 126
      %v273 = vpop.permute.xlu0 %272
      %274 = vrot.lane.b32.xlu0 %v186, 126
      %v275 = vpop.permute.xlu0 %274
      %276 = vrot.lane.b32.xlu0 %v177, 126
      %v277 = vpop.permute.xlu0 %276
      %278 = vrot.lane.b32.xlu0 %v187, 126
      %v279 = vpop.permute.xlu0 %278
      %280 = vrot.lane.b32.xlu0 %v178, 126
      %v281 = vpop.permute.xlu0 %280
      %282 = vrot.lane.b32.xlu0 %v188, 126
      %v283 = vpop.permute.xlu0 %282
      %284 = vrot.lane.b32.xlu0 %v179, 126
      %v285 = vpop.permute.xlu0 %284
      %286 = vrot.lane.b32.xlu0 %v189, 126
      %v287 = vpop.permute.xlu0 %286
      %288 = vrot.lane.b32.xlu0 %v180, 126
      %v289 = vpop.permute.xlu0 %288
      %290 = vrot.lane.b32.xlu0 %v190, 126
      %v291 = vpop.permute.xlu0 %290
      %vm292 = vcmp.lt.s32.totalorder %v232, 126
      %v293 = vsel %vm292, %v285, %v289
      %v294 = vsel %vm292, %v287, %v291
      %v295 = vsel %vm292, %v281, %v285
      %v296 = vsel %vm292, %v283, %v287
      %v297 = vsel %vm292, %v277, %v281
      %v298 = vsel %vm292, %v279, %v283
      %v299 = vsel %vm292, %v273, %v277
      %v300 = vsel %vm292, %v275, %v279
      %v301 = vsel %vm292, %v269, %v273
      %v302 = vsel %vm292, %v271, %v275
      %v303 = vsel %vm292, %v265, %v269
      %v304 = vsel %vm292, %v267, %v271
      %v305 = vsel %vm292, %v261, %v265
      %v306 = vsel %vm292, %v263, %v267
      %v307 = vsel %vm292, %v257, %v261
      %v308 = vsel %vm292, %v259, %v263
      %v309 = vsel %vm292, %v253, %v257
      %v310 = vsel %vm292, %v255, %v259
      %311 = vrot.lane.b32.xlu0 %v171, 94
      %v312 = vpop.permute.xlu0 %311
      %313 = vrot.lane.b32.xlu0 %v181, 94
      %v314 = vpop.permute.xlu0 %313
      %315 = vrot.lane.b32.xlu0 %v172, 94
      %v316 = vpop.permute.xlu0 %315
      %317 = vrot.lane.b32.xlu0 %v182, 94
      %v318 = vpop.permute.xlu0 %317
      %319 = vrot.lane.b32.xlu0 %v173, 94
      %v320 = vpop.permute.xlu0 %319
      %321 = vrot.lane.b32.xlu0 %v183, 94
      %v322 = vpop.permute.xlu0 %321
      %323 = vrot.lane.b32.xlu0 %v174, 94
      %v324 = vpop.permute.xlu0 %323
      %325 = vrot.lane.b32.xlu0 %v184, 94
      %v326 = vpop.permute.xlu0 %325
      %327 = vrot.lane.b32.xlu0 %v175, 94
      %v328 = vpop.permute.xlu0 %327
      %329 = vrot.lane.b32.xlu0 %v185, 94
      %v330 = vpop.permute.xlu0 %329
      %331 = vrot.lane.b32.xlu0 %v176, 94
      %v332 = vpop.permute.xlu0 %331
      %333 = vrot.lane.b32.xlu0 %v186, 94
      %v334 = vpop.permute.xlu0 %333
      %335 = vrot.lane.b32.xlu0 %v177, 94
      %v336 = vpop.permute.xlu0 %335
      %337 = vrot.lane.b32.xlu0 %v187, 94
      %v338 = vpop.permute.xlu0 %337
      %339 = vrot.lane.b32.xlu0 %v178, 94
      %v340 = vpop.permute.xlu0 %339
      %341 = vrot.lane.b32.xlu0 %v188, 94
      %v342 = vpop.permute.xlu0 %341
      %343 = vrot.lane.b32.xlu0 %v179, 94
      %v344 = vpop.permute.xlu0 %343
      %345 = vrot.lane.b32.xlu0 %v189, 94
      %v346 = vpop.permute.xlu0 %345
      %347 = vrot.lane.b32.xlu0 %v180, 94
      %v348 = vpop.permute.xlu0 %347
      %349 = vrot.lane.b32.xlu0 %v190, 94
      %v350 = vpop.permute.xlu0 %349
      %vm351 = vcmp.lt.s32.totalorder %v232, 94
      %v352 = vsel %vm351, %v344, %v348
      %v353 = vsel %vm351, %v346, %v350
      %v354 = vsel %vm351, %v340, %v344
      %v355 = vsel %vm351, %v342, %v346
      %v356 = vsel %vm351, %v336, %v340
      %v357 = vsel %vm351, %v338, %v342
      %v358 = vsel %vm351, %v332, %v336
      %v359 = vsel %vm351, %v334, %v338
      %v360 = vsel %vm351, %v328, %v332
      %v361 = vsel %vm351, %v330, %v334
      %v362 = vsel %vm351, %v324, %v328
      %v363 = vsel %vm351, %v326, %v330
      %v364 = vsel %vm351, %v320, %v324
      %v365 = vsel %vm351, %v322, %v326
      %v366 = vsel %vm351, %v316, %v320
      %v367 = vsel %vm351, %v318, %v322
      %v368 = vsel %vm351, %v312, %v316
      %v369 = vsel %vm351, %v314, %v318
      %370 = vrot.lane.b32.xlu0 %v171, 93
      %v371 = vpop.permute.xlu0 %370
      %372 = vrot.lane.b32.xlu0 %v181, 93
      %v373 = vpop.permute.xlu0 %372
      %374 = vrot.lane.b32.xlu0 %v172, 93
      %v375 = vpop.permute.xlu0 %374
      %376 = vrot.lane.b32.xlu0 %v182, 93
      %v377 = vpop.permute.xlu0 %376
      %378 = vrot.lane.b32.xlu0 %v173, 93
      %v379 = vpop.permute.xlu0 %378
      %380 = vrot.lane.b32.xlu0 %v183, 93
      %v381 = vpop.permute.xlu0 %380
      %382 = vrot.lane.b32.xlu0 %v174, 93
      %v383 = vpop.permute.xlu0 %382
      %384 = vrot.lane.b32.xlu0 %v184, 93
      %v385 = vpop.permute.xlu0 %384
      %386 = vrot.lane.b32.xlu0 %v175, 93
      %v387 = vpop.permute.xlu0 %386
      %388 = vrot.lane.b32.xlu0 %v185, 93
      %v389 = vpop.permute.xlu0 %388
      %390 = vrot.lane.b32.xlu0 %v176, 93
      %v391 = vpop.permute.xlu0 %390
      %392 = vrot.lane.b32.xlu0 %v186, 93
      %v393 = vpop.permute.xlu0 %392
      %394 = vrot.lane.b32.xlu0 %v177, 93
      %v395 = vpop.permute.xlu0 %394
      %396 = vrot.lane.b32.xlu0 %v187, 93
      %v397 = vpop.permute.xlu0 %396
      %398 = vrot.lane.b32.xlu0 %v178, 93
      %v399 = vpop.permute.xlu0 %398
      %400 = vrot.lane.b32.xlu0 %v188, 93
      %v401 = vpop.permute.xlu0 %400
      %402 = vrot.lane.b32.xlu0 %v179, 93
      %v403 = vpop.permute.xlu0 %402
      %404 = vrot.lane.b32.xlu0 %v189, 93
      %v405 = vpop.permute.xlu0 %404
      %406 = vrot.lane.b32.xlu0 %v180, 93
      %v407 = vpop.permute.xlu0 %406
      %408 = vrot.lane.b32.xlu0 %v190, 93
      %v409 = vpop.permute.xlu0 %408
      %vm410 = vcmp.lt.s32.totalorder %v232, 93
      %v411 = vsel %vm410, %v403, %v407
      %v412 = vsel %vm410, %v405, %v409
      %v413 = vsel %vm410, %v399, %v403
      %v414 = vsel %vm410, %v401, %v405
      %v415 = vsel %vm410, %v395, %v399
      %v416 = vsel %vm410, %v397, %v401
      %v417 = vsel %vm410, %v391, %v395
      %v418 = vsel %vm410, %v393, %v397
      %v419 = vsel %vm410, %v387, %v391
      %v420 = vsel %vm410, %v389, %v393
      %v421 = vsel %vm410, %v383, %v387
      %v422 = vsel %vm410, %v385, %v389
      %v423 = vsel %vm410, %v379, %v383
      %v424 = vsel %vm410, %v381, %v385
      %v425 = vsel %vm410, %v375, %v379
      %v426 = vsel %vm410, %v377, %v381
      %v427 = vsel %vm410, %v371, %v375
      %v428 = vsel %vm410, %v373, %v377
      %429 = vrot.lane.b32.xlu0 %v171, 92
      %v430 = vpop.permute.xlu0 %429
      %431 = vrot.lane.b32.xlu0 %v181, 92
      %v432 = vpop.permute.xlu0 %431
      %433 = vrot.lane.b32.xlu0 %v172, 92
      %v434 = vpop.permute.xlu0 %433
      %435 = vrot.lane.b32.xlu0 %v182, 92
      %v436 = vpop.permute.xlu0 %435
      %437 = vrot.lane.b32.xlu0 %v173, 92
      %v438 = vpop.permute.xlu0 %437
      %439 = vrot.lane.b32.xlu0 %v183, 92
      %v440 = vpop.permute.xlu0 %439
      %441 = vrot.lane.b32.xlu0 %v174, 92
      %v442 = vpop.permute.xlu0 %441
      %443 = vrot.lane.b32.xlu0 %v184, 92
      %v444 = vpop.permute.xlu0 %443
      %445 = vrot.lane.b32.xlu0 %v175, 92
      %v446 = vpop.permute.xlu0 %445
      %447 = vrot.lane.b32.xlu0 %v185, 92
      %v448 = vpop.permute.xlu0 %447
      %449 = vrot.lane.b32.xlu0 %v176, 92
      %v450 = vpop.permute.xlu0 %449
      %451 = vrot.lane.b32.xlu0 %v186, 92
      %v452 = vpop.permute.xlu0 %451
      %453 = vrot.lane.b32.xlu0 %v177, 92
      %v454 = vpop.permute.xlu0 %453
      %455 = vrot.lane.b32.xlu0 %v187, 92
      %v456 = vpop.permute.xlu0 %455
      %457 = vrot.lane.b32.xlu0 %v178, 92
      %v458 = vpop.permute.xlu0 %457
      %459 = vrot.lane.b32.xlu0 %v188, 92
      %v460 = vpop.permute.xlu0 %459
      %461 = vrot.lane.b32.xlu0 %v179, 92
      %v462 = vpop.permute.xlu0 %461
      %463 = vrot.lane.b32.xlu0 %v189, 92
      %v464 = vpop.permute.xlu0 %463
      %465 = vrot.lane.b32.xlu0 %v180, 92
      %v466 = vpop.permute.xlu0 %465
      %467 = vrot.lane.b32.xlu0 %v190, 92
      %v468 = vpop.permute.xlu0 %467
      %vm469 = vcmp.lt.s32.totalorder %v232, 92
      %v470 = vsel %vm469, %v462, %v466
      %v471 = vsel %vm469, %v464, %v468
      %v472 = vsel %vm469, %v458, %v462
      %v473 = vsel %vm469, %v460, %v464
      %v474 = vsel %vm469, %v454, %v458
      %v475 = vsel %vm469, %v456, %v460
      %v476 = vsel %vm469, %v450, %v454
      %v477 = vsel %vm469, %v452, %v456
      %v478 = vsel %vm469, %v446, %v450
      %v479 = vsel %vm469, %v448, %v452
      %v480 = vsel %vm469, %v442, %v446
      %v481 = vsel %vm469, %v444, %v448
      %v482 = vsel %vm469, %v438, %v442
      %v483 = vsel %vm469, %v440, %v444
      %v484 = vsel %vm469, %v434, %v438
      %v485 = vsel %vm469, %v436, %v440
      %v486 = vsel %vm469, %v430, %v434
      %v487 = vsel %vm469, %v432, %v436
      %488 = vrot.lane.b32.xlu0 %v171, 60
      %v489 = vpop.permute.xlu0 %488
      %490 = vrot.lane.b32.xlu0 %v181, 60
      %v491 = vpop.permute.xlu0 %490
      %492 = vrot.lane.b32.xlu0 %v172, 60
      %v493 = vpop.permute.xlu0 %492
      %494 = vrot.lane.b32.xlu0 %v182, 60
      %v495 = vpop.permute.xlu0 %494
      %496 = vrot.lane.b32.xlu0 %v173, 60
      %v497 = vpop.permute.xlu0 %496
      %498 = vrot.lane.b32.xlu0 %v183, 60
      %v499 = vpop.permute.xlu0 %498
      %500 = vrot.lane.b32.xlu0 %v174, 60
      %v501 = vpop.permute.xlu0 %500
      %502 = vrot.lane.b32.xlu0 %v184, 60
      %v503 = vpop.permute.xlu0 %502
      %504 = vrot.lane.b32.xlu0 %v175, 60
      %v505 = vpop.permute.xlu0 %504
      %506 = vrot.lane.b32.xlu0 %v185, 60
      %v507 = vpop.permute.xlu0 %506
      %508 = vrot.lane.b32.xlu0 %v176, 60
      %v509 = vpop.permute.xlu0 %508
      %510 = vrot.lane.b32.xlu0 %v186, 60
      %v511 = vpop.permute.xlu0 %510
      %512 = vrot.lane.b32.xlu0 %v177, 60
      %v513 = vpop.permute.xlu0 %512
      %514 = vrot.lane.b32.xlu0 %v187, 60
      %v515 = vpop.permute.xlu0 %514
      %516 = vrot.lane.b32.xlu0 %v178, 60
      %v517 = vpop.permute.xlu0 %516
      %518 = vrot.lane.b32.xlu0 %v188, 60
      %v519 = vpop.permute.xlu0 %518
      %520 = vrot.lane.b32.xlu0 %v179, 60
      %v521 = vpop.permute.xlu0 %520
      %522 = vrot.lane.b32.xlu0 %v189, 60
      %v523 = vpop.permute.xlu0 %522
      %524 = vrot.lane.b32.xlu0 %v180, 60
      %v525 = vpop.permute.xlu0 %524
      %526 = vrot.lane.b32.xlu0 %v190, 60
      %v527 = vpop.permute.xlu0 %526
      %vm528 = vcmp.lt.s32.totalorder %v232, 60
      %v529 = vsel %vm528, %v521, %v525
      %v530 = vsel %vm528, %v523, %v527
      %v531 = vsel %vm528, %v517, %v521
      %v532 = vsel %vm528, %v519, %v523
      %v533 = vsel %vm528, %v513, %v517
      %v534 = vsel %vm528, %v515, %v519
      %v535 = vsel %vm528, %v509, %v513
      %v536 = vsel %vm528, %v511, %v515
      %v537 = vsel %vm528, %v505, %v509
      %v538 = vsel %vm528, %v507, %v511
      %v539 = vsel %vm528, %v501, %v505
      %v540 = vsel %vm528, %v503, %v507
      %v541 = vsel %vm528, %v497, %v501
      %v542 = vsel %vm528, %v499, %v503
      %v543 = vsel %vm528, %v493, %v497
      %v544 = vsel %vm528, %v495, %v499
      %v545 = vsel %vm528, %v489, %v493
      %v546 = vsel %vm528, %v491, %v495
      %547 = vrot.lane.b32.xlu0 %v171, 59
      %v548 = vpop.permute.xlu0 %547
      %549 = vrot.lane.b32.xlu0 %v181, 59
      %v550 = vpop.permute.xlu0 %549
      %551 = vrot.lane.b32.xlu0 %v172, 59
      %v552 = vpop.permute.xlu0 %551
      %553 = vrot.lane.b32.xlu0 %v182, 59
      %v554 = vpop.permute.xlu0 %553
      %555 = vrot.lane.b32.xlu0 %v173, 59
      %v556 = vpop.permute.xlu0 %555
      %557 = vrot.lane.b32.xlu0 %v183, 59
      %v558 = vpop.permute.xlu0 %557
      %559 = vrot.lane.b32.xlu0 %v174, 59
      %v560 = vpop.permute.xlu0 %559
      %561 = vrot.lane.b32.xlu0 %v184, 59
      %v562 = vpop.permute.xlu0 %561
      %563 = vrot.lane.b32.xlu0 %v175, 59
      %v564 = vpop.permute.xlu0 %563
      %565 = vrot.lane.b32.xlu0 %v185, 59
      %v566 = vpop.permute.xlu0 %565
      %567 = vrot.lane.b32.xlu0 %v176, 59
      %v568 = vpop.permute.xlu0 %567
      %569 = vrot.lane.b32.xlu0 %v186, 59
      %v570 = vpop.permute.xlu0 %569
      %571 = vrot.lane.b32.xlu0 %v177, 59
      %v572 = vpop.permute.xlu0 %571
      %573 = vrot.lane.b32.xlu0 %v187, 59
      %v574 = vpop.permute.xlu0 %573
      %575 = vrot.lane.b32.xlu0 %v178, 59
      %v576 = vpop.permute.xlu0 %575
      %577 = vrot.lane.b32.xlu0 %v188, 59
      %v578 = vpop.permute.xlu0 %577
      %579 = vrot.lane.b32.xlu0 %v179, 59
      %v580 = vpop.permute.xlu0 %579
      %581 = vrot.lane.b32.xlu0 %v189, 59
      %v582 = vpop.permute.xlu0 %581
      %583 = vrot.lane.b32.xlu0 %v180, 59
      %v584 = vpop.permute.xlu0 %583
      %585 = vrot.lane.b32.xlu0 %v190, 59
      %v586 = vpop.permute.xlu0 %585
      %vm587 = vcmp.lt.s32.totalorder %v232, 59
      %v588 = vsel %vm587, %v580, %v584
      %v589 = vsel %vm587, %v582, %v586
      %v590 = vsel %vm587, %v576, %v580
      %v591 = vsel %vm587, %v578, %v582
      %v592 = vsel %vm587, %v572, %v576
      %v593 = vsel %vm587, %v574, %v578
      %v594 = vsel %vm587, %v568, %v572
      %v595 = vsel %vm587, %v570, %v574
      %v596 = vsel %vm587, %v564, %v568
      %v597 = vsel %vm587, %v566, %v570
      %v598 = vsel %vm587, %v560, %v564
      %v599 = vsel %vm587, %v562, %v566
      %v600 = vsel %vm587, %v556, %v560
      %v601 = vsel %vm587, %v558, %v562
      %v602 = vsel %vm587, %v552, %v556
      %v603 = vsel %vm587, %v554, %v558
      %v604 = vsel %vm587, %v548, %v552
      %v605 = vsel %vm587, %v550, %v554
      %606 = vrot.lane.b32.xlu0 %v171, 58
      %v607 = vpop.permute.xlu0 %606
      %608 = vrot.lane.b32.xlu0 %v181, 58
      %v609 = vpop.permute.xlu0 %608
      %610 = vrot.lane.b32.xlu0 %v172, 58
      %v611 = vpop.permute.xlu0 %610
      %612 = vrot.lane.b32.xlu0 %v182, 58
      %v613 = vpop.permute.xlu0 %612
      %614 = vrot.lane.b32.xlu0 %v173, 58
      %v615 = vpop.permute.xlu0 %614
      %616 = vrot.lane.b32.xlu0 %v183, 58
      %v617 = vpop.permute.xlu0 %616
      %618 = vrot.lane.b32.xlu0 %v174, 58
      %v619 = vpop.permute.xlu0 %618
      %620 = vrot.lane.b32.xlu0 %v184, 58
      %v621 = vpop.permute.xlu0 %620
      %622 = vrot.lane.b32.xlu0 %v175, 58
      %v623 = vpop.permute.xlu0 %622
      %624 = vrot.lane.b32.xlu0 %v185, 58
      %v625 = vpop.permute.xlu0 %624
      %626 = vrot.lane.b32.xlu0 %v176, 58
      %v627 = vpop.permute.xlu0 %626
      %628 = vrot.lane.b32.xlu0 %v186, 58
      %v629 = vpop.permute.xlu0 %628
      %630 = vrot.lane.b32.xlu0 %v177, 58
      %v631 = vpop.permute.xlu0 %630
      %632 = vrot.lane.b32.xlu0 %v187, 58
      %v633 = vpop.permute.xlu0 %632
      %634 = vrot.lane.b32.xlu0 %v178, 58
      %v635 = vpop.permute.xlu0 %634
      %636 = vrot.lane.b32.xlu0 %v188, 58
      %v637 = vpop.permute.xlu0 %636
      %638 = vrot.lane.b32.xlu0 %v179, 58
      %v639 = vpop.permute.xlu0 %638
      %640 = vrot.lane.b32.xlu0 %v189, 58
      %v641 = vpop.permute.xlu0 %640
      %642 = vrot.lane.b32.xlu0 %v180, 58
      %v643 = vpop.permute.xlu0 %642
      %644 = vrot.lane.b32.xlu0 %v190, 58
      %v645 = vpop.permute.xlu0 %644
      %vm646 = vcmp.lt.s32.totalorder %v232, 58
      %v647 = vsel %vm646, %v639, %v643
      %v648 = vsel %vm646, %v641, %v645
      %v649 = vsel %vm646, %v635, %v639
      %v650 = vsel %vm646, %v637, %v641
      %v651 = vsel %vm646, %v631, %v635
      %v652 = vsel %vm646, %v633, %v637
      %v653 = vsel %vm646, %v627, %v631
      %v654 = vsel %vm646, %v629, %v633
      %v655 = vsel %vm646, %v623, %v627
      %v656 = vsel %vm646, %v625, %v629
      %v657 = vsel %vm646, %v619, %v623
      %v658 = vsel %vm646, %v621, %v625
      %v659 = vsel %vm646, %v615, %v619
      %v660 = vsel %vm646, %v617, %v621
      %v661 = vsel %vm646, %v611, %v615
      %v662 = vsel %vm646, %v613, %v617
      %v663 = vsel %vm646, %v607, %v611
      %v664 = vsel %vm646, %v609, %v613
      %v665 = vld [vmem:[%s1] sm:$0xff]
      %v666 = vld [vmem:[%s1 + $0x8] sm:$0xff]
      %v667 = vld [vmem:[%s2] sm:$0xff]
      %669 = vset.pattern.permute.xlu0 0
      %670 = vperm.xlu0 %669, %v667
      %v671 = vpop.permute.xlu0 %670
      %vm673 = vcmask 130048
      %v675 = vsel %vm673, %v666, 0
      %677 = vmatpush.msra.mxu0 %v605
      %678 = vmatpush.msra.mxu0 %v604
      %679 = vmatpush.msra.mxu0 %v546
      %680 = vmatpush.msra.mxu0 %v545
      %681 = vmatpush.msra.mxu0 %v487
      %682 = vmatpush.msra.mxu0 %v486
      %683 = vmatpush.msra.mxu0 %v428
      %684 = vmatpush.msra.mxu0 %v427
      %685 = vmatpush.msra.mxu0 %v369
      %686 = vmatpush.msra.mxu0 %v368
      %687 = vmatpush.msra.mxu0 %v310
      %688 = vmatpush.msra.mxu0 %v309
      %689 = vmatpush.msra.mxu0 %v251
      %690 = vmatpush.msra.mxu0 %v250
      %691 = vmatpush.msra.mxu0 %v181
      %692 = vmatpush.msra.mxu0 %v171
      %693 = vmatmul.f32.gmra.mxu0 %v665
      %v694 = vpop.f32.mrf.mxu0
      %v695 = vadd.f32 %v671, %v694
      %696 = vdwg.mxu0
      %697 = vmatpush.msra.mxu0 0.0
      %698 = vmatpush.msra.mxu0 0.0
      %699 = vmatpush.msra.mxu0 0.0
      %700 = vmatpush.msra.mxu0 0.0
      %701 = vmatpush.msra.mxu0 0.0
      %702 = vmatpush.msra.mxu0 0.0
      %703 = vmatpush.msra.mxu0 0.0
      %704 = vmatpush.msra.mxu0 0.0
      %705 = vmatpush.msra.mxu0 0.0
      %706 = vmatpush.msra.mxu0 0.0
      %707 = vmatpush.msra.mxu0 0.0
      %708 = vmatpush.msra.mxu0 0.0
      %709 = vmatpush.msra.mxu0 0.0
      %710 = vmatpush.msra.mxu0 0.0
      %711 = vmatpush.msra.mxu0 %v664
      %712 = vmatpush.msra.mxu0 %v663
      %713 = vmatmul.f32.gmra.mxu0 %v675
      %v714 = vpop.f32.mrf.mxu0
      %v715 = vadd.f32 %v695, %v714
      %716 = vdwg.mxu0
      %717 = vmatpush.msra.mxu0 %v603
      %718 = vmatpush.msra.mxu0 %v602
      %719 = vmatpush.msra.mxu0 %v544
      %720 = vmatpush.msra.mxu0 %v543
      %721 = vmatpush.msra.mxu0 %v485
      %722 = vmatpush.msra.mxu0 %v484
      %723 = vmatpush.msra.mxu0 %v426
      %724 = vmatpush.msra.mxu0 %v425
      %725 = vmatpush.msra.mxu0 %v367
      %726 = vmatpush.msra.mxu0 %v366
      %727 = vmatpush.msra.mxu0 %v308
      %728 = vmatpush.msra.mxu0 %v307
      %729 = vmatpush.msra.mxu0 %v249
      %730 = vmatpush.msra.mxu0 %v248
      %731 = vmatpush.msra.mxu0 %v182
      %732 = vmatpush.msra.mxu0 %v172
      %733 = vmatmul.f32.gmra.mxu0 %v665
      %v734 = vpop.f32.mrf.mxu0
      %v735 = vadd.f32 %v671, %v734
      %736 = vdwg.mxu0
      %737 = vmatpush.msra.mxu0 0.0
      %738 = vmatpush.msra.mxu0 0.0
      %739 = vmatpush.msra.mxu0 0.0
      %740 = vmatpush.msra.mxu0 0.0
      %741 = vmatpush.msra.mxu0 0.0
      %742 = vmatpush.msra.mxu0 0.0
      %743 = vmatpush.msra.mxu0 0.0
      %744 = vmatpush.msra.mxu0 0.0
      %745 = vmatpush.msra.mxu0 0.0
      %746 = vmatpush.msra.mxu0 0.0
      %747 = vmatpush.msra.mxu0 0.0
      %748 = vmatpush.msra.mxu0 0.0
      %749 = vmatpush.msra.mxu0 0.0
      %750 = vmatpush.msra.mxu0 0.0
      %751 = vmatpush.msra.mxu0 %v662
      %752 = vmatpush.msra.mxu0 %v661
      %753 = vmatmul.f32.gmra.mxu0 %v675
      %v754 = vpop.f32.mrf.mxu0
      %v755 = vadd.f32 %v735, %v754
      %756 = vdwg.mxu0
      %757 = vmatpush.msra.mxu0 %v601
      %758 = vmatpush.msra.mxu0 %v600
      %759 = vmatpush.msra.mxu0 %v542
      %760 = vmatpush.msra.mxu0 %v541
      %761 = vmatpush.msra.mxu0 %v483
      %762 = vmatpush.msra.mxu0 %v482
      %763 = vmatpush.msra.mxu0 %v424
      %764 = vmatpush.msra.mxu0 %v423
      %765 = vmatpush.msra.mxu0 %v365
      %766 = vmatpush.msra.mxu0 %v364
      %767 = vmatpush.msra.mxu0 %v306
      %768 = vmatpush.msra.mxu0 %v305
      %769 = vmatpush.msra.mxu0 %v247
      %770 = vmatpush.msra.mxu0 %v246
      %771 = vmatpush.msra.mxu0 %v183
      %772 = vmatpush.msra.mxu0 %v173
      %773 = vmatmul.f32.gmra.mxu0 %v665
      %v774 = vpop.f32.mrf.mxu0
      %v775 = vadd.f32 %v671, %v774
      %776 = vdwg.mxu0
      %777 = vmatpush.msra.mxu0 0.0
      %778 = vmatpush.msra.mxu0 0.0
      %779 = vmatpush.msra.mxu0 0.0
      %780 = vmatpush.msra.mxu0 0.0
      %781 = vmatpush.msra.mxu0 0.0
      %782 = vmatpush.msra.mxu0 0.0
      %783 = vmatpush.msra.mxu0 0.0
      %784 = vmatpush.msra.mxu0 0.0
      %785 = vmatpush.msra.mxu0 0.0
      %786 = vmatpush.msra.mxu0 0.0
      %787 = vmatpush.msra.mxu0 0.0
      %788 = vmatpush.msra.mxu0 0.0
      %789 = vmatpush.msra.mxu0 0.0
      %790 = vmatpush.msra.mxu0 0.0
      %791 = vmatpush.msra.mxu0 %v660
      %792 = vmatpush.msra.mxu0 %v659
      %793 = vmatmul.f32.gmra.mxu0 %v675
      %v794 = vpop.f32.mrf.mxu0
      %v795 = vadd.f32 %v775, %v794
      %796 = vdwg.mxu0
      %797 = vmatpush.msra.mxu0 %v599
      %798 = vmatpush.msra.mxu0 %v598
      %799 = vmatpush.msra.mxu0 %v540
      %800 = vmatpush.msra.mxu0 %v539
      %801 = vmatpush.msra.mxu0 %v481
      %802 = vmatpush.msra.mxu0 %v480
      %803 = vmatpush.msra.mxu0 %v422
      %804 = vmatpush.msra.mxu0 %v421
      %805 = vmatpush.msra.mxu0 %v363
      %806 = vmatpush.msra.mxu0 %v362
      %807 = vmatpush.msra.mxu0 %v304
      %808 = vmatpush.msra.mxu0 %v303
      %809 = vmatpush.msra.mxu0 %v245
      %810 = vmatpush.msra.mxu0 %v244
      %811 = vmatpush.msra.mxu0 %v184
      %812 = vmatpush.msra.mxu0 %v174
      %813 = vmatmul.f32.gmra.mxu0 %v665
      %v814 = vpop.f32.mrf.mxu0
      %v815 = vadd.f32 %v671, %v814
      %816 = vdwg.mxu0
      %817 = vmatpush.msra.mxu0 0.0
      %818 = vmatpush.msra.mxu0 0.0
      %819 = vmatpush.msra.mxu0 0.0
      %820 = vmatpush.msra.mxu0 0.0
      %821 = vmatpush.msra.mxu0 0.0
      %822 = vmatpush.msra.mxu0 0.0
      %823 = vmatpush.msra.mxu0 0.0
      %824 = vmatpush.msra.mxu0 0.0
      %825 = vmatpush.msra.mxu0 0.0
      %826 = vmatpush.msra.mxu0 0.0
      %827 = vmatpush.msra.mxu0 0.0
      %828 = vmatpush.msra.mxu0 0.0
      %829 = vmatpush.msra.mxu0 0.0
      %830 = vmatpush.msra.mxu0 0.0
      %831 = vmatpush.msra.mxu0 %v658
      %832 = vmatpush.msra.mxu0 %v657
      %833 = vmatmul.f32.gmra.mxu0 %v675
      %v834 = vpop.f32.mrf.mxu0
      %v835 = vadd.f32 %v815, %v834
      %836 = vdwg.mxu0
      %837 = vmatpush.msra.mxu0 %v597
      %838 = vmatpush.msra.mxu0 %v596
      %839 = vmatpush.msra.mxu0 %v538
      %840 = vmatpush.msra.mxu0 %v537
      %841 = vmatpush.msra.mxu0 %v479
      %842 = vmatpush.msra.mxu0 %v478
      %843 = vmatpush.msra.mxu0 %v420
      %844 = vmatpush.msra.mxu0 %v419
      %845 = vmatpush.msra.mxu0 %v361
      %846 = vmatpush.msra.mxu0 %v360
      %847 = vmatpush.msra.mxu0 %v302
      %848 = vmatpush.msra.mxu0 %v301
      %849 = vmatpush.msra.mxu0 %v243
      %850 = vmatpush.msra.mxu0 %v242
      %851 = vmatpush.msra.mxu0 %v185
      %852 = vmatpush.msra.mxu0 %v175
      %853 = vmatmul.f32.gmra.mxu0 %v665
      %v854 = vpop.f32.mrf.mxu0
      %v855 = vadd.f32 %v671, %v854
      %856 = vdwg.mxu0
      %857 = vmatpush.msra.mxu0 0.0
      %858 = vmatpush.msra.mxu0 0.0
      %859 = vmatpush.msra.mxu0 0.0
      %860 = vmatpush.msra.mxu0 0.0
      %861 = vmatpush.msra.mxu0 0.0
      %862 = vmatpush.msra.mxu0 0.0
      %863 = vmatpush.msra.mxu0 0.0
      %864 = vmatpush.msra.mxu0 0.0
      %865 = vmatpush.msra.mxu0 0.0
      %866 = vmatpush.msra.mxu0 0.0
      %867 = vmatpush.msra.mxu0 0.0
      %868 = vmatpush.msra.mxu0 0.0
      %869 = vmatpush.msra.mxu0 0.0
      %870 = vmatpush.msra.mxu0 0.0
      %871 = vmatpush.msra.mxu0 %v656
      %872 = vmatpush.msra.mxu0 %v655
      %873 = vmatmul.f32.gmra.mxu0 %v675
      %v874 = vpop.f32.mrf.mxu0
      %v875 = vadd.f32 %v855, %v874
      %876 = vdwg.mxu0
      %877 = vmatpush.msra.mxu0 %v595
      %878 = vmatpush.msra.mxu0 %v594
      %879 = vmatpush.msra.mxu0 %v536
      %880 = vmatpush.msra.mxu0 %v535
      %881 = vmatpush.msra.mxu0 %v477
      %882 = vmatpush.msra.mxu0 %v476
      %883 = vmatpush.msra.mxu0 %v418
      %884 = vmatpush.msra.mxu0 %v417
      %885 = vmatpush.msra.mxu0 %v359
      %886 = vmatpush.msra.mxu0 %v358
      %887 = vmatpush.msra.mxu0 %v300
      %888 = vmatpush.msra.mxu0 %v299
      %889 = vmatpush.msra.mxu0 %v241
      %890 = vmatpush.msra.mxu0 %v240
      %891 = vmatpush.msra.mxu0 %v186
      %892 = vmatpush.msra.mxu0 %v176
      %893 = vmatmul.f32.gmra.mxu0 %v665
      %v894 = vpop.f32.mrf.mxu0
      %v895 = vadd.f32 %v671, %v894
      %896 = vdwg.mxu0
      %897 = vmatpush.msra.mxu0 0.0
      %898 = vmatpush.msra.mxu0 0.0
      %899 = vmatpush.msra.mxu0 0.0
      %900 = vmatpush.msra.mxu0 0.0
      %901 = vmatpush.msra.mxu0 0.0
      %902 = vmatpush.msra.mxu0 0.0
      %903 = vmatpush.msra.mxu0 0.0
      %904 = vmatpush.msra.mxu0 0.0
      %905 = vmatpush.msra.mxu0 0.0
      %906 = vmatpush.msra.mxu0 0.0
      %907 = vmatpush.msra.mxu0 0.0
      %908 = vmatpush.msra.mxu0 0.0
      %909 = vmatpush.msra.mxu0 0.0
      %910 = vmatpush.msra.mxu0 0.0
      %911 = vmatpush.msra.mxu0 %v654
      %912 = vmatpush.msra.mxu0 %v653
      %913 = vmatmul.f32.gmra.mxu0 %v675
      %v914 = vpop.f32.mrf.mxu0
      %v915 = vadd.f32 %v895, %v914
      %916 = vdwg.mxu0
      %917 = vmatpush.msra.mxu0 %v593
      %918 = vmatpush.msra.mxu0 %v592
      %919 = vmatpush.msra.mxu0 %v534
      %920 = vmatpush.msra.mxu0 %v533
      %921 = vmatpush.msra.mxu0 %v475
      %922 = vmatpush.msra.mxu0 %v474
      %923 = vmatpush.msra.mxu0 %v416
      %924 = vmatpush.msra.mxu0 %v415
      %925 = vmatpush.msra.mxu0 %v357
      %926 = vmatpush.msra.mxu0 %v356
      %927 = vmatpush.msra.mxu0 %v298
      %928 = vmatpush.msra.mxu0 %v297
      %929 = vmatpush.msra.mxu0 %v239
      %930 = vmatpush.msra.mxu0 %v238
      %931 = vmatpush.msra.mxu0 %v187
      %932 = vmatpush.msra.mxu0 %v177
      %933 = vmatmul.f32.gmra.mxu0 %v665
      %v934 = vpop.f32.mrf.mxu0
      %v935 = vadd.f32 %v671, %v934
      %936 = vdwg.mxu0
      %937 = vmatpush.msra.mxu0 0.0
      %938 = vmatpush.msra.mxu0 0.0
      %939 = vmatpush.msra.mxu0 0.0
      %940 = vmatpush.msra.mxu0 0.0
      %941 = vmatpush.msra.mxu0 0.0
      %942 = vmatpush.msra.mxu0 0.0
      %943 = vmatpush.msra.mxu0 0.0
      %944 = vmatpush.msra.mxu0 0.0
      %945 = vmatpush.msra.mxu0 0.0
      %946 = vmatpush.msra.mxu0 0.0
      %947 = vmatpush.msra.mxu0 0.0
      %948 = vmatpush.msra.mxu0 0.0
      %949 = vmatpush.msra.mxu0 0.0
      %950 = vmatpush.msra.mxu0 0.0
      %951 = vmatpush.msra.mxu0 %v652
      %952 = vmatpush.msra.mxu0 %v651
      %953 = vmatmul.f32.gmra.mxu0 %v675
      %v954 = vpop.f32.mrf.mxu0
      %v955 = vadd.f32 %v935, %v954
      %956 = vdwg.mxu0
      %957 = vmatpush.msra.mxu0 %v591
      %958 = vmatpush.msra.mxu0 %v590
      %959 = vmatpush.msra.mxu0 %v532
      %960 = vmatpush.msra.mxu0 %v531
      %961 = vmatpush.msra.mxu0 %v473
      %962 = vmatpush.msra.mxu0 %v472
      %963 = vmatpush.msra.mxu0 %v414
      %964 = vmatpush.msra.mxu0 %v413
      %965 = vmatpush.msra.mxu0 %v355
      %966 = vmatpush.msra.mxu0 %v354
      %967 = vmatpush.msra.mxu0 %v296
      %968 = vmatpush.msra.mxu0 %v295
      %969 = vmatpush.msra.mxu0 %v237
      %970 = vmatpush.msra.mxu0 %v236
      %971 = vmatpush.msra.mxu0 %v188
      %972 = vmatpush.msra.mxu0 %v178
      %973 = vmatmul.f32.gmra.mxu0 %v665
      %v974 = vpop.f32.mrf.mxu0
      %v975 = vadd.f32 %v671, %v974
      %976 = vdwg.mxu0
      %977 = vmatpush.msra.mxu0 0.0
      %978 = vmatpush.msra.mxu0 0.0
      %979 = vmatpush.msra.mxu0 0.0
      %980 = vmatpush.msra.mxu0 0.0
      %981 = vmatpush.msra.mxu0 0.0
      %982 = vmatpush.msra.mxu0 0.0
      %983 = vmatpush.msra.mxu0 0.0
      %984 = vmatpush.msra.mxu0 0.0
      %985 = vmatpush.msra.mxu0 0.0
      %986 = vmatpush.msra.mxu0 0.0
      %987 = vmatpush.msra.mxu0 0.0
      %988 = vmatpush.msra.mxu0 0.0
      %989 = vmatpush.msra.mxu0 0.0
      %990 = vmatpush.msra.mxu0 0.0
      %991 = vmatpush.msra.mxu0 %v650
      %992 = vmatpush.msra.mxu0 %v649
      %993 = vmatmul.f32.gmra.mxu0 %v675
      %v994 = vpop.f32.mrf.mxu0
      %v995 = vadd.f32 %v975, %v994
      %996 = vdwg.mxu0
      %997 = vmatpush.msra.mxu0 %v589
      %998 = vmatpush.msra.mxu0 %v588
      %999 = vmatpush.msra.mxu0 %v530
      %1000 = vmatpush.msra.mxu0 %v529
      %1001 = vmatpush.msra.mxu0 %v471
      %1002 = vmatpush.msra.mxu0 %v470
      %1003 = vmatpush.msra.mxu0 %v412
      %1004 = vmatpush.msra.mxu0 %v411
      %1005 = vmatpush.msra.mxu0 %v353
      %1006 = vmatpush.msra.mxu0 %v352
      %1007 = vmatpush.msra.mxu0 %v294
      %1008 = vmatpush.msra.mxu0 %v293
      %1009 = vmatpush.msra.mxu0 %v235
      %1010 = vmatpush.msra.mxu0 %v234
      %1011 = vmatpush.msra.mxu0 %v189
      %1012 = vmatpush.msra.mxu0 %v179
      %1013 = vmatmul.f32.gmra.mxu0 %v665
      %v1014 = vpop.f32.mrf.mxu0
      %v1015 = vadd.f32 %v671, %v1014
      %1016 = vdwg.mxu0
      %1017 = vmatpush.msra.mxu0 0.0
      %1018 = vmatpush.msra.mxu0 0.0
      %1019 = vmatpush.msra.mxu0 0.0
      %1020 = vmatpush.msra.mxu0 0.0
      %1021 = vmatpush.msra.mxu0 0.0
      %1022 = vmatpush.msra.mxu0 0.0
      %1023 = vmatpush.msra.mxu0 0.0
      %1024 = vmatpush.msra.mxu0 0.0
      %1025 = vmatpush.msra.mxu0 0.0
      %1026 = vmatpush.msra.mxu0 0.0
      %1027 = vmatpush.msra.mxu0 0.0
      %1028 = vmatpush.msra.mxu0 0.0
      %1029 = vmatpush.msra.mxu0 0.0
      %1030 = vmatpush.msra.mxu0 0.0
      %1031 = vmatpush.msra.mxu0 %v648
      %1032 = vmatpush.msra.mxu0 %v647
      %1033 = vmatmul.f32.gmra.mxu0 %v675
      %v1034 = vpop.f32.mrf.mxu0
      %v1035 = vadd.f32 %v1015, %v1034
      %1036 = vdwg.mxu0
      %vm1037 = vcmp.gt.f32.partialorder %v715, 0.0
      %vm1038 = vcmp.gt.f32.partialorder %v755, 0.0
      %vm1039 = vcmp.gt.f32.partialorder %v795, 0.0
      %vm1040 = vcmp.gt.f32.partialorder %v835, 0.0
      %vm1041 = vcmp.gt.f32.partialorder %v875, 0.0
      %vm1042 = vcmp.gt.f32.partialorder %v915, 0.0
      %vm1043 = vcmp.gt.f32.partialorder %v955, 0.0
      %vm1044 = vcmp.gt.f32.partialorder %v995, 0.0
      %vm1045 = vcmp.gt.f32.partialorder %v1035, 0.0
      %v1046 = vmul.f32 %v715, 0.2
      %v1047 = vmul.f32 %v755, 0.2
      %v1048 = vmul.f32 %v795, 0.2
      %v1049 = vmul.f32 %v835, 0.2
      %v1050 = vmul.f32 %v875, 0.2
      %v1051 = vmul.f32 %v915, 0.2
      %v1052 = vmul.f32 %v955, 0.2
      %v1053 = vmul.f32 %v995, 0.2
      %v1054 = vmul.f32 %v1035, 0.2
      %v1055 = vsel %vm1037, %v715, %v1046
      %v1056 = vsel %vm1038, %v755, %v1047
      %v1057 = vsel %vm1039, %v795, %v1048
      %v1058 = vsel %vm1040, %v835, %v1049
      %v1059 = vsel %vm1041, %v875, %v1050
      %v1060 = vsel %vm1042, %v915, %v1051
      %v1061 = vsel %vm1043, %v955, %v1052
      %v1062 = vsel %vm1044, %v995, %v1053
      %v1063 = vsel %vm1045, %v1035, %v1054
      %1064 = vst [vmem:[%s170] sm:$0xff] %v1055
      %1065 = vst [vmem:[%s170 + $0x8] sm:$0xff] %v1056
      %1066 = vst [vmem:[%s170 + $0x10] sm:$0xff] %v1057
      %1067 = vst [vmem:[%s170 + $0x18] sm:$0xff] %v1058
      %1068 = vst [vmem:[%s170 + $0x20] sm:$0xff] %v1059
      %1069 = vst [vmem:[%s170 + $0x28] sm:$0xff] %v1060
      %1070 = vst [vmem:[%s170 + $0x30] sm:$0xff] %v1061
      %1071 = vst [vmem:[%s170 + $0x38] sm:$0xff] %v1062
      %vm1072 = vcmask 523264
      %1073 = vst.msk [vmem:[%s170 + $0x40] sm:$0xff] %vm1072, %v1063
      %p1074 = scmp.lt.s32.totalorder %s14, 1
      %s1075 = scalar_select %p1074, %s14, 1
      %s1076 = smul.addr %s1075, 9
      %s1077 = smul.addr %s1076, 8
      %s1078 = scalar_lea.vmem %s3, %s1077
      // Predicated region
      $region33: #{dcgan_forward.6} parent=31 // pred_check
        %p1079 = pneg %p100
      $region34: #{dcgan_forward.6} parent=31 // pred_check_branch
        %1081 = sbr.rel (%p1079) target = $region36
      $region35: #{dcgan_forward.6} parent=31 // pred_region
        _
      $region36: #{dcgan_forward.6} parent=31 // pred_fallthru
        _
    $region32: #{dcgan_forward.6} parent=5 // pred_fallthru
      _
    %p1082 = scmp.le.s32.totalorder 2, %s9
    // Predicated region
    $region37: #{dcgan_forward.6} parent=5 // pred_check
      %p1083 = pneg %p1082
    $region38: #{dcgan_forward.6} parent=5 // pred_check_branch
      %1085 = sbr.rel (%p1083) target = $region40
    $region39: #{dcgan_forward.6} parent=5 // pred_region
      %s1086 = ssub.s32 %s9, 2
      // Predicated region
      $region41: #{dcgan_forward.6} parent=39 // pred_check
        %p1087 = pneg %p106
      $region42: #{dcgan_forward.6} parent=39 // pred_check_branch
        %1089 = sbr.rel (%p1087) target = $region44
      $region43: #{dcgan_forward.6} parent=39 // pred_region
        %p1090 = scmp.lt.s32.totalorder %s15, 1
        %s1091 = scalar_select %p1090, %s15, 1
        %s1092 = smul.addr %s1091, 9
        %s1093 = smul.addr %s1092, 8
        %s1094 = scalar_lea.vmem %s3, %s1093
      $region44: #{dcgan_forward.6} parent=39 // pred_fallthru
        _
    $region40: #{dcgan_forward.6} parent=5 // pred_fallthru
      _
  $region6: #{dcgan_forward.6} parent=0 // loop_footer
    %s13 = sadd.s32 1, %s9
  $region7: #{dcgan_forward.6} parent=0 // loop_footer_branch
    %8 = sbr.rel target = $region3
  $region8: #{dcgan_forward.6} parent=0 // loop_exit
    _

// kernel: dcgan_forward.7
$region0: #{dcgan_forward.7}
  #allocation0 [shape = 'u32[]', space=smem, size = 0x4, offset = 0x4, fixed_abs, tag = 'smem constant byte address 0x4 - core index']
  #allocation1 [shape = 'u32[72,128]{1,0:T(1,128)}', space=vmem, size = 0x9000, scoped, tag = 'internal scratch']
  %s0 = inlined_call_operand.vmem [shape: f32[2,8,4480], index: 0, kind: input, shape index: {}]
  %s1 = inlined_call_operand.vmem [shape: f32[3,72], index: 1, kind: input, shape index: {}]
  %s2 = inlined_call_operand.vmem [shape: f32[3,1], index: 2, kind: input, shape index: {}]
  %s3 = inlined_call_operand.vmem [shape: f32[2,3,4224], index: 3, kind: output, shape index: {}]
  %s4 = sld [smem:[#allocation0]]
  $region45: #{dcgan_forward.7} parent=0
    _
  %s6 = ssub.s32 1, %s4
  %s7 = scalar_select 0, %s6, %s4
  loop: start=0, step=1, limit=4
  $region2: #{dcgan_forward.7} parent=0 // loop_pre_header
    _
  $region3: #{dcgan_forward.7} parent=0 // loop_header
    %s9 = sphi 0, %s13
    %p10 = scmp.ge.s32.totalorder %s9, 4
    %s19 = sphi 0, %s21
    %s22 = sphi 0, %s19
    %s23 = sphi 0, %s22
    %s39 = sphi 0, %s23
    %s43 = sphi 0, %s43
    %s45 = sphi 0, %s43
    %s46 = sphi 0, %s45
    %s60 = sphi 0, %s46
    %s64 = sphi 0, %s64
    %s66 = sphi 0, %s64
    %s67 = sphi 0, %s66
    %s81 = sphi 0, %s67
    %s87 = sphi 0, %s89
    %s90 = sphi 0, %s87
    %s91 = sphi 0, %s90
    %s107 = sphi 0, %s91
  $region4: #{dcgan_forward.7} parent=0 // loop_header_branch
    %12 = sbr.rel (%p10) target = $region8
  $region5: #{dcgan_forward.7} parent=0 // loop_body
    %s14 = ssub.s32 %s9, 1
    %s15 = ssub.s32 %s9, 2
    %s16 = sadd.s32 %s9, 1
    %s17 = ssub.s32 %s9, %s16
    %p18 = scmp.eq.s32.totalorder %s17, 0
    %s20 = sadd.s32 %s19, 1
    %s21 = scalar_select %p18, %s19, %s20
    %p24 = pneg %p18
    %p25 = scmp.eq.s32.totalorder %s9, 1
    %p26 = por %p24, %p25
    %p27 = scmp.ne.s32.totalorder %s19, %s22
    %p28 = scmp.eq.s32.totalorder %s9, 0
    %p29 = por %p27, %p28
    %p30 = scmp.ne.s32.totalorder %s19, %s22
    %p31 = scmp.eq.s32.totalorder %s14, 1
    %p32 = por %p30, %p31
    %p33 = scmp.ne.s32.totalorder %s22, %s23
    %p34 = scmp.eq.s32.totalorder %s14, 0
    %p35 = por %p33, %p34
    %p36 = scmp.ne.s32.totalorder %s22, %s23
    %p37 = scmp.eq.s32.totalorder %s15, 1
    %p38 = por %p36, %p37
    %p40 = scmp.ne.s32.totalorder %s23, %s39
    %p41 = scmp.eq.s32.totalorder %s15, 0
    %p42 = por %p40, %p41
    %s44 = sadd.s32 %s43, 1
    %p47 = scmp.eq.s32.totalorder %s9, 1
    %p48 = scmp.ne.s32.totalorder %s43, %s45
    %p49 = scmp.eq.s32.totalorder %s9, 0
    %p50 = por %p48, %p49
    %p51 = scmp.ne.s32.totalorder %s43, %s45
    %p52 = scmp.eq.s32.totalorder %s14, 1
    %p53 = por %p51, %p52
    %p54 = scmp.ne.s32.totalorder %s45, %s46
    %p55 = scmp.eq.s32.totalorder %s14, 0
    %p56 = por %p54, %p55
    %p57 = scmp.ne.s32.totalorder %s45, %s46
    %p58 = scmp.eq.s32.totalorder %s15, 1
    %p59 = por %p57, %p58
    %p61 = scmp.ne.s32.totalorder %s46, %s60
    %p62 = scmp.eq.s32.totalorder %s15, 0
    %p63 = por %p61, %p62
    %s65 = sadd.s32 %s64, 1
    %p68 = scmp.eq.s32.totalorder %s9, 1
    %p69 = scmp.ne.s32.totalorder %s64, %s66
    %p70 = scmp.eq.s32.totalorder %s9, 0
    %p71 = por %p69, %p70
    %p72 = scmp.ne.s32.totalorder %s64, %s66
    %p73 = scmp.eq.s32.totalorder %s14, 1
    %p74 = por %p72, %p73
    %p75 = scmp.ne.s32.totalorder %s66, %s67
    %p76 = scmp.eq.s32.totalorder %s14, 0
    %p77 = por %p75, %p76
    %p78 = scmp.ne.s32.totalorder %s66, %s67
    %p79 = scmp.eq.s32.totalorder %s15, 1
    %p80 = por %p78, %p79
    %p82 = scmp.ne.s32.totalorder %s67, %s81
    %p83 = scmp.eq.s32.totalorder %s15, 0
    %p84 = por %p82, %p83
    %s85 = ssub.s32 %s9, %s16
    %p86 = scmp.eq.s32.totalorder %s85, 0
    %s88 = sadd.s32 %s87, 1
    %s89 = scalar_select %p86, %s87, %s88
    %p92 = pneg %p86
    %p93 = scmp.eq.s32.totalorder %s9, 1
    %p94 = por %p92, %p93
    %p95 = scmp.ne.s32.totalorder %s87, %s90
    %p96 = scmp.eq.s32.totalorder %s9, 0
    %p97 = por %p95, %p96
    %p98 = scmp.ne.s32.totalorder %s87, %s90
    %p99 = scmp.eq.s32.totalorder %s14, 1
    %p100 = por %p98, %p99
    %p101 = scmp.ne.s32.totalorder %s90, %s91
    %p102 = scmp.eq.s32.totalorder %s14, 0
    %p103 = por %p101, %p102
    %p104 = scmp.ne.s32.totalorder %s90, %s91
    %p105 = scmp.eq.s32.totalorder %s15, 1
    %p106 = por %p104, %p105
    %p108 = scmp.ne.s32.totalorder %s91, %s107
    %p109 = scmp.eq.s32.totalorder %s15, 0
    %p110 = por %p108, %p109
    %p111 = scmp.le.s32.totalorder 1, %s9
    %p112 = scmp.lt.s32.totalorder %s9, 3
    %p113 = pnand %p111, %p112
    %p114 = pneg %p113
    // Predicated region
    $region9: #{dcgan_forward.7} parent=5 // pred_check
      _
    $region10: #{dcgan_forward.7} parent=5 // pred_check_branch
      %116 = sbr.rel (%p113) target = $region12
    $region11: #{dcgan_forward.7} parent=5 // pred_region
      %s117 = ssub.s32 %s9, 1
      // Predicated region
      $region13: #{dcgan_forward.7} parent=11 // pred_check
        %p118 = pneg %p56
      $region14: #{dcgan_forward.7} parent=11 // pred_check_branch
        %120 = sbr.rel (%p118) target = $region16
      $region15: #{dcgan_forward.7} parent=11 // pred_region
        _
      $region16: #{dcgan_forward.7} parent=11 // pred_fallthru
        _
      // Predicated region
      $region17: #{dcgan_forward.7} parent=11 // pred_check
        %p121 = pneg %p77
      $region18: #{dcgan_forward.7} parent=11 // pred_check_branch
        %123 = sbr.rel (%p121) target = $region20
      $region19: #{dcgan_forward.7} parent=11 // pred_region
        _
      $region20: #{dcgan_forward.7} parent=11 // pred_fallthru
        _
    $region12: #{dcgan_forward.7} parent=5 // pred_fallthru
      _
    %p124 = scmp.lt.s32.totalorder %s9, 2
    // Predicated region
    $region21: #{dcgan_forward.7} parent=5 // pred_check
      %p125 = pneg %p124
    $region22: #{dcgan_forward.7} parent=5 // pred_check_branch
      %127 = sbr.rel (%p125) target = $region24
    $region23: #{dcgan_forward.7} parent=5 // pred_region
      // Predicated region
      $region25: #{dcgan_forward.7} parent=23 // pred_check
        %p128 = pneg %p29
      $region26: #{dcgan_forward.7} parent=23 // pred_check_branch
        %130 = sbr.rel (%p128) target = $region28
      $region27: #{dcgan_forward.7} parent=23 // pred_region
        %p131 = scmp.lt.s32.totalorder %s9, 1
        %s132 = scalar_select %p131, %s9, 1
        %s133 = smul.addr %s132, 35
        %s134 = smul.addr %s133, 8
        %s135 = scalar_lea.vmem %s0, %s134
      $region28: #{dcgan_forward.7} parent=23 // pred_fallthru
        _
    $region24: #{dcgan_forward.7} parent=5 // pred_fallthru
      _
    %p136 = scmp.le.s32.totalorder 1, %s9
    %p137 = scmp.lt.s32.totalorder %s9, 3
    %p138 = pnand %p136, %p137
    %p139 = pneg %p138
    // Predicated region
    $region29: #{dcgan_forward.7} parent=5 // pred_check
      _
    $region30: #{dcgan_forward.7} parent=5 // pred_check_branch
      %141 = sbr.rel (%p138) target = $region32
    $region31: #{dcgan_forward.7} parent=5 // pred_region
      %s142 = ssub.s32 %s9, 1
      %p143 = scmp.lt.s32.totalorder %s14, 1
      %s144 = scalar_select %p143, %s14, 1
      %s145 = smul.addr %s144, 35
      %s146 = smul.addr %s145, 8
      %s147 = scalar_lea.vmem %s0, %s146
      %p148 = pneg %p35
      %p149 = pneg %p32
      %p150 = pneg %p56
      %p151 = pneg %p53
      %p152 = pneg %p77
      %p153 = pneg %p74
      %p154 = pneg %p103
      %p155 = pneg %p100
      %p156 = scmp.lt.s32.totalorder %s14, 1
      %s157 = scalar_select %p156, %s14, 1
      %s158 = smul.addr %s157, 33
      %s159 = smul.addr %s158, 4
      %s160 = scalar_lea.vmem %s3, %s159
      %p161 = scmp.lt.s32.totalorder %s14, 1
      %s162 = scalar_select %p161, %s14, 1
      %s163 = smul.addr %s162, 35
      %s164 = smul.addr %s163, 8
      %s165 = scalar_lea.vmem %s0, %s164
      %p166 = scmp.lt.s32.totalorder %s14, 1
      %s167 = scalar_select %p166, %s14, 1
      %s168 = smul.addr %s167, 33
      %s169 = smul.addr %s168, 4
      %s170 = scalar_lea.vmem %s3, %s169
      %v171 = vld [vmem:[%s165] sm:$0xff]
      %v172 = vld [vmem:[%s165 + $0x8] sm:$0xff]
      %v173 = vld [vmem:[%s165 + $0x10] sm:$0xff]
      %v174 = vld [vmem:[%s165 + $0x18] sm:$0xff]
      %v175 = vld [vmem:[%s165 + $0x20] sm:$0xff]
      %v176 = vld [vmem:[%s165 + $0x28] sm:$0xff]
      %v177 = vld [vmem:[%s165 + $0x30] sm:$0xff]
      %v178 = vld [vmem:[%s165 + $0x38] sm:$0xff]
      %v179 = vld [vmem:[%s165 + $0x40] sm:$0xff]
      %v180 = vld [vmem:[%s165 + $0x48] sm:$0xff]
      %v181 = vld [vmem:[%s165 + $0x50] sm:$0xff]
      %v182 = vld [vmem:[%s165 + $0x58] sm:$0xff]
      %v183 = vld [vmem:[%s165 + $0x60] sm:$0xff]
      %v184 = vld [vmem:[%s165 + $0x68] sm:$0xff]
      %v185 = vld [vmem:[%s165 + $0x70] sm:$0xff]
      %v186 = vld [vmem:[%s165 + $0x78] sm:$0xff]
      %v187 = vld [vmem:[%s165 + $0x80] sm:$0xff]
      %v188 = vld [vmem:[%s165 + $0x88] sm:$0xff]
      %v189 = vld [vmem:[%s165 + $0x90] sm:$0xff]
      %v190 = vld [vmem:[%s165 + $0x98] sm:$0xff]
      %v191 = vld [vmem:[%s165 + $0xa0] sm:$0xff]
      %v192 = vld [vmem:[%s165 + $0xa8] sm:$0xff]
      %v193 = vld [vmem:[%s165 + $0xb0] sm:$0xff]
      %v194 = vld [vmem:[%s165 + $0xb8] sm:$0xff]
      %v195 = vld [vmem:[%s165 + $0xc0] sm:$0xff]
      %v196 = vld [vmem:[%s165 + $0xc8] sm:$0xff]
      %v197 = vld [vmem:[%s165 + $0xd0] sm:$0xff]
      %v198 = vld [vmem:[%s165 + $0xd8] sm:$0xff]
      %v199 = vld [vmem:[%s165 + $0xe0] sm:$0xff]
      %v200 = vld [vmem:[%s165 + $0xe8] sm:$0xff]
      %v201 = vld [vmem:[%s165 + $0xf0] sm:$0xff]
      %v202 = vld [vmem:[%s165 + $0xf8] sm:$0xff]
      %v203 = vld [vmem:[%s165 + $0x100] sm:$0xff]
      %v204 = vld [vmem:[%s165 + $0x108] sm:$0xff]
      %v205 = vld [vmem:[%s165 + $0x110] sm:$0xff]
      %206 = vrot.lane.b32.xlu0 %v171, 127
      %v207 = vpop.permute.xlu0 %206
      %208 = vrot.lane.b32.xlu0 %v172, 127
      %v209 = vpop.permute.xlu0 %208
      %210 = vrot.lane.b32.xlu0 %v173, 127
      %v211 = vpop.permute.xlu0 %210
      %212 = vrot.lane.b32.xlu0 %v174, 127
      %v213 = vpop.permute.xlu0 %212
      %214 = vrot.lane.b32.xlu0 %v175, 127
      %v215 = vpop.permute.xlu0 %214
      %216 = vrot.lane.b32.xlu0 %v176, 127
      %v217 = vpop.permute.xlu0 %216
      %218 = vrot.lane.b32.xlu0 %v177, 127
      %v219 = vpop.permute.xlu0 %218
      %220 = vrot.lane.b32.xlu0 %v178, 127
      %v221 = vpop.permute.xlu0 %220
      %222 = vrot.lane.b32.xlu0 %v179, 127
      %v223 = vpop.permute.xlu0 %222
      %224 = vrot.lane.b32.xlu0 %v180, 127
      %v225 = vpop.permute.xlu0 %224
      %226 = vrot.lane.b32.xlu0 %v181, 127
      %v227 = vpop.permute.xlu0 %226
      %228 = vrot.lane.b32.xlu0 %v182, 127
      %v229 = vpop.permute.xlu0 %228
      %230 = vrot.lane.b32.xlu0 %v183, 127
      %v231 = vpop.permute.xlu0 %230
      %232 = vrot.lane.b32.xlu0 %v184, 127
      %v233 = vpop.permute.xlu0 %232
      %234 = vrot.lane.b32.xlu0 %v185, 127
      %v235 = vpop.permute.xlu0 %234
      %236 = vrot.lane.b32.xlu0 %v186, 127
      %v237 = vpop.permute.xlu0 %236
      %238 = vrot.lane.b32.xlu0 %v187, 127
      %v239 = vpop.permute.xlu0 %238
      %240 = vrot.lane.b32.xlu0 %v188, 127
      %v241 = vpop.permute.xlu0 %240
      %242 = vrot.lane.b32.xlu0 %v189, 127
      %v243 = vpop.permute.xlu0 %242
      %244 = vrot.lane.b32.xlu0 %v190, 127
      %v245 = vpop.permute.xlu0 %244
      %246 = vrot.lane.b32.xlu0 %v191, 127
      %v247 = vpop.permute.xlu0 %246
      %248 = vrot.lane.b32.xlu0 %v192, 127
      %v249 = vpop.permute.xlu0 %248
      %250 = vrot.lane.b32.xlu0 %v193, 127
      %v251 = vpop.permute.xlu0 %250
      %252 = vrot.lane.b32.xlu0 %v194, 127
      %v253 = vpop.permute.xlu0 %252
      %254 = vrot.lane.b32.xlu0 %v195, 127
      %v255 = vpop.permute.xlu0 %254
      %256 = vrot.lane.b32.xlu0 %v196, 127
      %v257 = vpop.permute.xlu0 %256
      %258 = vrot.lane.b32.xlu0 %v197, 127
      %v259 = vpop.permute.xlu0 %258
      %260 = vrot.lane.b32.xlu0 %v198, 127
      %v261 = vpop.permute.xlu0 %260
      %262 = vrot.lane.b32.xlu0 %v199, 127
      %v263 = vpop.permute.xlu0 %262
      %264 = vrot.lane.b32.xlu0 %v200, 127
      %v265 = vpop.permute.xlu0 %264
      %266 = vrot.lane.b32.xlu0 %v201, 127
      %v267 = vpop.permute.xlu0 %266
      %268 = vrot.lane.b32.xlu0 %v202, 127
      %v269 = vpop.permute.xlu0 %268
      %270 = vrot.lane.b32.xlu0 %v203, 127
      %v271 = vpop.permute.xlu0 %270
      %272 = vrot.lane.b32.xlu0 %v204, 127
      %v273 = vpop.permute.xlu0 %272
      %v274 = vlaneseq
      %v275 = vand.u32 %v274, 127
      %vm276 = vcmp.lt.s32.totalorder %v275, 127
      %v277 = vsel %vm276, %v271, %v273
      %v278 = vsel %vm276, %v269, %v271
      %v279 = vsel %vm276, %v267, %v269
      %v280 = vsel %vm276, %v265, %v267
      %v281 = vsel %vm276, %v263, %v265
      %v282 = vsel %vm276, %v261, %v263
      %v283 = vsel %vm276, %v259, %v261
      %v284 = vsel %vm276, %v257, %v259
      %v285 = vsel %vm276, %v255, %v257
      %v286 = vsel %vm276, %v253, %v255
      %v287 = vsel %vm276, %v251, %v253
      %v288 = vsel %vm276, %v249, %v251
      %v289 = vsel %vm276, %v247, %v249
      %v290 = vsel %vm276, %v245, %v247
      %v291 = vsel %vm276, %v243, %v245
      %v292 = vsel %vm276, %v241, %v243
      %v293 = vsel %vm276, %v239, %v241
      %v294 = vsel %vm276, %v237, %v239
      %v295 = vsel %vm276, %v235, %v237
      %v296 = vsel %vm276, %v233, %v235
      %v297 = vsel %vm276, %v231, %v233
      %v298 = vsel %vm276, %v229, %v231
      %v299 = vsel %vm276, %v227, %v229
      %v300 = vsel %vm276, %v225, %v227
      %v301 = vsel %vm276, %v223, %v225
      %v302 = vsel %vm276, %v221, %v223
      %v303 = vsel %vm276, %v219, %v221
      %v304 = vsel %vm276, %v217, %v219
      %v305 = vsel %vm276, %v215, %v217
      %v306 = vsel %vm276, %v213, %v215
      %v307 = vsel %vm276, %v211, %v213
      %v308 = vsel %vm276, %v209, %v211
      %v309 = vsel %vm276, %v207, %v209
      %310 = vrot.lane.b32.xlu0 %v171, 126
      %v311 = vpop.permute.xlu0 %310
      %312 = vrot.lane.b32.xlu0 %v172, 126
      %v313 = vpop.permute.xlu0 %312
      %314 = vrot.lane.b32.xlu0 %v173, 126
      %v315 = vpop.permute.xlu0 %314
      %316 = vrot.lane.b32.xlu0 %v174, 126
      %v317 = vpop.permute.xlu0 %316
      %318 = vrot.lane.b32.xlu0 %v175, 126
      %v319 = vpop.permute.xlu0 %318
      %320 = vrot.lane.b32.xlu0 %v176, 126
      %v321 = vpop.permute.xlu0 %320
      %322 = vrot.lane.b32.xlu0 %v177, 126
      %v323 = vpop.permute.xlu0 %322
      %324 = vrot.lane.b32.xlu0 %v178, 126
      %v325 = vpop.permute.xlu0 %324
      %326 = vrot.lane.b32.xlu0 %v179, 126
      %v327 = vpop.permute.xlu0 %326
      %328 = vrot.lane.b32.xlu0 %v180, 126
      %v329 = vpop.permute.xlu0 %328
      %330 = vrot.lane.b32.xlu0 %v181, 126
      %v331 = vpop.permute.xlu0 %330
      %332 = vrot.lane.b32.xlu0 %v182, 126
      %v333 = vpop.permute.xlu0 %332
      %334 = vrot.lane.b32.xlu0 %v183, 126
      %v335 = vpop.permute.xlu0 %334
      %336 = vrot.lane.b32.xlu0 %v184, 126
      %v337 = vpop.permute.xlu0 %336
      %338 = vrot.lane.b32.xlu0 %v185, 126
      %v339 = vpop.permute.xlu0 %338
      %340 = vrot.lane.b32.xlu0 %v186, 126
      %v341 = vpop.permute.xlu0 %340
      %342 = vrot.lane.b32.xlu0 %v187, 126
      %v343 = vpop.permute.xlu0 %342
      %344 = vrot.lane.b32.xlu0 %v188, 126
      %v345 = vpop.permute.xlu0 %344
      %346 = vrot.lane.b32.xlu0 %v189, 126
      %v347 = vpop.permute.xlu0 %346
      %348 = vrot.lane.b32.xlu0 %v190, 126
      %v349 = vpop.permute.xlu0 %348
      %350 = vrot.lane.b32.xlu0 %v191, 126
      %v351 = vpop.permute.xlu0 %350
      %352 = vrot.lane.b32.xlu0 %v192, 126
      %v353 = vpop.permute.xlu0 %352
      %354 = vrot.lane.b32.xlu0 %v193, 126
      %v355 = vpop.permute.xlu0 %354
      %356 = vrot.lane.b32.xlu0 %v194, 126
      %v357 = vpop.permute.xlu0 %356
      %358 = vrot.lane.b32.xlu0 %v195, 126
      %v359 = vpop.permute.xlu0 %358
      %360 = vrot.lane.b32.xlu0 %v196, 126
      %v361 = vpop.permute.xlu0 %360
      %362 = vrot.lane.b32.xlu0 %v197, 126
      %v363 = vpop.permute.xlu0 %362
      %364 = vrot.lane.b32.xlu0 %v198, 126
      %v365 = vpop.permute.xlu0 %364
      %366 = vrot.lane.b32.xlu0 %v199, 126
      %v367 = vpop.permute.xlu0 %366
      %368 = vrot.lane.b32.xlu0 %v200, 126
      %v369 = vpop.permute.xlu0 %368
      %370 = vrot.lane.b32.xlu0 %v201, 126
      %v371 = vpop.permute.xlu0 %370
      %372 = vrot.lane.b32.xlu0 %v202, 126
      %v373 = vpop.permute.xlu0 %372
      %374 = vrot.lane.b32.xlu0 %v203, 126
      %v375 = vpop.permute.xlu0 %374
      %376 = vrot.lane.b32.xlu0 %v204, 126
      %v377 = vpop.permute.xlu0 %376
      %vm378 = vcmp.lt.s32.totalorder %v275, 126
      %v379 = vsel %vm378, %v375, %v377
      %v380 = vsel %vm378, %v373, %v375
      %v381 = vsel %vm378, %v371, %v373
      %v382 = vsel %vm378, %v369, %v371
      %v383 = vsel %vm378, %v367, %v369
      %v384 = vsel %vm378, %v365, %v367
      %v385 = vsel %vm378, %v363, %v365
      %v386 = vsel %vm378, %v361, %v363
      %v387 = vsel %vm378, %v359, %v361
      %v388 = vsel %vm378, %v357, %v359
      %v389 = vsel %vm378, %v355, %v357
      %v390 = vsel %vm378, %v353, %v355
      %v391 = vsel %vm378, %v351, %v353
      %v392 = vsel %vm378, %v349, %v351
      %v393 = vsel %vm378, %v347, %v349
      %v394 = vsel %vm378, %v345, %v347
      %v395 = vsel %vm378, %v343, %v345
      %v396 = vsel %vm378, %v341, %v343
      %v397 = vsel %vm378, %v339, %v341
      %v398 = vsel %vm378, %v337, %v339
      %v399 = vsel %vm378, %v335, %v337
      %v400 = vsel %vm378, %v333, %v335
      %v401 = vsel %vm378, %v331, %v333
      %v402 = vsel %vm378, %v329, %v331
      %v403 = vsel %vm378, %v327, %v329
      %v404 = vsel %vm378, %v325, %v327
      %v405 = vsel %vm378, %v323, %v325
      %v406 = vsel %vm378, %v321, %v323
      %v407 = vsel %vm378, %v319, %v321
      %v408 = vsel %vm378, %v317, %v319
      %v409 = vsel %vm378, %v315, %v317
      %v410 = vsel %vm378, %v313, %v315
      %v411 = vsel %vm378, %v311, %v313
      %412 = vrot.lane.b32.xlu0 %v171, 62
      %v413 = vpop.permute.xlu0 %412
      %414 = vrot.lane.b32.xlu0 %v172, 62
      %v415 = vpop.permute.xlu0 %414
      %416 = vrot.lane.b32.xlu0 %v173, 62
      %v417 = vpop.permute.xlu0 %416
      %418 = vrot.lane.b32.xlu0 %v174, 62
      %v419 = vpop.permute.xlu0 %418
      %420 = vrot.lane.b32.xlu0 %v175, 62
      %v421 = vpop.permute.xlu0 %420
      %422 = vrot.lane.b32.xlu0 %v176, 62
      %v423 = vpop.permute.xlu0 %422
      %424 = vrot.lane.b32.xlu0 %v177, 62
      %v425 = vpop.permute.xlu0 %424
      %426 = vrot.lane.b32.xlu0 %v178, 62
      %v427 = vpop.permute.xlu0 %426
      %428 = vrot.lane.b32.xlu0 %v179, 62
      %v429 = vpop.permute.xlu0 %428
      %430 = vrot.lane.b32.xlu0 %v180, 62
      %v431 = vpop.permute.xlu0 %430
      %432 = vrot.lane.b32.xlu0 %v181, 62
      %v433 = vpop.permute.xlu0 %432
      %434 = vrot.lane.b32.xlu0 %v182, 62
      %v435 = vpop.permute.xlu0 %434
      %436 = vrot.lane.b32.xlu0 %v183, 62
      %v437 = vpop.permute.xlu0 %436
      %438 = vrot.lane.b32.xlu0 %v184, 62
      %v439 = vpop.permute.xlu0 %438
      %440 = vrot.lane.b32.xlu0 %v185, 62
      %v441 = vpop.permute.xlu0 %440
      %442 = vrot.lane.b32.xlu0 %v186, 62
      %v443 = vpop.permute.xlu0 %442
      %444 = vrot.lane.b32.xlu0 %v187, 62
      %v445 = vpop.permute.xlu0 %444
      %446 = vrot.lane.b32.xlu0 %v188, 62
      %v447 = vpop.permute.xlu0 %446
      %448 = vrot.lane.b32.xlu0 %v189, 62
      %v449 = vpop.permute.xlu0 %448
      %450 = vrot.lane.b32.xlu0 %v190, 62
      %v451 = vpop.permute.xlu0 %450
      %452 = vrot.lane.b32.xlu0 %v191, 62
      %v453 = vpop.permute.xlu0 %452
      %454 = vrot.lane.b32.xlu0 %v192, 62
      %v455 = vpop.permute.xlu0 %454
      %456 = vrot.lane.b32.xlu0 %v193, 62
      %v457 = vpop.permute.xlu0 %456
      %458 = vrot.lane.b32.xlu0 %v194, 62
      %v459 = vpop.permute.xlu0 %458
      %460 = vrot.lane.b32.xlu0 %v195, 62
      %v461 = vpop.permute.xlu0 %460
      %462 = vrot.lane.b32.xlu0 %v196, 62
      %v463 = vpop.permute.xlu0 %462
      %464 = vrot.lane.b32.xlu0 %v197, 62
      %v465 = vpop.permute.xlu0 %464
      %466 = vrot.lane.b32.xlu0 %v198, 62
      %v467 = vpop.permute.xlu0 %466
      %468 = vrot.lane.b32.xlu0 %v199, 62
      %v469 = vpop.permute.xlu0 %468
      %470 = vrot.lane.b32.xlu0 %v200, 62
      %v471 = vpop.permute.xlu0 %470
      %472 = vrot.lane.b32.xlu0 %v201, 62
      %v473 = vpop.permute.xlu0 %472
      %474 = vrot.lane.b32.xlu0 %v202, 62
      %v475 = vpop.permute.xlu0 %474
      %476 = vrot.lane.b32.xlu0 %v203, 62
      %v477 = vpop.permute.xlu0 %476
      %478 = vrot.lane.b32.xlu0 %v204, 62
      %v479 = vpop.permute.xlu0 %478
      %vm480 = vcmp.lt.s32.totalorder %v275, 62
      %v481 = vsel %vm480, %v477, %v479
      %v482 = vsel %vm480, %v475, %v477
      %v483 = vsel %vm480, %v473, %v475
      %v484 = vsel %vm480, %v471, %v473
      %v485 = vsel %vm480, %v469, %v471
      %v486 = vsel %vm480, %v467, %v469
      %v487 = vsel %vm480, %v465, %v467
      %v488 = vsel %vm480, %v463, %v465
      %v489 = vsel %vm480, %v461, %v463
      %v490 = vsel %vm480, %v459, %v461
      %v491 = vsel %vm480, %v457, %v459
      %v492 = vsel %vm480, %v455, %v457
      %v493 = vsel %vm480, %v453, %v455
      %v494 = vsel %vm480, %v451, %v453
      %v495 = vsel %vm480, %v449, %v451
      %v496 = vsel %vm480, %v447, %v449
      %v497 = vsel %vm480, %v445, %v447
      %v498 = vsel %vm480, %v443, %v445
      %v499 = vsel %vm480, %v441, %v443
      %v500 = vsel %vm480, %v439, %v441
      %v501 = vsel %vm480, %v437, %v439
      %v502 = vsel %vm480, %v435, %v437
      %v503 = vsel %vm480, %v433, %v435
      %v504 = vsel %vm480, %v431, %v433
      %v505 = vsel %vm480, %v429, %v431
      %v506 = vsel %vm480, %v427, %v429
      %v507 = vsel %vm480, %v425, %v427
      %v508 = vsel %vm480, %v423, %v425
      %v509 = vsel %vm480, %v421, %v423
      %v510 = vsel %vm480, %v419, %v421
      %v511 = vsel %vm480, %v417, %v419
      %v512 = vsel %vm480, %v415, %v417
      %v513 = vsel %vm480, %v413, %v415
      %514 = vrot.lane.b32.xlu0 %v171, 61
      %v515 = vpop.permute.xlu0 %514
      %516 = vrot.lane.b32.xlu0 %v172, 61
      %v517 = vpop.permute.xlu0 %516
      %518 = vrot.lane.b32.xlu0 %v173, 61
      %v519 = vpop.permute.xlu0 %518
      %520 = vrot.lane.b32.xlu0 %v174, 61
      %v521 = vpop.permute.xlu0 %520
      %522 = vrot.lane.b32.xlu0 %v175, 61
      %v523 = vpop.permute.xlu0 %522
      %524 = vrot.lane.b32.xlu0 %v176, 61
      %v525 = vpop.permute.xlu0 %524
      %526 = vrot.lane.b32.xlu0 %v177, 61
      %v527 = vpop.permute.xlu0 %526
      %528 = vrot.lane.b32.xlu0 %v178, 61
      %v529 = vpop.permute.xlu0 %528
      %530 = vrot.lane.b32.xlu0 %v179, 61
      %v531 = vpop.permute.xlu0 %530
      %532 = vrot.lane.b32.xlu0 %v180, 61
      %v533 = vpop.permute.xlu0 %532
      %534 = vrot.lane.b32.xlu0 %v181, 61
      %v535 = vpop.permute.xlu0 %534
      %536 = vrot.lane.b32.xlu0 %v182, 61
      %v537 = vpop.permute.xlu0 %536
      %538 = vrot.lane.b32.xlu0 %v183, 61
      %v539 = vpop.permute.xlu0 %538
      %540 = vrot.lane.b32.xlu0 %v184, 61
      %v541 = vpop.permute.xlu0 %540
      %542 = vrot.lane.b32.xlu0 %v185, 61
      %v543 = vpop.permute.xlu0 %542
      %544 = vrot.lane.b32.xlu0 %v186, 61
      %v545 = vpop.permute.xlu0 %544
      %546 = vrot.lane.b32.xlu0 %v187, 61
      %v547 = vpop.permute.xlu0 %546
      %548 = vrot.lane.b32.xlu0 %v188, 61
      %v549 = vpop.permute.xlu0 %548
      %550 = vrot.lane.b32.xlu0 %v189, 61
      %v551 = vpop.permute.xlu0 %550
      %552 = vrot.lane.b32.xlu0 %v190, 61
      %v553 = vpop.permute.xlu0 %552
      %554 = vrot.lane.b32.xlu0 %v191, 61
      %v555 = vpop.permute.xlu0 %554
      %556 = vrot.lane.b32.xlu0 %v192, 61
      %v557 = vpop.permute.xlu0 %556
      %558 = vrot.lane.b32.xlu0 %v193, 61
      %v559 = vpop.permute.xlu0 %558
      %560 = vrot.lane.b32.xlu0 %v194, 61
      %v561 = vpop.permute.xlu0 %560
      %562 = vrot.lane.b32.xlu0 %v195, 61
      %v563 = vpop.permute.xlu0 %562
      %564 = vrot.lane.b32.xlu0 %v196, 61
      %v565 = vpop.permute.xlu0 %564
      %566 = vrot.lane.b32.xlu0 %v197, 61
      %v567 = vpop.permute.xlu0 %566
      %568 = vrot.lane.b32.xlu0 %v198, 61
      %v569 = vpop.permute.xlu0 %568
      %570 = vrot.lane.b32.xlu0 %v199, 61
      %v571 = vpop.permute.xlu0 %570
      %572 = vrot.lane.b32.xlu0 %v200, 61
      %v573 = vpop.permute.xlu0 %572
      %574 = vrot.lane.b32.xlu0 %v201, 61
      %v575 = vpop.permute.xlu0 %574
      %576 = vrot.lane.b32.xlu0 %v202, 61
      %v577 = vpop.permute.xlu0 %576
      %578 = vrot.lane.b32.xlu0 %v203, 61
      %v579 = vpop.permute.xlu0 %578
      %580 = vrot.lane.b32.xlu0 %v204, 61
      %v581 = vpop.permute.xlu0 %580
      %vm582 = vcmp.lt.s32.totalorder %v275, 61
      %v583 = vsel %vm582, %v579, %v581
      %v584 = vsel %vm582, %v577, %v579
      %v585 = vsel %vm582, %v575, %v577
      %v586 = vsel %vm582, %v573, %v575
      %v587 = vsel %vm582, %v571, %v573
      %v588 = vsel %vm582, %v569, %v571
      %v589 = vsel %vm582, %v567, %v569
      %v590 = vsel %vm582, %v565, %v567
      %v591 = vsel %vm582, %v563, %v565
      %v592 = vsel %vm582, %v561, %v563
      %v593 = vsel %vm582, %v559, %v561
      %v594 = vsel %vm582, %v557, %v559
      %v595 = vsel %vm582, %v555, %v557
      %v596 = vsel %vm582, %v553, %v555
      %v597 = vsel %vm582, %v551, %v553
      %v598 = vsel %vm582, %v549, %v551
      %v599 = vsel %vm582, %v547, %v549
      %v600 = vsel %vm582, %v545, %v547
      %v601 = vsel %vm582, %v543, %v545
      %v602 = vsel %vm582, %v541, %v543
      %v603 = vsel %vm582, %v539, %v541
      %v604 = vsel %vm582, %v537, %v539
      %v605 = vsel %vm582, %v535, %v537
      %v606 = vsel %vm582, %v533, %v535
      %v607 = vsel %vm582, %v531, %v533
      %v608 = vsel %vm582, %v529, %v531
      %v609 = vsel %vm582, %v527, %v529
      %v610 = vsel %vm582, %v525, %v527
      %v611 = vsel %vm582, %v523, %v525
      %v612 = vsel %vm582, %v521, %v523
      %v613 = vsel %vm582, %v519, %v521
      %v614 = vsel %vm582, %v517, %v519
      %v615 = vsel %vm582, %v515, %v517
      %616 = vrot.lane.b32.xlu0 %v171, 60
      %v617 = vpop.permute.xlu0 %616
      %618 = vrot.lane.b32.xlu0 %v172, 60
      %v619 = vpop.permute.xlu0 %618
      %620 = vrot.lane.b32.xlu0 %v173, 60
      %v621 = vpop.permute.xlu0 %620
      %622 = vrot.lane.b32.xlu0 %v174, 60
      %v623 = vpop.permute.xlu0 %622
      %624 = vrot.lane.b32.xlu0 %v175, 60
      %v625 = vpop.permute.xlu0 %624
      %626 = vrot.lane.b32.xlu0 %v176, 60
      %v627 = vpop.permute.xlu0 %626
      %628 = vrot.lane.b32.xlu0 %v177, 60
      %v629 = vpop.permute.xlu0 %628
      %630 = vrot.lane.b32.xlu0 %v178, 60
      %v631 = vpop.permute.xlu0 %630
      %632 = vrot.lane.b32.xlu0 %v179, 60
      %v633 = vpop.permute.xlu0 %632
      %634 = vrot.lane.b32.xlu0 %v180, 60
      %v635 = vpop.permute.xlu0 %634
      %636 = vrot.lane.b32.xlu0 %v181, 60
      %v637 = vpop.permute.xlu0 %636
      %638 = vrot.lane.b32.xlu0 %v182, 60
      %v639 = vpop.permute.xlu0 %638
      %640 = vrot.lane.b32.xlu0 %v183, 60
      %v641 = vpop.permute.xlu0 %640
      %642 = vrot.lane.b32.xlu0 %v184, 60
      %v643 = vpop.permute.xlu0 %642
      %644 = vrot.lane.b32.xlu0 %v185, 60
      %v645 = vpop.permute.xlu0 %644
      %646 = vrot.lane.b32.xlu0 %v186, 60
      %v647 = vpop.permute.xlu0 %646
      %648 = vrot.lane.b32.xlu0 %v187, 60
      %v649 = vpop.permute.xlu0 %648
      %650 = vrot.lane.b32.xlu0 %v188, 60
      %v651 = vpop.permute.xlu0 %650
      %652 = vrot.lane.b32.xlu0 %v189, 60
      %v653 = vpop.permute.xlu0 %652
      %654 = vrot.lane.b32.xlu0 %v190, 60
      %v655 = vpop.permute.xlu0 %654
      %656 = vrot.lane.b32.xlu0 %v191, 60
      %v657 = vpop.permute.xlu0 %656
      %658 = vrot.lane.b32.xlu0 %v192, 60
      %v659 = vpop.permute.xlu0 %658
      %660 = vrot.lane.b32.xlu0 %v193, 60
      %v661 = vpop.permute.xlu0 %660
      %662 = vrot.lane.b32.xlu0 %v194, 60
      %v663 = vpop.permute.xlu0 %662
      %664 = vrot.lane.b32.xlu0 %v195, 60
      %v665 = vpop.permute.xlu0 %664
      %666 = vrot.lane.b32.xlu0 %v196, 60
      %v667 = vpop.permute.xlu0 %666
      %668 = vrot.lane.b32.xlu0 %v197, 60
      %v669 = vpop.permute.xlu0 %668
      %670 = vrot.lane.b32.xlu0 %v198, 60
      %v671 = vpop.permute.xlu0 %670
      %672 = vrot.lane.b32.xlu0 %v199, 60
      %v673 = vpop.permute.xlu0 %672
      %674 = vrot.lane.b32.xlu0 %v200, 60
      %v675 = vpop.permute.xlu0 %674
      %676 = vrot.lane.b32.xlu0 %v201, 60
      %v677 = vpop.permute.xlu0 %676
      %678 = vrot.lane.b32.xlu0 %v202, 60
      %v679 = vpop.permute.xlu0 %678
      %680 = vrot.lane.b32.xlu0 %v203, 60
      %v681 = vpop.permute.xlu0 %680
      %682 = vrot.lane.b32.xlu0 %v204, 60
      %v683 = vpop.permute.xlu0 %682
      %vm684 = vcmp.lt.s32.totalorder %v275, 60
      %v685 = vsel %vm684, %v681, %v683
      %v686 = vsel %vm684, %v679, %v681
      %v687 = vsel %vm684, %v677, %v679
      %v688 = vsel %vm684, %v675, %v677
      %v689 = vsel %vm684, %v673, %v675
      %v690 = vsel %vm684, %v671, %v673
      %v691 = vsel %vm684, %v669, %v671
      %v692 = vsel %vm684, %v667, %v669
      %v693 = vsel %vm684, %v665, %v667
      %v694 = vsel %vm684, %v663, %v665
      %v695 = vsel %vm684, %v661, %v663
      %v696 = vsel %vm684, %v659, %v661
      %v697 = vsel %vm684, %v657, %v659
      %v698 = vsel %vm684, %v655, %v657
      %v699 = vsel %vm684, %v653, %v655
      %v700 = vsel %vm684, %v651, %v653
      %v701 = vsel %vm684, %v649, %v651
      %v702 = vsel %vm684, %v647, %v649
      %v703 = vsel %vm684, %v645, %v647
      %v704 = vsel %vm684, %v643, %v645
      %v705 = vsel %vm684, %v641, %v643
      %v706 = vsel %vm684, %v639, %v641
      %v707 = vsel %vm684, %v637, %v639
      %v708 = vsel %vm684, %v635, %v637
      %v709 = vsel %vm684, %v633, %v635
      %v710 = vsel %vm684, %v631, %v633
      %v711 = vsel %vm684, %v629, %v631
      %v712 = vsel %vm684, %v627, %v629
      %v713 = vsel %vm684, %v625, %v627
      %v714 = vsel %vm684, %v623, %v625
      %v715 = vsel %vm684, %v621, %v623
      %v716 = vsel %vm684, %v619, %v621
      %v717 = vsel %vm684, %v617, %v619
      %718 = vrot.lane.b32.xlu0 %v172, 124
      %v719 = vpop.permute.xlu0 %718
      %720 = vrot.lane.b32.xlu0 %v173, 124
      %v721 = vpop.permute.xlu0 %720
      %722 = vrot.lane.b32.xlu0 %v174, 124
      %v723 = vpop.permute.xlu0 %722
      %724 = vrot.lane.b32.xlu0 %v175, 124
      %v725 = vpop.permute.xlu0 %724
      %726 = vrot.lane.b32.xlu0 %v176, 124
      %v727 = vpop.permute.xlu0 %726
      %728 = vrot.lane.b32.xlu0 %v177, 124
      %v729 = vpop.permute.xlu0 %728
      %730 = vrot.lane.b32.xlu0 %v178, 124
      %v731 = vpop.permute.xlu0 %730
      %732 = vrot.lane.b32.xlu0 %v179, 124
      %v733 = vpop.permute.xlu0 %732
      %734 = vrot.lane.b32.xlu0 %v180, 124
      %v735 = vpop.permute.xlu0 %734
      %736 = vrot.lane.b32.xlu0 %v181, 124
      %v737 = vpop.permute.xlu0 %736
      %738 = vrot.lane.b32.xlu0 %v182, 124
      %v739 = vpop.permute.xlu0 %738
      %740 = vrot.lane.b32.xlu0 %v183, 124
      %v741 = vpop.permute.xlu0 %740
      %742 = vrot.lane.b32.xlu0 %v184, 124
      %v743 = vpop.permute.xlu0 %742
      %744 = vrot.lane.b32.xlu0 %v185, 124
      %v745 = vpop.permute.xlu0 %744
      %746 = vrot.lane.b32.xlu0 %v186, 124
      %v747 = vpop.permute.xlu0 %746
      %748 = vrot.lane.b32.xlu0 %v187, 124
      %v749 = vpop.permute.xlu0 %748
      %750 = vrot.lane.b32.xlu0 %v188, 124
      %v751 = vpop.permute.xlu0 %750
      %752 = vrot.lane.b32.xlu0 %v189, 124
      %v753 = vpop.permute.xlu0 %752
      %754 = vrot.lane.b32.xlu0 %v190, 124
      %v755 = vpop.permute.xlu0 %754
      %756 = vrot.lane.b32.xlu0 %v191, 124
      %v757 = vpop.permute.xlu0 %756
      %758 = vrot.lane.b32.xlu0 %v192, 124
      %v759 = vpop.permute.xlu0 %758
      %760 = vrot.lane.b32.xlu0 %v193, 124
      %v761 = vpop.permute.xlu0 %760
      %762 = vrot.lane.b32.xlu0 %v194, 124
      %v763 = vpop.permute.xlu0 %762
      %764 = vrot.lane.b32.xlu0 %v195, 124
      %v765 = vpop.permute.xlu0 %764
      %766 = vrot.lane.b32.xlu0 %v196, 124
      %v767 = vpop.permute.xlu0 %766
      %768 = vrot.lane.b32.xlu0 %v197, 124
      %v769 = vpop.permute.xlu0 %768
      %770 = vrot.lane.b32.xlu0 %v198, 124
      %v771 = vpop.permute.xlu0 %770
      %772 = vrot.lane.b32.xlu0 %v199, 124
      %v773 = vpop.permute.xlu0 %772
      %774 = vrot.lane.b32.xlu0 %v200, 124
      %v775 = vpop.permute.xlu0 %774
      %776 = vrot.lane.b32.xlu0 %v201, 124
      %v777 = vpop.permute.xlu0 %776
      %778 = vrot.lane.b32.xlu0 %v202, 124
      %v779 = vpop.permute.xlu0 %778
      %780 = vrot.lane.b32.xlu0 %v203, 124
      %v781 = vpop.permute.xlu0 %780
      %782 = vrot.lane.b32.xlu0 %v204, 124
      %v783 = vpop.permute.xlu0 %782
      %784 = vrot.lane.b32.xlu0 %v205, 124
      %v785 = vpop.permute.xlu0 %784
      %vm786 = vcmp.lt.s32.totalorder %v275, 124
      %v787 = vsel %vm786, %v783, %v785
      %v788 = vsel %vm786, %v781, %v783
      %v789 = vsel %vm786, %v779, %v781
      %v790 = vsel %vm786, %v777, %v779
      %v791 = vsel %vm786, %v775, %v777
      %v792 = vsel %vm786, %v773, %v775
      %v793 = vsel %vm786, %v771, %v773
      %v794 = vsel %vm786, %v769, %v771
      %v795 = vsel %vm786, %v767, %v769
      %v796 = vsel %vm786, %v765, %v767
      %v797 = vsel %vm786, %v763, %v765
      %v798 = vsel %vm786, %v761, %v763
      %v799 = vsel %vm786, %v759, %v761
      %v800 = vsel %vm786, %v757, %v759
      %v801 = vsel %vm786, %v755, %v757
      %v802 = vsel %vm786, %v753, %v755
      %v803 = vsel %vm786, %v751, %v753
      %v804 = vsel %vm786, %v749, %v751
      %v805 = vsel %vm786, %v747, %v749
      %v806 = vsel %vm786, %v745, %v747
      %v807 = vsel %vm786, %v743, %v745
      %v808 = vsel %vm786, %v741, %v743
      %v809 = vsel %vm786, %v739, %v741
      %v810 = vsel %vm786, %v737, %v739
      %v811 = vsel %vm786, %v735, %v737
      %v812 = vsel %vm786, %v733, %v735
      %v813 = vsel %vm786, %v731, %v733
      %v814 = vsel %vm786, %v729, %v731
      %v815 = vsel %vm786, %v727, %v729
      %v816 = vsel %vm786, %v725, %v727
      %v817 = vsel %vm786, %v723, %v725
      %v818 = vsel %vm786, %v721, %v723
      %v819 = vsel %vm786, %v719, %v721
      %820 = vrot.lane.b32.xlu0 %v172, 123
      %v821 = vpop.permute.xlu0 %820
      %822 = vrot.lane.b32.xlu0 %v173, 123
      %v823 = vpop.permute.xlu0 %822
      %824 = vrot.lane.b32.xlu0 %v174, 123
      %v825 = vpop.permute.xlu0 %824
      %826 = vrot.lane.b32.xlu0 %v175, 123
      %v827 = vpop.permute.xlu0 %826
      %828 = vrot.lane.b32.xlu0 %v176, 123
      %v829 = vpop.permute.xlu0 %828
      %830 = vrot.lane.b32.xlu0 %v177, 123
      %v831 = vpop.permute.xlu0 %830
      %832 = vrot.lane.b32.xlu0 %v178, 123
      %v833 = vpop.permute.xlu0 %832
      %834 = vrot.lane.b32.xlu0 %v179, 123
      %v835 = vpop.permute.xlu0 %834
      %836 = vrot.lane.b32.xlu0 %v180, 123
      %v837 = vpop.permute.xlu0 %836
      %838 = vrot.lane.b32.xlu0 %v181, 123
      %v839 = vpop.permute.xlu0 %838
      %840 = vrot.lane.b32.xlu0 %v182, 123
      %v841 = vpop.permute.xlu0 %840
      %842 = vrot.lane.b32.xlu0 %v183, 123
      %v843 = vpop.permute.xlu0 %842
      %844 = vrot.lane.b32.xlu0 %v184, 123
      %v845 = vpop.permute.xlu0 %844
      %846 = vrot.lane.b32.xlu0 %v185, 123
      %v847 = vpop.permute.xlu0 %846
      %848 = vrot.lane.b32.xlu0 %v186, 123
      %v849 = vpop.permute.xlu0 %848
      %850 = vrot.lane.b32.xlu0 %v187, 123
      %v851 = vpop.permute.xlu0 %850
      %852 = vrot.lane.b32.xlu0 %v188, 123
      %v853 = vpop.permute.xlu0 %852
      %854 = vrot.lane.b32.xlu0 %v189, 123
      %v855 = vpop.permute.xlu0 %854
      %856 = vrot.lane.b32.xlu0 %v190, 123
      %v857 = vpop.permute.xlu0 %856
      %858 = vrot.lane.b32.xlu0 %v191, 123
      %v859 = vpop.permute.xlu0 %858
      %860 = vrot.lane.b32.xlu0 %v192, 123
      %v861 = vpop.permute.xlu0 %860
      %862 = vrot.lane.b32.xlu0 %v193, 123
      %v863 = vpop.permute.xlu0 %862
      %864 = vrot.lane.b32.xlu0 %v194, 123
      %v865 = vpop.permute.xlu0 %864
      %866 = vrot.lane.b32.xlu0 %v195, 123
      %v867 = vpop.permute.xlu0 %866
      %868 = vrot.lane.b32.xlu0 %v196, 123
      %v869 = vpop.permute.xlu0 %868
      %870 = vrot.lane.b32.xlu0 %v197, 123
      %v871 = vpop.permute.xlu0 %870
      %872 = vrot.lane.b32.xlu0 %v198, 123
      %v873 = vpop.permute.xlu0 %872
      %874 = vrot.lane.b32.xlu0 %v199, 123
      %v875 = vpop.permute.xlu0 %874
      %876 = vrot.lane.b32.xlu0 %v200, 123
      %v877 = vpop.permute.xlu0 %876
      %878 = vrot.lane.b32.xlu0 %v201, 123
      %v879 = vpop.permute.xlu0 %878
      %880 = vrot.lane.b32.xlu0 %v202, 123
      %v881 = vpop.permute.xlu0 %880
      %882 = vrot.lane.b32.xlu0 %v203, 123
      %v883 = vpop.permute.xlu0 %882
      %884 = vrot.lane.b32.xlu0 %v204, 123
      %v885 = vpop.permute.xlu0 %884
      %886 = vrot.lane.b32.xlu0 %v205, 123
      %v887 = vpop.permute.xlu0 %886
      %vm888 = vcmp.lt.s32.totalorder %v275, 123
      %v889 = vsel %vm888, %v885, %v887
      %v890 = vsel %vm888, %v883, %v885
      %v891 = vsel %vm888, %v881, %v883
      %v892 = vsel %vm888, %v879, %v881
      %v893 = vsel %vm888, %v877, %v879
      %v894 = vsel %vm888, %v875, %v877
      %v895 = vsel %vm888, %v873, %v875
      %v896 = vsel %vm888, %v871, %v873
      %v897 = vsel %vm888, %v869, %v871
      %v898 = vsel %vm888, %v867, %v869
      %v899 = vsel %vm888, %v865, %v867
      %v900 = vsel %vm888, %v863, %v865
      %v901 = vsel %vm888, %v861, %v863
      %v902 = vsel %vm888, %v859, %v861
      %v903 = vsel %vm888, %v857, %v859
      %v904 = vsel %vm888, %v855, %v857
      %v905 = vsel %vm888, %v853, %v855
      %v906 = vsel %vm888, %v851, %v853
      %v907 = vsel %vm888, %v849, %v851
      %v908 = vsel %vm888, %v847, %v849
      %v909 = vsel %vm888, %v845, %v847
      %v910 = vsel %vm888, %v843, %v845
      %v911 = vsel %vm888, %v841, %v843
      %v912 = vsel %vm888, %v839, %v841
      %v913 = vsel %vm888, %v837, %v839
      %v914 = vsel %vm888, %v835, %v837
      %v915 = vsel %vm888, %v833, %v835
      %v916 = vsel %vm888, %v831, %v833
      %v917 = vsel %vm888, %v829, %v831
      %v918 = vsel %vm888, %v827, %v829
      %v919 = vsel %vm888, %v825, %v827
      %v920 = vsel %vm888, %v823, %v825
      %v921 = vsel %vm888, %v821, %v823
      %922 = vrot.lane.b32.xlu0 %v172, 122
      %v923 = vpop.permute.xlu0 %922
      %924 = vrot.lane.b32.xlu0 %v173, 122
      %v925 = vpop.permute.xlu0 %924
      %926 = vrot.lane.b32.xlu0 %v174, 122
      %v927 = vpop.permute.xlu0 %926
      %928 = vrot.lane.b32.xlu0 %v175, 122
      %v929 = vpop.permute.xlu0 %928
      %930 = vrot.lane.b32.xlu0 %v176, 122
      %v931 = vpop.permute.xlu0 %930
      %932 = vrot.lane.b32.xlu0 %v177, 122
      %v933 = vpop.permute.xlu0 %932
      %934 = vrot.lane.b32.xlu0 %v178, 122
      %v935 = vpop.permute.xlu0 %934
      %936 = vrot.lane.b32.xlu0 %v179, 122
      %v937 = vpop.permute.xlu0 %936
      %938 = vrot.lane.b32.xlu0 %v180, 122
      %v939 = vpop.permute.xlu0 %938
      %940 = vrot.lane.b32.xlu0 %v181, 122
      %v941 = vpop.permute.xlu0 %940
      %942 = vrot.lane.b32.xlu0 %v182, 122
      %v943 = vpop.permute.xlu0 %942
      %944 = vrot.lane.b32.xlu0 %v183, 122
      %v945 = vpop.permute.xlu0 %944
      %946 = vrot.lane.b32.xlu0 %v184, 122
      %v947 = vpop.permute.xlu0 %946
      %948 = vrot.lane.b32.xlu0 %v185, 122
      %v949 = vpop.permute.xlu0 %948
      %950 = vrot.lane.b32.xlu0 %v186, 122
      %v951 = vpop.permute.xlu0 %950
      %952 = vrot.lane.b32.xlu0 %v187, 122
      %v953 = vpop.permute.xlu0 %952
      %954 = vrot.lane.b32.xlu0 %v188, 122
      %v955 = vpop.permute.xlu0 %954
      %956 = vrot.lane.b32.xlu0 %v189, 122
      %v957 = vpop.permute.xlu0 %956
      %958 = vrot.lane.b32.xlu0 %v190, 122
      %v959 = vpop.permute.xlu0 %958
      %960 = vrot.lane.b32.xlu0 %v191, 122
      %v961 = vpop.permute.xlu0 %960
      %962 = vrot.lane.b32.xlu0 %v192, 122
      %v963 = vpop.permute.xlu0 %962
      %964 = vrot.lane.b32.xlu0 %v193, 122
      %v965 = vpop.permute.xlu0 %964
      %966 = vrot.lane.b32.xlu0 %v194, 122
      %v967 = vpop.permute.xlu0 %966
      %968 = vrot.lane.b32.xlu0 %v195, 122
      %v969 = vpop.permute.xlu0 %968
      %970 = vrot.lane.b32.xlu0 %v196, 122
      %v971 = vpop.permute.xlu0 %970
      %972 = vrot.lane.b32.xlu0 %v197, 122
      %v973 = vpop.permute.xlu0 %972
      %974 = vrot.lane.b32.xlu0 %v198, 122
      %v975 = vpop.permute.xlu0 %974
      %976 = vrot.lane.b32.xlu0 %v199, 122
      %v977 = vpop.permute.xlu0 %976
      %978 = vrot.lane.b32.xlu0 %v200, 122
      %v979 = vpop.permute.xlu0 %978
      %980 = vrot.lane.b32.xlu0 %v201, 122
      %v981 = vpop.permute.xlu0 %980
      %982 = vrot.lane.b32.xlu0 %v202, 122
      %v983 = vpop.permute.xlu0 %982
      %984 = vrot.lane.b32.xlu0 %v203, 122
      %v985 = vpop.permute.xlu0 %984
      %986 = vrot.lane.b32.xlu0 %v204, 122
      %v987 = vpop.permute.xlu0 %986
      %988 = vrot.lane.b32.xlu0 %v205, 122
      %v989 = vpop.permute.xlu0 %988
      %vm990 = vcmp.lt.s32.totalorder %v275, 122
      %v991 = vsel %vm990, %v987, %v989
      %v992 = vsel %vm990, %v985, %v987
      %v993 = vsel %vm990, %v983, %v985
      %v994 = vsel %vm990, %v981, %v983
      %v995 = vsel %vm990, %v979, %v981
      %v996 = vsel %vm990, %v977, %v979
      %v997 = vsel %vm990, %v975, %v977
      %v998 = vsel %vm990, %v973, %v975
      %v999 = vsel %vm990, %v971, %v973
      %v1000 = vsel %vm990, %v969, %v971
      %v1001 = vsel %vm990, %v967, %v969
      %v1002 = vsel %vm990, %v965, %v967
      %v1003 = vsel %vm990, %v963, %v965
      %v1004 = vsel %vm990, %v961, %v963
      %v1005 = vsel %vm990, %v959, %v961
      %v1006 = vsel %vm990, %v957, %v959
      %v1007 = vsel %vm990, %v955, %v957
      %v1008 = vsel %vm990, %v953, %v955
      %v1009 = vsel %vm990, %v951, %v953
      %v1010 = vsel %vm990, %v949, %v951
      %v1011 = vsel %vm990, %v947, %v949
      %v1012 = vsel %vm990, %v945, %v947
      %v1013 = vsel %vm990, %v943, %v945
      %v1014 = vsel %vm990, %v941, %v943
      %v1015 = vsel %vm990, %v939, %v941
      %v1016 = vsel %vm990, %v937, %v939
      %v1017 = vsel %vm990, %v935, %v937
      %v1018 = vsel %vm990, %v933, %v935
      %v1019 = vsel %vm990, %v931, %v933
      %v1020 = vsel %vm990, %v929, %v931
      %v1021 = vsel %vm990, %v927, %v929
      %v1022 = vsel %vm990, %v925, %v927
      %v1023 = vsel %vm990, %v923, %v925
      %v1024 = vld [vmem:[%s1] sm:$0x7]
      %v1025 = vld [vmem:[%s2] sm:$0x7]
      %1027 = vset.pattern.permute.xlu0 0
      %1028 = vperm.xlu0 %1027, %v1025
      %v1029 = vpop.permute.xlu0 %1028
      %vm1031 = vcmask 588800
      %v1033 = vsel %vm1031, %v1024, 0
      %1035 = vmatpush.msra.mxu0 0.0
      %1036 = vmatpush.msra.mxu0 0.0
      %1037 = vmatpush.msra.mxu0 0.0
      %1038 = vmatpush.msra.mxu0 0.0
      %1039 = vmatpush.msra.mxu0 0.0
      %1040 = vmatpush.msra.mxu0 0.0
      %1041 = vmatpush.msra.mxu0 0.0
      %1042 = vmatpush.msra.mxu0 %v1023
      %1043 = vmatpush.msra.mxu0 %v921
      %1044 = vmatpush.msra.mxu0 %v819
      %1045 = vmatpush.msra.mxu0 %v717
      %1046 = vmatpush.msra.mxu0 %v615
      %1047 = vmatpush.msra.mxu0 %v513
      %1048 = vmatpush.msra.mxu0 %v411
      %1049 = vmatpush.msra.mxu0 %v309
      %1050 = vmatpush.msra.mxu0 %v171
      %1051 = vmatmul.f32.gmra.mxu0 %v1033
      %v1052 = vpop.f32.mrf.mxu0
      %v1053 = vadd.f32 %v1029, %v1052
      %1054 = vdwg.mxu0
      %1055 = vmatpush.msra.mxu0 0.0
      %1056 = vmatpush.msra.mxu0 0.0
      %1057 = vmatpush.msra.mxu0 0.0
      %1058 = vmatpush.msra.mxu0 0.0
      %1059 = vmatpush.msra.mxu0 0.0
      %1060 = vmatpush.msra.mxu0 0.0
      %1061 = vmatpush.msra.mxu0 0.0
      %1062 = vmatpush.msra.mxu0 %v1022
      %1063 = vmatpush.msra.mxu0 %v920
      %1064 = vmatpush.msra.mxu0 %v818
      %1065 = vmatpush.msra.mxu0 %v716
      %1066 = vmatpush.msra.mxu0 %v614
      %1067 = vmatpush.msra.mxu0 %v512
      %1068 = vmatpush.msra.mxu0 %v410
      %1069 = vmatpush.msra.mxu0 %v308
      %1070 = vmatpush.msra.mxu0 %v172
      %1071 = vmatmul.f32.gmra.mxu0 %v1033
      %v1072 = vpop.f32.mrf.mxu0
      %v1073 = vadd.f32 %v1029, %v1072
      %1074 = vdwg.mxu0
      %1075 = vmatpush.msra.mxu0 0.0
      %1076 = vmatpush.msra.mxu0 0.0
      %1077 = vmatpush.msra.mxu0 0.0
      %1078 = vmatpush.msra.mxu0 0.0
      %1079 = vmatpush.msra.mxu0 0.0
      %1080 = vmatpush.msra.mxu0 0.0
      %1081 = vmatpush.msra.mxu0 0.0
      %1082 = vmatpush.msra.mxu0 %v1021
      %1083 = vmatpush.msra.mxu0 %v919
      %1084 = vmatpush.msra.mxu0 %v817
      %1085 = vmatpush.msra.mxu0 %v715
      %1086 = vmatpush.msra.mxu0 %v613
      %1087 = vmatpush.msra.mxu0 %v511
      %1088 = vmatpush.msra.mxu0 %v409
      %1089 = vmatpush.msra.mxu0 %v307
      %1090 = vmatpush.msra.mxu0 %v173
      %1091 = vmatmul.f32.gmra.mxu0 %v1033
      %v1092 = vpop.f32.mrf.mxu0
      %v1093 = vadd.f32 %v1029, %v1092
      %1094 = vdwg.mxu0
      %1095 = vmatpush.msra.mxu0 0.0
      %1096 = vmatpush.msra.mxu0 0.0
      %1097 = vmatpush.msra.mxu0 0.0
      %1098 = vmatpush.msra.mxu0 0.0
      %1099 = vmatpush.msra.mxu0 0.0
      %1100 = vmatpush.msra.mxu0 0.0
      %1101 = vmatpush.msra.mxu0 0.0
      %1102 = vmatpush.msra.mxu0 %v1020
      %1103 = vmatpush.msra.mxu0 %v918
      %1104 = vmatpush.msra.mxu0 %v816
      %1105 = vmatpush.msra.mxu0 %v714
      %1106 = vmatpush.msra.mxu0 %v612
      %1107 = vmatpush.msra.mxu0 %v510
      %1108 = vmatpush.msra.mxu0 %v408
      %1109 = vmatpush.msra.mxu0 %v306
      %1110 = vmatpush.msra.mxu0 %v174
      %1111 = vmatmul.f32.gmra.mxu0 %v1033
      %v1112 = vpop.f32.mrf.mxu0
      %v1113 = vadd.f32 %v1029, %v1112
      %1114 = vdwg.mxu0
      %1115 = vmatpush.msra.mxu0 0.0
      %1116 = vmatpush.msra.mxu0 0.0
      %1117 = vmatpush.msra.mxu0 0.0
      %1118 = vmatpush.msra.mxu0 0.0
      %1119 = vmatpush.msra.mxu0 0.0
      %1120 = vmatpush.msra.mxu0 0.0
      %1121 = vmatpush.msra.mxu0 0.0
      %1122 = vmatpush.msra.mxu0 %v1019
      %1123 = vmatpush.msra.mxu0 %v917
      %1124 = vmatpush.msra.mxu0 %v815
      %1125 = vmatpush.msra.mxu0 %v713
      %1126 = vmatpush.msra.mxu0 %v611
      %1127 = vmatpush.msra.mxu0 %v509
      %1128 = vmatpush.msra.mxu0 %v407
      %1129 = vmatpush.msra.mxu0 %v305
      %1130 = vmatpush.msra.mxu0 %v175
      %1131 = vmatmul.f32.gmra.mxu0 %v1033
      %v1132 = vpop.f32.mrf.mxu0
      %v1133 = vadd.f32 %v1029, %v1132
      %1134 = vdwg.mxu0
      %1135 = vmatpush.msra.mxu0 0.0
      %1136 = vmatpush.msra.mxu0 0.0
      %1137 = vmatpush.msra.mxu0 0.0
      %1138 = vmatpush.msra.mxu0 0.0
      %1139 = vmatpush.msra.mxu0 0.0
      %1140 = vmatpush.msra.mxu0 0.0
      %1141 = vmatpush.msra.mxu0 0.0
      %1142 = vmatpush.msra.mxu0 %v1018
      %1143 = vmatpush.msra.mxu0 %v916
      %1144 = vmatpush.msra.mxu0 %v814
      %1145 = vmatpush.msra.mxu0 %v712
      %1146 = vmatpush.msra.mxu0 %v610
      %1147 = vmatpush.msra.mxu0 %v508
      %1148 = vmatpush.msra.mxu0 %v406
      %1149 = vmatpush.msra.mxu0 %v304
      %1150 = vmatpush.msra.mxu0 %v176
      %1151 = vmatmul.f32.gmra.mxu0 %v1033
      %v1152 = vpop.f32.mrf.mxu0
      %v1153 = vadd.f32 %v1029, %v1152
      %1154 = vdwg.mxu0
      %1155 = vmatpush.msra.mxu0 0.0
      %1156 = vmatpush.msra.mxu0 0.0
      %1157 = vmatpush.msra.mxu0 0.0
      %1158 = vmatpush.msra.mxu0 0.0
      %1159 = vmatpush.msra.mxu0 0.0
      %1160 = vmatpush.msra.mxu0 0.0
      %1161 = vmatpush.msra.mxu0 0.0
      %1162 = vmatpush.msra.mxu0 %v1017
      %1163 = vmatpush.msra.mxu0 %v915
      %1164 = vmatpush.msra.mxu0 %v813
      %1165 = vmatpush.msra.mxu0 %v711
      %1166 = vmatpush.msra.mxu0 %v609
      %1167 = vmatpush.msra.mxu0 %v507
      %1168 = vmatpush.msra.mxu0 %v405
      %1169 = vmatpush.msra.mxu0 %v303
      %1170 = vmatpush.msra.mxu0 %v177
      %1171 = vmatmul.f32.gmra.mxu0 %v1033
      %v1172 = vpop.f32.mrf.mxu0
      %v1173 = vadd.f32 %v1029, %v1172
      %1174 = vdwg.mxu0
      %1175 = vmatpush.msra.mxu0 0.0
      %1176 = vmatpush.msra.mxu0 0.0
      %1177 = vmatpush.msra.mxu0 0.0
      %1178 = vmatpush.msra.mxu0 0.0
      %1179 = vmatpush.msra.mxu0 0.0
      %1180 = vmatpush.msra.mxu0 0.0
      %1181 = vmatpush.msra.mxu0 0.0
      %1182 = vmatpush.msra.mxu0 %v1016
      %1183 = vmatpush.msra.mxu0 %v914
      %1184 = vmatpush.msra.mxu0 %v812
      %1185 = vmatpush.msra.mxu0 %v710
      %1186 = vmatpush.msra.mxu0 %v608
      %1187 = vmatpush.msra.mxu0 %v506
      %1188 = vmatpush.msra.mxu0 %v404
      %1189 = vmatpush.msra.mxu0 %v302
      %1190 = vmatpush.msra.mxu0 %v178
      %1191 = vmatmul.f32.gmra.mxu0 %v1033
      %v1192 = vpop.f32.mrf.mxu0
      %v1193 = vadd.f32 %v1029, %v1192
      %1194 = vdwg.mxu0
      %1195 = vmatpush.msra.mxu0 0.0
      %1196 = vmatpush.msra.mxu0 0.0
      %1197 = vmatpush.msra.mxu0 0.0
      %1198 = vmatpush.msra.mxu0 0.0
      %1199 = vmatpush.msra.mxu0 0.0
      %1200 = vmatpush.msra.mxu0 0.0
      %1201 = vmatpush.msra.mxu0 0.0
      %1202 = vmatpush.msra.mxu0 %v1015
      %1203 = vmatpush.msra.mxu0 %v913
      %1204 = vmatpush.msra.mxu0 %v811
      %1205 = vmatpush.msra.mxu0 %v709
      %1206 = vmatpush.msra.mxu0 %v607
      %1207 = vmatpush.msra.mxu0 %v505
      %1208 = vmatpush.msra.mxu0 %v403
      %1209 = vmatpush.msra.mxu0 %v301
      %1210 = vmatpush.msra.mxu0 %v179
      %1211 = vmatmul.f32.gmra.mxu0 %v1033
      %v1212 = vpop.f32.mrf.mxu0
      %v1213 = vadd.f32 %v1029, %v1212
      %1214 = vdwg.mxu0
      %1215 = vmatpush.msra.mxu0 0.0
      %1216 = vmatpush.msra.mxu0 0.0
      %1217 = vmatpush.msra.mxu0 0.0
      %1218 = vmatpush.msra.mxu0 0.0
      %1219 = vmatpush.msra.mxu0 0.0
      %1220 = vmatpush.msra.mxu0 0.0
      %1221 = vmatpush.msra.mxu0 0.0
      %1222 = vmatpush.msra.mxu0 %v1014
      %1223 = vmatpush.msra.mxu0 %v912
      %1224 = vmatpush.msra.mxu0 %v810
      %1225 = vmatpush.msra.mxu0 %v708
      %1226 = vmatpush.msra.mxu0 %v606
      %1227 = vmatpush.msra.mxu0 %v504
      %1228 = vmatpush.msra.mxu0 %v402
      %1229 = vmatpush.msra.mxu0 %v300
      %1230 = vmatpush.msra.mxu0 %v180
      %1231 = vmatmul.f32.gmra.mxu0 %v1033
      %v1232 = vpop.f32.mrf.mxu0
      %v1233 = vadd.f32 %v1029, %v1232
      %1234 = vdwg.mxu0
      %1235 = vmatpush.msra.mxu0 0.0
      %1236 = vmatpush.msra.mxu0 0.0
      %1237 = vmatpush.msra.mxu0 0.0
      %1238 = vmatpush.msra.mxu0 0.0
      %1239 = vmatpush.msra.mxu0 0.0
      %1240 = vmatpush.msra.mxu0 0.0
      %1241 = vmatpush.msra.mxu0 0.0
      %1242 = vmatpush.msra.mxu0 %v1013
      %1243 = vmatpush.msra.mxu0 %v911
      %1244 = vmatpush.msra.mxu0 %v809
      %1245 = vmatpush.msra.mxu0 %v707
      %1246 = vmatpush.msra.mxu0 %v605
      %1247 = vmatpush.msra.mxu0 %v503
      %1248 = vmatpush.msra.mxu0 %v401
      %1249 = vmatpush.msra.mxu0 %v299
      %1250 = vmatpush.msra.mxu0 %v181
      %1251 = vmatmul.f32.gmra.mxu0 %v1033
      %v1252 = vpop.f32.mrf.mxu0
      %v1253 = vadd.f32 %v1029, %v1252
      %1254 = vdwg.mxu0
      %1255 = vmatpush.msra.mxu0 0.0
      %1256 = vmatpush.msra.mxu0 0.0
      %1257 = vmatpush.msra.mxu0 0.0
      %1258 = vmatpush.msra.mxu0 0.0
      %1259 = vmatpush.msra.mxu0 0.0
      %1260 = vmatpush.msra.mxu0 0.0
      %1261 = vmatpush.msra.mxu0 0.0
      %1262 = vmatpush.msra.mxu0 %v1012
      %1263 = vmatpush.msra.mxu0 %v910
      %1264 = vmatpush.msra.mxu0 %v808
      %1265 = vmatpush.msra.mxu0 %v706
      %1266 = vmatpush.msra.mxu0 %v604
      %1267 = vmatpush.msra.mxu0 %v502
      %1268 = vmatpush.msra.mxu0 %v400
      %1269 = vmatpush.msra.mxu0 %v298
      %1270 = vmatpush.msra.mxu0 %v182
      %1271 = vmatmul.f32.gmra.mxu0 %v1033
      %v1272 = vpop.f32.mrf.mxu0
      %v1273 = vadd.f32 %v1029, %v1272
      %1274 = vdwg.mxu0
      %1275 = vmatpush.msra.mxu0 0.0
      %1276 = vmatpush.msra.mxu0 0.0
      %1277 = vmatpush.msra.mxu0 0.0
      %1278 = vmatpush.msra.mxu0 0.0
      %1279 = vmatpush.msra.mxu0 0.0
      %1280 = vmatpush.msra.mxu0 0.0
      %1281 = vmatpush.msra.mxu0 0.0
      %1282 = vmatpush.msra.mxu0 %v1011
      %1283 = vmatpush.msra.mxu0 %v909
      %1284 = vmatpush.msra.mxu0 %v807
      %1285 = vmatpush.msra.mxu0 %v705
      %1286 = vmatpush.msra.mxu0 %v603
      %1287 = vmatpush.msra.mxu0 %v501
      %1288 = vmatpush.msra.mxu0 %v399
      %1289 = vmatpush.msra.mxu0 %v297
      %1290 = vmatpush.msra.mxu0 %v183
      %1291 = vmatmul.f32.gmra.mxu0 %v1033
      %v1292 = vpop.f32.mrf.mxu0
      %v1293 = vadd.f32 %v1029, %v1292
      %1294 = vdwg.mxu0
      %1295 = vmatpush.msra.mxu0 0.0
      %1296 = vmatpush.msra.mxu0 0.0
      %1297 = vmatpush.msra.mxu0 0.0
      %1298 = vmatpush.msra.mxu0 0.0
      %1299 = vmatpush.msra.mxu0 0.0
      %1300 = vmatpush.msra.mxu0 0.0
      %1301 = vmatpush.msra.mxu0 0.0
      %1302 = vmatpush.msra.mxu0 %v1010
      %1303 = vmatpush.msra.mxu0 %v908
      %1304 = vmatpush.msra.mxu0 %v806
      %1305 = vmatpush.msra.mxu0 %v704
      %1306 = vmatpush.msra.mxu0 %v602
      %1307 = vmatpush.msra.mxu0 %v500
      %1308 = vmatpush.msra.mxu0 %v398
      %1309 = vmatpush.msra.mxu0 %v296
      %1310 = vmatpush.msra.mxu0 %v184
      %1311 = vmatmul.f32.gmra.mxu0 %v1033
      %v1312 = vpop.f32.mrf.mxu0
      %v1313 = vadd.f32 %v1029, %v1312
      %1314 = vdwg.mxu0
      %1315 = vmatpush.msra.mxu0 0.0
      %1316 = vmatpush.msra.mxu0 0.0
      %1317 = vmatpush.msra.mxu0 0.0
      %1318 = vmatpush.msra.mxu0 0.0
      %1319 = vmatpush.msra.mxu0 0.0
      %1320 = vmatpush.msra.mxu0 0.0
      %1321 = vmatpush.msra.mxu0 0.0
      %1322 = vmatpush.msra.mxu0 %v1009
      %1323 = vmatpush.msra.mxu0 %v907
      %1324 = vmatpush.msra.mxu0 %v805
      %1325 = vmatpush.msra.mxu0 %v703
      %1326 = vmatpush.msra.mxu0 %v601
      %1327 = vmatpush.msra.mxu0 %v499
      %1328 = vmatpush.msra.mxu0 %v397
      %1329 = vmatpush.msra.mxu0 %v295
      %1330 = vmatpush.msra.mxu0 %v185
      %1331 = vmatmul.f32.gmra.mxu0 %v1033
      %v1332 = vpop.f32.mrf.mxu0
      %v1333 = vadd.f32 %v1029, %v1332
      %1334 = vdwg.mxu0
      %1335 = vmatpush.msra.mxu0 0.0
      %1336 = vmatpush.msra.mxu0 0.0
      %1337 = vmatpush.msra.mxu0 0.0
      %1338 = vmatpush.msra.mxu0 0.0
      %1339 = vmatpush.msra.mxu0 0.0
      %1340 = vmatpush.msra.mxu0 0.0
      %1341 = vmatpush.msra.mxu0 0.0
      %1342 = vmatpush.msra.mxu0 %v1008
      %1343 = vmatpush.msra.mxu0 %v906
      %1344 = vmatpush.msra.mxu0 %v804
      %1345 = vmatpush.msra.mxu0 %v702
      %1346 = vmatpush.msra.mxu0 %v600
      %1347 = vmatpush.msra.mxu0 %v498
      %1348 = vmatpush.msra.mxu0 %v396
      %1349 = vmatpush.msra.mxu0 %v294
      %1350 = vmatpush.msra.mxu0 %v186
      %1351 = vmatmul.f32.gmra.mxu0 %v1033
      %v1352 = vpop.f32.mrf.mxu0
      %v1353 = vadd.f32 %v1029, %v1352
      %1354 = vdwg.mxu0
      %1355 = vmatpush.msra.mxu0 0.0
      %1356 = vmatpush.msra.mxu0 0.0
      %1357 = vmatpush.msra.mxu0 0.0
      %1358 = vmatpush.msra.mxu0 0.0
      %1359 = vmatpush.msra.mxu0 0.0
      %1360 = vmatpush.msra.mxu0 0.0
      %1361 = vmatpush.msra.mxu0 0.0
      %1362 = vmatpush.msra.mxu0 %v1007
      %1363 = vmatpush.msra.mxu0 %v905
      %1364 = vmatpush.msra.mxu0 %v803
      %1365 = vmatpush.msra.mxu0 %v701
      %1366 = vmatpush.msra.mxu0 %v599
      %1367 = vmatpush.msra.mxu0 %v497
      %1368 = vmatpush.msra.mxu0 %v395
      %1369 = vmatpush.msra.mxu0 %v293
      %1370 = vmatpush.msra.mxu0 %v187
      %1371 = vmatmul.f32.gmra.mxu0 %v1033
      %v1372 = vpop.f32.mrf.mxu0
      %v1373 = vadd.f32 %v1029, %v1372
      %1374 = vdwg.mxu0
      %1375 = vmatpush.msra.mxu0 0.0
      %1376 = vmatpush.msra.mxu0 0.0
      %1377 = vmatpush.msra.mxu0 0.0
      %1378 = vmatpush.msra.mxu0 0.0
      %1379 = vmatpush.msra.mxu0 0.0
      %1380 = vmatpush.msra.mxu0 0.0
      %1381 = vmatpush.msra.mxu0 0.0
      %1382 = vmatpush.msra.mxu0 %v1006
      %1383 = vmatpush.msra.mxu0 %v904
      %1384 = vmatpush.msra.mxu0 %v802
      %1385 = vmatpush.msra.mxu0 %v700
      %1386 = vmatpush.msra.mxu0 %v598
      %1387 = vmatpush.msra.mxu0 %v496
      %1388 = vmatpush.msra.mxu0 %v394
      %1389 = vmatpush.msra.mxu0 %v292
      %1390 = vmatpush.msra.mxu0 %v188
      %1391 = vmatmul.f32.gmra.mxu0 %v1033
      %v1392 = vpop.f32.mrf.mxu0
      %v1393 = vadd.f32 %v1029, %v1392
      %1394 = vdwg.mxu0
      %1395 = vmatpush.msra.mxu0 0.0
      %1396 = vmatpush.msra.mxu0 0.0
      %1397 = vmatpush.msra.mxu0 0.0
      %1398 = vmatpush.msra.mxu0 0.0
      %1399 = vmatpush.msra.mxu0 0.0
      %1400 = vmatpush.msra.mxu0 0.0
      %1401 = vmatpush.msra.mxu0 0.0
      %1402 = vmatpush.msra.mxu0 %v1005
      %1403 = vmatpush.msra.mxu0 %v903
      %1404 = vmatpush.msra.mxu0 %v801
      %1405 = vmatpush.msra.mxu0 %v699
      %1406 = vmatpush.msra.mxu0 %v597
      %1407 = vmatpush.msra.mxu0 %v495
      %1408 = vmatpush.msra.mxu0 %v393
      %1409 = vmatpush.msra.mxu0 %v291
      %1410 = vmatpush.msra.mxu0 %v189
      %1411 = vmatmul.f32.gmra.mxu0 %v1033
      %v1412 = vpop.f32.mrf.mxu0
      %v1413 = vadd.f32 %v1029, %v1412
      %1414 = vdwg.mxu0
      %1415 = vmatpush.msra.mxu0 0.0
      %1416 = vmatpush.msra.mxu0 0.0
      %1417 = vmatpush.msra.mxu0 0.0
      %1418 = vmatpush.msra.mxu0 0.0
      %1419 = vmatpush.msra.mxu0 0.0
      %1420 = vmatpush.msra.mxu0 0.0
      %1421 = vmatpush.msra.mxu0 0.0
      %1422 = vmatpush.msra.mxu0 %v1004
      %1423 = vmatpush.msra.mxu0 %v902
      %1424 = vmatpush.msra.mxu0 %v800
      %1425 = vmatpush.msra.mxu0 %v698
      %1426 = vmatpush.msra.mxu0 %v596
      %1427 = vmatpush.msra.mxu0 %v494
      %1428 = vmatpush.msra.mxu0 %v392
      %1429 = vmatpush.msra.mxu0 %v290
      %1430 = vmatpush.msra.mxu0 %v190
      %1431 = vmatmul.f32.gmra.mxu0 %v1033
      %v1432 = vpop.f32.mrf.mxu0
      %v1433 = vadd.f32 %v1029, %v1432
      %1434 = vdwg.mxu0
      %1435 = vmatpush.msra.mxu0 0.0
      %1436 = vmatpush.msra.mxu0 0.0
      %1437 = vmatpush.msra.mxu0 0.0
      %1438 = vmatpush.msra.mxu0 0.0
      %1439 = vmatpush.msra.mxu0 0.0
      %1440 = vmatpush.msra.mxu0 0.0
      %1441 = vmatpush.msra.mxu0 0.0
      %1442 = vmatpush.msra.mxu0 %v1003
      %1443 = vmatpush.msra.mxu0 %v901
      %1444 = vmatpush.msra.mxu0 %v799
      %1445 = vmatpush.msra.mxu0 %v697
      %1446 = vmatpush.msra.mxu0 %v595
      %1447 = vmatpush.msra.mxu0 %v493
      %1448 = vmatpush.msra.mxu0 %v391
      %1449 = vmatpush.msra.mxu0 %v289
      %1450 = vmatpush.msra.mxu0 %v191
      %1451 = vmatmul.f32.gmra.mxu0 %v1033
      %v1452 = vpop.f32.mrf.mxu0
      %v1453 = vadd.f32 %v1029, %v1452
      %1454 = vdwg.mxu0
      %1455 = vmatpush.msra.mxu0 0.0
      %1456 = vmatpush.msra.mxu0 0.0
      %1457 = vmatpush.msra.mxu0 0.0
      %1458 = vmatpush.msra.mxu0 0.0
      %1459 = vmatpush.msra.mxu0 0.0
      %1460 = vmatpush.msra.mxu0 0.0
      %1461 = vmatpush.msra.mxu0 0.0
      %1462 = vmatpush.msra.mxu0 %v1002
      %1463 = vmatpush.msra.mxu0 %v900
      %1464 = vmatpush.msra.mxu0 %v798
      %1465 = vmatpush.msra.mxu0 %v696
      %1466 = vmatpush.msra.mxu0 %v594
      %1467 = vmatpush.msra.mxu0 %v492
      %1468 = vmatpush.msra.mxu0 %v390
      %1469 = vmatpush.msra.mxu0 %v288
      %1470 = vmatpush.msra.mxu0 %v192
      %1471 = vmatmul.f32.gmra.mxu0 %v1033
      %v1472 = vpop.f32.mrf.mxu0
      %v1473 = vadd.f32 %v1029, %v1472
      %1474 = vdwg.mxu0
      %1475 = vmatpush.msra.mxu0 0.0
      %1476 = vmatpush.msra.mxu0 0.0
      %1477 = vmatpush.msra.mxu0 0.0
      %1478 = vmatpush.msra.mxu0 0.0
      %1479 = vmatpush.msra.mxu0 0.0
      %1480 = vmatpush.msra.mxu0 0.0
      %1481 = vmatpush.msra.mxu0 0.0
      %1482 = vmatpush.msra.mxu0 %v1001
      %1483 = vmatpush.msra.mxu0 %v899
      %1484 = vmatpush.msra.mxu0 %v797
      %1485 = vmatpush.msra.mxu0 %v695
      %1486 = vmatpush.msra.mxu0 %v593
      %1487 = vmatpush.msra.mxu0 %v491
      %1488 = vmatpush.msra.mxu0 %v389
      %1489 = vmatpush.msra.mxu0 %v287
      %1490 = vmatpush.msra.mxu0 %v193
      %1491 = vmatmul.f32.gmra.mxu0 %v1033
      %v1492 = vpop.f32.mrf.mxu0
      %v1493 = vadd.f32 %v1029, %v1492
      %1494 = vdwg.mxu0
      %1495 = vmatpush.msra.mxu0 0.0
      %1496 = vmatpush.msra.mxu0 0.0
      %1497 = vmatpush.msra.mxu0 0.0
      %1498 = vmatpush.msra.mxu0 0.0
      %1499 = vmatpush.msra.mxu0 0.0
      %1500 = vmatpush.msra.mxu0 0.0
      %1501 = vmatpush.msra.mxu0 0.0
      %1502 = vmatpush.msra.mxu0 %v1000
      %1503 = vmatpush.msra.mxu0 %v898
      %1504 = vmatpush.msra.mxu0 %v796
      %1505 = vmatpush.msra.mxu0 %v694
      %1506 = vmatpush.msra.mxu0 %v592
      %1507 = vmatpush.msra.mxu0 %v490
      %1508 = vmatpush.msra.mxu0 %v388
      %1509 = vmatpush.msra.mxu0 %v286
      %1510 = vmatpush.msra.mxu0 %v194
      %1511 = vmatmul.f32.gmra.mxu0 %v1033
      %v1512 = vpop.f32.mrf.mxu0
      %v1513 = vadd.f32 %v1029, %v1512
      %1514 = vdwg.mxu0
      %1515 = vmatpush.msra.mxu0 0.0
      %1516 = vmatpush.msra.mxu0 0.0
      %1517 = vmatpush.msra.mxu0 0.0
      %1518 = vmatpush.msra.mxu0 0.0
      %1519 = vmatpush.msra.mxu0 0.0
      %1520 = vmatpush.msra.mxu0 0.0
      %1521 = vmatpush.msra.mxu0 0.0
      %1522 = vmatpush.msra.mxu0 %v999
      %1523 = vmatpush.msra.mxu0 %v897
      %1524 = vmatpush.msra.mxu0 %v795
      %1525 = vmatpush.msra.mxu0 %v693
      %1526 = vmatpush.msra.mxu0 %v591
      %1527 = vmatpush.msra.mxu0 %v489
      %1528 = vmatpush.msra.mxu0 %v387
      %1529 = vmatpush.msra.mxu0 %v285
      %1530 = vmatpush.msra.mxu0 %v195
      %1531 = vmatmul.f32.gmra.mxu0 %v1033
      %v1532 = vpop.f32.mrf.mxu0
      %v1533 = vadd.f32 %v1029, %v1532
      %1534 = vdwg.mxu0
      %1535 = vmatpush.msra.mxu0 0.0
      %1536 = vmatpush.msra.mxu0 0.0
      %1537 = vmatpush.msra.mxu0 0.0
      %1538 = vmatpush.msra.mxu0 0.0
      %1539 = vmatpush.msra.mxu0 0.0
      %1540 = vmatpush.msra.mxu0 0.0
      %1541 = vmatpush.msra.mxu0 0.0
      %1542 = vmatpush.msra.mxu0 %v998
      %1543 = vmatpush.msra.mxu0 %v896
      %1544 = vmatpush.msra.mxu0 %v794
      %1545 = vmatpush.msra.mxu0 %v692
      %1546 = vmatpush.msra.mxu0 %v590
      %1547 = vmatpush.msra.mxu0 %v488
      %1548 = vmatpush.msra.mxu0 %v386
      %1549 = vmatpush.msra.mxu0 %v284
      %1550 = vmatpush.msra.mxu0 %v196
      %1551 = vmatmul.f32.gmra.mxu0 %v1033
      %v1552 = vpop.f32.mrf.mxu0
      %v1553 = vadd.f32 %v1029, %v1552
      %1554 = vdwg.mxu0
      %1555 = vmatpush.msra.mxu0 0.0
      %1556 = vmatpush.msra.mxu0 0.0
      %1557 = vmatpush.msra.mxu0 0.0
      %1558 = vmatpush.msra.mxu0 0.0
      %1559 = vmatpush.msra.mxu0 0.0
      %1560 = vmatpush.msra.mxu0 0.0
      %1561 = vmatpush.msra.mxu0 0.0
      %1562 = vmatpush.msra.mxu0 %v997
      %1563 = vmatpush.msra.mxu0 %v895
      %1564 = vmatpush.msra.mxu0 %v793
      %1565 = vmatpush.msra.mxu0 %v691
      %1566 = vmatpush.msra.mxu0 %v589
      %1567 = vmatpush.msra.mxu0 %v487
      %1568 = vmatpush.msra.mxu0 %v385
      %1569 = vmatpush.msra.mxu0 %v283
      %1570 = vmatpush.msra.mxu0 %v197
      %1571 = vmatmul.f32.gmra.mxu0 %v1033
      %v1572 = vpop.f32.mrf.mxu0
      %v1573 = vadd.f32 %v1029, %v1572
      %1574 = vdwg.mxu0
      %1575 = vmatpush.msra.mxu0 0.0
      %1576 = vmatpush.msra.mxu0 0.0
      %1577 = vmatpush.msra.mxu0 0.0
      %1578 = vmatpush.msra.mxu0 0.0
      %1579 = vmatpush.msra.mxu0 0.0
      %1580 = vmatpush.msra.mxu0 0.0
      %1581 = vmatpush.msra.mxu0 0.0
      %1582 = vmatpush.msra.mxu0 %v996
      %1583 = vmatpush.msra.mxu0 %v894
      %1584 = vmatpush.msra.mxu0 %v792
      %1585 = vmatpush.msra.mxu0 %v690
      %1586 = vmatpush.msra.mxu0 %v588
      %1587 = vmatpush.msra.mxu0 %v486
      %1588 = vmatpush.msra.mxu0 %v384
      %1589 = vmatpush.msra.mxu0 %v282
      %1590 = vmatpush.msra.mxu0 %v198
      %1591 = vmatmul.f32.gmra.mxu0 %v1033
      %v1592 = vpop.f32.mrf.mxu0
      %v1593 = vadd.f32 %v1029, %v1592
      %1594 = vdwg.mxu0
      %1595 = vmatpush.msra.mxu0 0.0
      %1596 = vmatpush.msra.mxu0 0.0
      %1597 = vmatpush.msra.mxu0 0.0
      %1598 = vmatpush.msra.mxu0 0.0
      %1599 = vmatpush.msra.mxu0 0.0
      %1600 = vmatpush.msra.mxu0 0.0
      %1601 = vmatpush.msra.mxu0 0.0
      %1602 = vmatpush.msra.mxu0 %v995
      %1603 = vmatpush.msra.mxu0 %v893
      %1604 = vmatpush.msra.mxu0 %v791
      %1605 = vmatpush.msra.mxu0 %v689
      %1606 = vmatpush.msra.mxu0 %v587
      %1607 = vmatpush.msra.mxu0 %v485
      %1608 = vmatpush.msra.mxu0 %v383
      %1609 = vmatpush.msra.mxu0 %v281
      %1610 = vmatpush.msra.mxu0 %v199
      %1611 = vmatmul.f32.gmra.mxu0 %v1033
      %v1612 = vpop.f32.mrf.mxu0
      %v1613 = vadd.f32 %v1029, %v1612
      %1614 = vdwg.mxu0
      %1615 = vmatpush.msra.mxu0 0.0
      %1616 = vmatpush.msra.mxu0 0.0
      %1617 = vmatpush.msra.mxu0 0.0
      %1618 = vmatpush.msra.mxu0 0.0
      %1619 = vmatpush.msra.mxu0 0.0
      %1620 = vmatpush.msra.mxu0 0.0
      %1621 = vmatpush.msra.mxu0 0.0
      %1622 = vmatpush.msra.mxu0 %v994
      %1623 = vmatpush.msra.mxu0 %v892
      %1624 = vmatpush.msra.mxu0 %v790
      %1625 = vmatpush.msra.mxu0 %v688
      %1626 = vmatpush.msra.mxu0 %v586
      %1627 = vmatpush.msra.mxu0 %v484
      %1628 = vmatpush.msra.mxu0 %v382
      %1629 = vmatpush.msra.mxu0 %v280
      %1630 = vmatpush.msra.mxu0 %v200
      %1631 = vmatmul.f32.gmra.mxu0 %v1033
      %v1632 = vpop.f32.mrf.mxu0
      %v1633 = vadd.f32 %v1029, %v1632
      %1634 = vdwg.mxu0
      %1635 = vmatpush.msra.mxu0 0.0
      %1636 = vmatpush.msra.mxu0 0.0
      %1637 = vmatpush.msra.mxu0 0.0
      %1638 = vmatpush.msra.mxu0 0.0
      %1639 = vmatpush.msra.mxu0 0.0
      %1640 = vmatpush.msra.mxu0 0.0
      %1641 = vmatpush.msra.mxu0 0.0
      %1642 = vmatpush.msra.mxu0 %v993
      %1643 = vmatpush.msra.mxu0 %v891
      %1644 = vmatpush.msra.mxu0 %v789
      %1645 = vmatpush.msra.mxu0 %v687
      %1646 = vmatpush.msra.mxu0 %v585
      %1647 = vmatpush.msra.mxu0 %v483
      %1648 = vmatpush.msra.mxu0 %v381
      %1649 = vmatpush.msra.mxu0 %v279
      %1650 = vmatpush.msra.mxu0 %v201
      %1651 = vmatmul.f32.gmra.mxu0 %v1033
      %v1652 = vpop.f32.mrf.mxu0
      %v1653 = vadd.f32 %v1029, %v1652
      %1654 = vdwg.mxu0
      %1655 = vmatpush.msra.mxu0 0.0
      %1656 = vmatpush.msra.mxu0 0.0
      %1657 = vmatpush.msra.mxu0 0.0
      %1658 = vmatpush.msra.mxu0 0.0
      %1659 = vmatpush.msra.mxu0 0.0
      %1660 = vmatpush.msra.mxu0 0.0
      %1661 = vmatpush.msra.mxu0 0.0
      %1662 = vmatpush.msra.mxu0 %v992
      %1663 = vmatpush.msra.mxu0 %v890
      %1664 = vmatpush.msra.mxu0 %v788
      %1665 = vmatpush.msra.mxu0 %v686
      %1666 = vmatpush.msra.mxu0 %v584
      %1667 = vmatpush.msra.mxu0 %v482
      %1668 = vmatpush.msra.mxu0 %v380
      %1669 = vmatpush.msra.mxu0 %v278
      %1670 = vmatpush.msra.mxu0 %v202
      %1671 = vmatmul.f32.gmra.mxu0 %v1033
      %v1672 = vpop.f32.mrf.mxu0
      %v1673 = vadd.f32 %v1029, %v1672
      %1674 = vdwg.mxu0
      %1675 = vmatpush.msra.mxu0 0.0
      %1676 = vmatpush.msra.mxu0 0.0
      %1677 = vmatpush.msra.mxu0 0.0
      %1678 = vmatpush.msra.mxu0 0.0
      %1679 = vmatpush.msra.mxu0 0.0
      %1680 = vmatpush.msra.mxu0 0.0
      %1681 = vmatpush.msra.mxu0 0.0
      %1682 = vmatpush.msra.mxu0 %v991
      %1683 = vmatpush.msra.mxu0 %v889
      %1684 = vmatpush.msra.mxu0 %v787
      %1685 = vmatpush.msra.mxu0 %v685
      %1686 = vmatpush.msra.mxu0 %v583
      %1687 = vmatpush.msra.mxu0 %v481
      %1688 = vmatpush.msra.mxu0 %v379
      %1689 = vmatpush.msra.mxu0 %v277
      %1690 = vmatpush.msra.mxu0 %v203
      %1691 = vmatmul.f32.gmra.mxu0 %v1033
      %v1692 = vpop.f32.mrf.mxu0
      %v1693 = vadd.f32 %v1029, %v1692
      %1694 = vdwg.mxu0
      %v1695 = vsub.f32 0.0, %v1053
      %v1696 = vsub.f32 0.0, %v1073
      %v1697 = vsub.f32 0.0, %v1093
      %v1698 = vsub.f32 0.0, %v1113
      %v1699 = vsub.f32 0.0, %v1133
      %v1700 = vsub.f32 0.0, %v1153
      %v1701 = vsub.f32 0.0, %v1173
      %v1702 = vsub.f32 0.0, %v1193
      %v1703 = vsub.f32 0.0, %v1213
      %v1704 = vsub.f32 0.0, %v1233
      %v1705 = vsub.f32 0.0, %v1253
      %v1706 = vsub.f32 0.0, %v1273
      %v1707 = vsub.f32 0.0, %v1293
      %v1708 = vsub.f32 0.0, %v1313
      %v1709 = vsub.f32 0.0, %v1333
      %v1710 = vsub.f32 0.0, %v1353
      %v1711 = vsub.f32 0.0, %v1373
      %v1712 = vsub.f32 0.0, %v1393
      %v1713 = vsub.f32 0.0, %v1413
      %v1714 = vsub.f32 0.0, %v1433
      %v1715 = vsub.f32 0.0, %v1453
      %v1716 = vsub.f32 0.0, %v1473
      %v1717 = vsub.f32 0.0, %v1493
      %v1718 = vsub.f32 0.0, %v1513
      %v1719 = vsub.f32 0.0, %v1533
      %v1720 = vsub.f32 0.0, %v1553
      %v1721 = vsub.f32 0.0, %v1573
      %v1722 = vsub.f32 0.0, %v1593
      %v1723 = vsub.f32 0.0, %v1613
      %v1724 = vsub.f32 0.0, %v1633
      %v1725 = vsub.f32 0.0, %v1653
      %v1726 = vsub.f32 0.0, %v1673
      %v1727 = vsub.f32 0.0, %v1693
      %v1728 = vmul.f32 %v1695, 1.442695
      %v1729 = vpow.pop %v1728
      %v1730 = vmul.f32 %v1696, 1.442695
      %v1731 = vpow.pop %v1730
      %v1732 = vmul.f32 %v1697, 1.442695
      %v1733 = vpow.pop %v1732
      %v1734 = vmul.f32 %v1698, 1.442695
      %v1735 = vpow.pop %v1734
      %v1736 = vmul.f32 %v1699, 1.442695
      %v1737 = vpow.pop %v1736
      %v1738 = vmul.f32 %v1700, 1.442695
      %v1739 = vpow.pop %v1738
      %v1740 = vmul.f32 %v1701, 1.442695
      %v1741 = vpow.pop %v1740
      %v1742 = vmul.f32 %v1702, 1.442695
      %v1743 = vpow.pop %v1742
      %v1744 = vmul.f32 %v1703, 1.442695
      %v1745 = vpow.pop %v1744
      %v1746 = vmul.f32 %v1704, 1.442695
      %v1747 = vpow.pop %v1746
      %v1748 = vmul.f32 %v1705, 1.442695
      %v1749 = vpow.pop %v1748
      %v1750 = vmul.f32 %v1706, 1.442695
      %v1751 = vpow.pop %v1750
      %v1752 = vmul.f32 %v1707, 1.442695
      %v1753 = vpow.pop %v1752
      %v1754 = vmul.f32 %v1708, 1.442695
      %v1755 = vpow.pop %v1754
      %v1756 = vmul.f32 %v1709, 1.442695
      %v1757 = vpow.pop %v1756
      %v1758 = vmul.f32 %v1710, 1.442695
      %v1759 = vpow.pop %v1758
      %v1760 = vmul.f32 %v1711, 1.442695
      %v1761 = vpow.pop %v1760
      %v1762 = vmul.f32 %v1712, 1.442695
      %v1763 = vpow.pop %v1762
      %v1764 = vmul.f32 %v1713, 1.442695
      %v1765 = vpow.pop %v1764
      %v1766 = vmul.f32 %v1714, 1.442695
      %v1767 = vpow.pop %v1766
      %v1768 = vmul.f32 %v1715, 1.442695
      %v1769 = vpow.pop %v1768
      %v1770 = vmul.f32 %v1716, 1.442695
      %v1771 = vpow.pop %v1770
      %v1772 = vmul.f32 %v1717, 1.442695
      %v1773 = vpow.pop %v1772
      %v1774 = vmul.f32 %v1718, 1.442695
      %v1775 = vpow.pop %v1774
      %v1776 = vmul.f32 %v1719, 1.442695
      %v1777 = vpow.pop %v1776
      %v1778 = vmul.f32 %v1720, 1.442695
      %v1779 = vpow.pop %v1778
      %v1780 = vmul.f32 %v1721, 1.442695
      %v1781 = vpow.pop %v1780
      %v1782 = vmul.f32 %v1722, 1.442695
      %v1783 = vpow.pop %v1782
      %v1784 = vmul.f32 %v1723, 1.442695
      %v1785 = vpow.pop %v1784
      %v1786 = vmul.f32 %v1724, 1.442695
      %v1787 = vpow.pop %v1786
      %v1788 = vmul.f32 %v1725, 1.442695
      %v1789 = vpow.pop %v1788
      %v1790 = vmul.f32 %v1726, 1.442695
      %v1791 = vpow.pop %v1790
      %v1792 = vmul.f32 %v1727, 1.442695
      %v1793 = vpow.pop %v1792
      %v1794 = vadd.f32 %v1729, 1.0
      %v1795 = vadd.f32 %v1731, 1.0
      %v1796 = vadd.f32 %v1733, 1.0
      %v1797 = vadd.f32 %v1735, 1.0
      %v1798 = vadd.f32 %v1737, 1.0
      %v1799 = vadd.f32 %v1739, 1.0
      %v1800 = vadd.f32 %v1741, 1.0
      %v1801 = vadd.f32 %v1743, 1.0
      %v1802 = vadd.f32 %v1745, 1.0
      %v1803 = vadd.f32 %v1747, 1.0
      %v1804 = vadd.f32 %v1749, 1.0
      %v1805 = vadd.f32 %v1751, 1.0
      %v1806 = vadd.f32 %v1753, 1.0
      %v1807 = vadd.f32 %v1755, 1.0
      %v1808 = vadd.f32 %v1757, 1.0
      %v1809 = vadd.f32 %v1759, 1.0
      %v1810 = vadd.f32 %v1761, 1.0
      %v1811 = vadd.f32 %v1763, 1.0
      %v1812 = vadd.f32 %v1765, 1.0
      %v1813 = vadd.f32 %v1767, 1.0
      %v1814 = vadd.f32 %v1769, 1.0
      %v1815 = vadd.f32 %v1771, 1.0
      %v1816 = vadd.f32 %v1773, 1.0
      %v1817 = vadd.f32 %v1775, 1.0
      %v1818 = vadd.f32 %v1777, 1.0
      %v1819 = vadd.f32 %v1779, 1.0
      %v1820 = vadd.f32 %v1781, 1.0
      %v1821 = vadd.f32 %v1783, 1.0
      %v1822 = vadd.f32 %v1785, 1.0
      %v1823 = vadd.f32 %v1787, 1.0
      %v1824 = vadd.f32 %v1789, 1.0
      %v1825 = vadd.f32 %v1791, 1.0
      %v1826 = vadd.f32 %v1793, 1.0
      %v1827 = vrcp.pop %v1794
      %v1828 = vmul.f32 %v1794, %v1827
      %v1829 = vsub.f32 1.0, %v1828
      %v1830 = vmul.f32 %v1827, %v1829
      %v1831 = vadd.f32 %v1827, %v1830
      %vm1832 = vweird.f32 %v1794
      %vm1833 = vweird.f32 %v1827
      %vm1834 = vmor %vm1832, %vm1833
      %v1835 = vsel %vm1834, %v1827, %v1831
      %v1836 = vand.u32 2147483647, %v1794
      %vm1837 = vcmp.eq.f32.partialorder %v1836, 8.507059e+37
      %v1838 = vand.u32 %v1794, 2147483648
      %v1839 = vor.u32 1.1754944e-38, %v1838
      %v1840 = vsel %vm1837, %v1839, %v1835
      %v1841 = vmul.f32 1.0, %v1840
      %v1842 = vrcp.pop %v1795
      %v1843 = vmul.f32 %v1795, %v1842
      %v1844 = vsub.f32 1.0, %v1843
      %v1845 = vmul.f32 %v1842, %v1844
      %v1846 = vadd.f32 %v1842, %v1845
      %vm1847 = vweird.f32 %v1795
      %vm1848 = vweird.f32 %v1842
      %vm1849 = vmor %vm1847, %vm1848
      %v1850 = vsel %vm1849, %v1842, %v1846
      %v1851 = vand.u32 2147483647, %v1795
      %vm1852 = vcmp.eq.f32.partialorder %v1851, 8.507059e+37
      %v1853 = vand.u32 %v1795, 2147483648
      %v1854 = vor.u32 1.1754944e-38, %v1853
      %v1855 = vsel %vm1852, %v1854, %v1850
      %v1856 = vmul.f32 1.0, %v1855
      %v1857 = vrcp.pop %v1796
      %v1858 = vmul.f32 %v1796, %v1857
      %v1859 = vsub.f32 1.0, %v1858
      %v1860 = vmul.f32 %v1857, %v1859
      %v1861 = vadd.f32 %v1857, %v1860
      %vm1862 = vweird.f32 %v1796
      %vm1863 = vweird.f32 %v1857
      %vm1864 = vmor %vm1862, %vm1863
      %v1865 = vsel %vm1864, %v1857, %v1861
      %v1866 = vand.u32 2147483647, %v1796
      %vm1867 = vcmp.eq.f32.partialorder %v1866, 8.507059e+37
      %v1868 = vand.u32 %v1796, 2147483648
      %v1869 = vor.u32 1.1754944e-38, %v1868
      %v1870 = vsel %vm1867, %v1869, %v1865
      %v1871 = vmul.f32 1.0, %v1870
      %v1872 = vrcp.pop %v1797
      %v1873 = vmul.f32 %v1797, %v1872
      %v1874 = vsub.f32 1.0, %v1873
      %v1875 = vmul.f32 %v1872, %v1874
      %v1876 = vadd.f32 %v1872, %v1875
      %vm1877 = vweird.f32 %v1797
      %vm1878 = vweird.f32 %v1872
      %vm1879 = vmor %vm1877, %vm1878
      %v1880 = vsel %vm1879, %v1872, %v1876
      %v1881 = vand.u32 2147483647, %v1797
      %vm1882 = vcmp.eq.f32.partialorder %v1881, 8.507059e+37
      %v1883 = vand.u32 %v1797, 2147483648
      %v1884 = vor.u32 1.1754944e-38, %v1883
      %v1885 = vsel %vm1882, %v1884, %v1880
      %v1886 = vmul.f32 1.0, %v1885
      %v1887 = vrcp.pop %v1798
      %v1888 = vmul.f32 %v1798, %v1887
      %v1889 = vsub.f32 1.0, %v1888
      %v1890 = vmul.f32 %v1887, %v1889
      %v1891 = vadd.f32 %v1887, %v1890
      %vm1892 = vweird.f32 %v1798
      %vm1893 = vweird.f32 %v1887
      %vm1894 = vmor %vm1892, %vm1893
      %v1895 = vsel %vm1894, %v1887, %v1891
      %v1896 = vand.u32 2147483647, %v1798
      %vm1897 = vcmp.eq.f32.partialorder %v1896, 8.507059e+37
      %v1898 = vand.u32 %v1798, 2147483648
      %v1899 = vor.u32 1.1754944e-38, %v1898
      %v1900 = vsel %vm1897, %v1899, %v1895
      %v1901 = vmul.f32 1.0, %v1900
      %v1902 = vrcp.pop %v1799
      %v1903 = vmul.f32 %v1799, %v1902
      %v1904 = vsub.f32 1.0, %v1903
      %v1905 = vmul.f32 %v1902, %v1904
      %v1906 = vadd.f32 %v1902, %v1905
      %vm1907 = vweird.f32 %v1799
      %vm1908 = vweird.f32 %v1902
      %vm1909 = vmor %vm1907, %vm1908
      %v1910 = vsel %vm1909, %v1902, %v1906
      %v1911 = vand.u32 2147483647, %v1799
      %vm1912 = vcmp.eq.f32.partialorder %v1911, 8.507059e+37
      %v1913 = vand.u32 %v1799, 2147483648
      %v1914 = vor.u32 1.1754944e-38, %v1913
      %v1915 = vsel %vm1912, %v1914, %v1910
      %v1916 = vmul.f32 1.0, %v1915
      %v1917 = vrcp.pop %v1800
      %v1918 = vmul.f32 %v1800, %v1917
      %v1919 = vsub.f32 1.0, %v1918
      %v1920 = vmul.f32 %v1917, %v1919
      %v1921 = vadd.f32 %v1917, %v1920
      %vm1922 = vweird.f32 %v1800
      %vm1923 = vweird.f32 %v1917
      %vm1924 = vmor %vm1922, %vm1923
      %v1925 = vsel %vm1924, %v1917, %v1921
      %v1926 = vand.u32 2147483647, %v1800
      %vm1927 = vcmp.eq.f32.partialorder %v1926, 8.507059e+37
      %v1928 = vand.u32 %v1800, 2147483648
      %v1929 = vor.u32 1.1754944e-38, %v1928
      %v1930 = vsel %vm1927, %v1929, %v1925
      %v1931 = vmul.f32 1.0, %v1930
      %v1932 = vrcp.pop %v1801
      %v1933 = vmul.f32 %v1801, %v1932
      %v1934 = vsub.f32 1.0, %v1933
      %v1935 = vmul.f32 %v1932, %v1934
      %v1936 = vadd.f32 %v1932, %v1935
      %vm1937 = vweird.f32 %v1801
      %vm1938 = vweird.f32 %v1932
      %vm1939 = vmor %vm1937, %vm1938
      %v1940 = vsel %vm1939, %v1932, %v1936
      %v1941 = vand.u32 2147483647, %v1801
      %vm1942 = vcmp.eq.f32.partialorder %v1941, 8.507059e+37
      %v1943 = vand.u32 %v1801, 2147483648
      %v1944 = vor.u32 1.1754944e-38, %v1943
      %v1945 = vsel %vm1942, %v1944, %v1940
      %v1946 = vmul.f32 1.0, %v1945
      %v1947 = vrcp.pop %v1802
      %v1948 = vmul.f32 %v1802, %v1947
      %v1949 = vsub.f32 1.0, %v1948
      %v1950 = vmul.f32 %v1947, %v1949
      %v1951 = vadd.f32 %v1947, %v1950
      %vm1952 = vweird.f32 %v1802
      %vm1953 = vweird.f32 %v1947
      %vm1954 = vmor %vm1952, %vm1953
      %v1955 = vsel %vm1954, %v1947, %v1951
      %v1956 = vand.u32 2147483647, %v1802
      %vm1957 = vcmp.eq.f32.partialorder %v1956, 8.507059e+37
      %v1958 = vand.u32 %v1802, 2147483648
      %v1959 = vor.u32 1.1754944e-38, %v1958
      %v1960 = vsel %vm1957, %v1959, %v1955
      %v1961 = vmul.f32 1.0, %v1960
      %v1962 = vrcp.pop %v1803
      %v1963 = vmul.f32 %v1803, %v1962
      %v1964 = vsub.f32 1.0, %v1963
      %v1965 = vmul.f32 %v1962, %v1964
      %v1966 = vadd.f32 %v1962, %v1965
      %vm1967 = vweird.f32 %v1803
      %vm1968 = vweird.f32 %v1962
      %vm1969 = vmor %vm1967, %vm1968
      %v1970 = vsel %vm1969, %v1962, %v1966
      %v1971 = vand.u32 2147483647, %v1803
      %vm1972 = vcmp.eq.f32.partialorder %v1971, 8.507059e+37
      %v1973 = vand.u32 %v1803, 2147483648
      %v1974 = vor.u32 1.1754944e-38, %v1973
      %v1975 = vsel %vm1972, %v1974, %v1970
      %v1976 = vmul.f32 1.0, %v1975
      %v1977 = vrcp.pop %v1804
      %v1978 = vmul.f32 %v1804, %v1977
      %v1979 = vsub.f32 1.0, %v1978
      %v1980 = vmul.f32 %v1977, %v1979
      %v1981 = vadd.f32 %v1977, %v1980
      %vm1982 = vweird.f32 %v1804
      %vm1983 = vweird.f32 %v1977
      %vm1984 = vmor %vm1982, %vm1983
      %v1985 = vsel %vm1984, %v1977, %v1981
      %v1986 = vand.u32 2147483647, %v1804
      %vm1987 = vcmp.eq.f32.partialorder %v1986, 8.507059e+37
      %v1988 = vand.u32 %v1804, 2147483648
      %v1989 = vor.u32 1.1754944e-38, %v1988
      %v1990 = vsel %vm1987, %v1989, %v1985
      %v1991 = vmul.f32 1.0, %v1990
      %v1992 = vrcp.pop %v1805
      %v1993 = vmul.f32 %v1805, %v1992
      %v1994 = vsub.f32 1.0, %v1993
      %v1995 = vmul.f32 %v1992, %v1994
      %v1996 = vadd.f32 %v1992, %v1995
      %vm1997 = vweird.f32 %v1805
      %vm1998 = vweird.f32 %v1992
      %vm1999 = vmor %vm1997, %vm1998
      %v2000 = vsel %vm1999, %v1992, %v1996
      %v2001 = vand.u32 2147483647, %v1805
      %vm2002 = vcmp.eq.f32.partialorder %v2001, 8.507059e+37
      %v2003 = vand.u32 %v1805, 2147483648
      %v2004 = vor.u32 1.1754944e-38, %v2003
      %v2005 = vsel %vm2002, %v2004, %v2000
      %v2006 = vmul.f32 1.0, %v2005
      %v2007 = vrcp.pop %v1806
      %v2008 = vmul.f32 %v1806, %v2007
      %v2009 = vsub.f32 1.0, %v2008
      %v2010 = vmul.f32 %v2007, %v2009
      %v2011 = vadd.f32 %v2007, %v2010
      %vm2012 = vweird.f32 %v1806
      %vm2013 = vweird.f32 %v2007
      %vm2014 = vmor %vm2012, %vm2013
      %v2015 = vsel %vm2014, %v2007, %v2011
      %v2016 = vand.u32 2147483647, %v1806
      %vm2017 = vcmp.eq.f32.partialorder %v2016, 8.507059e+37
      %v2018 = vand.u32 %v1806, 2147483648
      %v2019 = vor.u32 1.1754944e-38, %v2018
      %v2020 = vsel %vm2017, %v2019, %v2015
      %v2021 = vmul.f32 1.0, %v2020
      %v2022 = vrcp.pop %v1807
      %v2023 = vmul.f32 %v1807, %v2022
      %v2024 = vsub.f32 1.0, %v2023
      %v2025 = vmul.f32 %v2022, %v2024
      %v2026 = vadd.f32 %v2022, %v2025
      %vm2027 = vweird.f32 %v1807
      %vm2028 = vweird.f32 %v2022
      %vm2029 = vmor %vm2027, %vm2028
      %v2030 = vsel %vm2029, %v2022, %v2026
      %v2031 = vand.u32 2147483647, %v1807
      %vm2032 = vcmp.eq.f32.partialorder %v2031, 8.507059e+37
      %v2033 = vand.u32 %v1807, 2147483648
      %v2034 = vor.u32 1.1754944e-38, %v2033
      %v2035 = vsel %vm2032, %v2034, %v2030
      %v2036 = vmul.f32 1.0, %v2035
      %v2037 = vrcp.pop %v1808
      %v2038 = vmul.f32 %v1808, %v2037
      %v2039 = vsub.f32 1.0, %v2038
      %v2040 = vmul.f32 %v2037, %v2039
      %v2041 = vadd.f32 %v2037, %v2040
      %vm2042 = vweird.f32 %v1808
      %vm2043 = vweird.f32 %v2037
      %vm2044 = vmor %vm2042, %vm2043
      %v2045 = vsel %vm2044, %v2037, %v2041
      %v2046 = vand.u32 2147483647, %v1808
      %vm2047 = vcmp.eq.f32.partialorder %v2046, 8.507059e+37
      %v2048 = vand.u32 %v1808, 2147483648
      %v2049 = vor.u32 1.1754944e-38, %v2048
      %v2050 = vsel %vm2047, %v2049, %v2045
      %v2051 = vmul.f32 1.0, %v2050
      %v2052 = vrcp.pop %v1809
      %v2053 = vmul.f32 %v1809, %v2052
      %v2054 = vsub.f32 1.0, %v2053
      %v2055 = vmul.f32 %v2052, %v2054
      %v2056 = vadd.f32 %v2052, %v2055
      %vm2057 = vweird.f32 %v1809
      %vm2058 = vweird.f32 %v2052
      %vm2059 = vmor %vm2057, %vm2058
      %v2060 = vsel %vm2059, %v2052, %v2056
      %v2061 = vand.u32 2147483647, %v1809
      %vm2062 = vcmp.eq.f32.partialorder %v2061, 8.507059e+37
      %v2063 = vand.u32 %v1809, 2147483648
      %v2064 = vor.u32 1.1754944e-38, %v2063
      %v2065 = vsel %vm2062, %v2064, %v2060
      %v2066 = vmul.f32 1.0, %v2065
      %v2067 = vrcp.pop %v1810
      %v2068 = vmul.f32 %v1810, %v2067
      %v2069 = vsub.f32 1.0, %v2068
      %v2070 = vmul.f32 %v2067, %v2069
      %v2071 = vadd.f32 %v2067, %v2070
      %vm2072 = vweird.f32 %v1810
      %vm2073 = vweird.f32 %v2067
      %vm2074 = vmor %vm2072, %vm2073
      %v2075 = vsel %vm2074, %v2067, %v2071
      %v2076 = vand.u32 2147483647, %v1810
      %vm2077 = vcmp.eq.f32.partialorder %v2076, 8.507059e+37
      %v2078 = vand.u32 %v1810, 2147483648
      %v2079 = vor.u32 1.1754944e-38, %v2078
      %v2080 = vsel %vm2077, %v2079, %v2075
      %v2081 = vmul.f32 1.0, %v2080
      %v2082 = vrcp.pop %v1811
      %v2083 = vmul.f32 %v1811, %v2082
      %v2084 = vsub.f32 1.0, %v2083
      %v2085 = vmul.f32 %v2082, %v2084
      %v2086 = vadd.f32 %v2082, %v2085
      %vm2087 = vweird.f32 %v1811
      %vm2088 = vweird.f32 %v2082
      %vm2089 = vmor %vm2087, %vm2088
      %v2090 = vsel %vm2089, %v2082, %v2086
      %v2091 = vand.u32 2147483647, %v1811
      %vm2092 = vcmp.eq.f32.partialorder %v2091, 8.507059e+37
      %v2093 = vand.u32 %v1811, 2147483648
      %v2094 = vor.u32 1.1754944e-38, %v2093
      %v2095 = vsel %vm2092, %v2094, %v2090
      %v2096 = vmul.f32 1.0, %v2095
      %v2097 = vrcp.pop %v1812
      %v2098 = vmul.f32 %v1812, %v2097
      %v2099 = vsub.f32 1.0, %v2098
      %v2100 = vmul.f32 %v2097, %v2099
      %v2101 = vadd.f32 %v2097, %v2100
      %vm2102 = vweird.f32 %v1812
      %vm2103 = vweird.f32 %v2097
      %vm2104 = vmor %vm2102, %vm2103
      %v2105 = vsel %vm2104, %v2097, %v2101
      %v2106 = vand.u32 2147483647, %v1812
      %vm2107 = vcmp.eq.f32.partialorder %v2106, 8.507059e+37
      %v2108 = vand.u32 %v1812, 2147483648
      %v2109 = vor.u32 1.1754944e-38, %v2108
      %v2110 = vsel %vm2107, %v2109, %v2105
      %v2111 = vmul.f32 1.0, %v2110
      %v2112 = vrcp.pop %v1813
      %v2113 = vmul.f32 %v1813, %v2112
      %v2114 = vsub.f32 1.0, %v2113
      %v2115 = vmul.f32 %v2112, %v2114
      %v2116 = vadd.f32 %v2112, %v2115
      %vm2117 = vweird.f32 %v1813
      %vm2118 = vweird.f32 %v2112
      %vm2119 = vmor %vm2117, %vm2118
      %v2120 = vsel %vm2119, %v2112, %v2116
      %v2121 = vand.u32 2147483647, %v1813
      %vm2122 = vcmp.eq.f32.partialorder %v2121, 8.507059e+37
      %v2123 = vand.u32 %v1813, 2147483648
      %v2124 = vor.u32 1.1754944e-38, %v2123
      %v2125 = vsel %vm2122, %v2124, %v2120
      %v2126 = vmul.f32 1.0, %v2125
      %v2127 = vrcp.pop %v1814
      %v2128 = vmul.f32 %v1814, %v2127
      %v2129 = vsub.f32 1.0, %v2128
      %v2130 = vmul.f32 %v2127, %v2129
      %v2131 = vadd.f32 %v2127, %v2130
      %vm2132 = vweird.f32 %v1814
      %vm2133 = vweird.f32 %v2127
      %vm2134 = vmor %vm2132, %vm2133
      %v2135 = vsel %vm2134, %v2127, %v2131
      %v2136 = vand.u32 2147483647, %v1814
      %vm2137 = vcmp.eq.f32.partialorder %v2136, 8.507059e+37
      %v2138 = vand.u32 %v1814, 2147483648
      %v2139 = vor.u32 1.1754944e-38, %v2138
      %v2140 = vsel %vm2137, %v2139, %v2135
      %v2141 = vmul.f32 1.0, %v2140
      %v2142 = vrcp.pop %v1815
      %v2143 = vmul.f32 %v1815, %v2142
      %v2144 = vsub.f32 1.0, %v2143
      %v2145 = vmul.f32 %v2142, %v2144
      %v2146 = vadd.f32 %v2142, %v2145
      %vm2147 = vweird.f32 %v1815
      %vm2148 = vweird.f32 %v2142
      %vm2149 = vmor %vm2147, %vm2148
      %v2150 = vsel %vm2149, %v2142, %v2146
      %v2151 = vand.u32 2147483647, %v1815
      %vm2152 = vcmp.eq.f32.partialorder %v2151, 8.507059e+37
      %v2153 = vand.u32 %v1815, 2147483648
      %v2154 = vor.u32 1.1754944e-38, %v2153
      %v2155 = vsel %vm2152, %v2154, %v2150
      %v2156 = vmul.f32 1.0, %v2155
      %v2157 = vrcp.pop %v1816
      %v2158 = vmul.f32 %v1816, %v2157
      %v2159 = vsub.f32 1.0, %v2158
      %v2160 = vmul.f32 %v2157, %v2159
      %v2161 = vadd.f32 %v2157, %v2160
      %vm2162 = vweird.f32 %v1816
      %vm2163 = vweird.f32 %v2157
      %vm2164 = vmor %vm2162, %vm2163
      %v2165 = vsel %vm2164, %v2157, %v2161
      %v2166 = vand.u32 2147483647, %v1816
      %vm2167 = vcmp.eq.f32.partialorder %v2166, 8.507059e+37
      %v2168 = vand.u32 %v1816, 2147483648
      %v2169 = vor.u32 1.1754944e-38, %v2168
      %v2170 = vsel %vm2167, %v2169, %v2165
      %v2171 = vmul.f32 1.0, %v2170
      %v2172 = vrcp.pop %v1817
      %v2173 = vmul.f32 %v1817, %v2172
      %v2174 = vsub.f32 1.0, %v2173
      %v2175 = vmul.f32 %v2172, %v2174
      %v2176 = vadd.f32 %v2172, %v2175
      %vm2177 = vweird.f32 %v1817
      %vm2178 = vweird.f32 %v2172
      %vm2179 = vmor %vm2177, %vm2178
      %v2180 = vsel %vm2179, %v2172, %v2176
      %v2181 = vand.u32 2147483647, %v1817
      %vm2182 = vcmp.eq.f32.partialorder %v2181, 8.507059e+37
      %v2183 = vand.u32 %v1817, 2147483648
      %v2184 = vor.u32 1.1754944e-38, %v2183
      %v2185 = vsel %vm2182, %v2184, %v2180
      %v2186 = vmul.f32 1.0, %v2185
      %v2187 = vrcp.pop %v1818
      %v2188 = vmul.f32 %v1818, %v2187
      %v2189 = vsub.f32 1.0, %v2188
      %v2190 = vmul.f32 %v2187, %v2189
      %v2191 = vadd.f32 %v2187, %v2190
      %vm2192 = vweird.f32 %v1818
      %vm2193 = vweird.f32 %v2187
      %vm2194 = vmor %vm2192, %vm2193
      %v2195 = vsel %vm2194, %v2187, %v2191
      %v2196 = vand.u32 2147483647, %v1818
      %vm2197 = vcmp.eq.f32.partialorder %v2196, 8.507059e+37
      %v2198 = vand.u32 %v1818, 2147483648
      %v2199 = vor.u32 1.1754944e-38, %v2198
      %v2200 = vsel %vm2197, %v2199, %v2195
      %v2201 = vmul.f32 1.0, %v2200
      %v2202 = vrcp.pop %v1819
      %v2203 = vmul.f32 %v1819, %v2202
      %v2204 = vsub.f32 1.0, %v2203
      %v2205 = vmul.f32 %v2202, %v2204
      %v2206 = vadd.f32 %v2202, %v2205
      %vm2207 = vweird.f32 %v1819
      %vm2208 = vweird.f32 %v2202
      %vm2209 = vmor %vm2207, %vm2208
      %v2210 = vsel %vm2209, %v2202, %v2206
      %v2211 = vand.u32 2147483647, %v1819
      %vm2212 = vcmp.eq.f32.partialorder %v2211, 8.507059e+37
      %v2213 = vand.u32 %v1819, 2147483648
      %v2214 = vor.u32 1.1754944e-38, %v2213
      %v2215 = vsel %vm2212, %v2214, %v2210
      %v2216 = vmul.f32 1.0, %v2215
      %v2217 = vrcp.pop %v1820
      %v2218 = vmul.f32 %v1820, %v2217
      %v2219 = vsub.f32 1.0, %v2218
      %v2220 = vmul.f32 %v2217, %v2219
      %v2221 = vadd.f32 %v2217, %v2220
      %vm2222 = vweird.f32 %v1820
      %vm2223 = vweird.f32 %v2217
      %vm2224 = vmor %vm2222, %vm2223
      %v2225 = vsel %vm2224, %v2217, %v2221
      %v2226 = vand.u32 2147483647, %v1820
      %vm2227 = vcmp.eq.f32.partialorder %v2226, 8.507059e+37
      %v2228 = vand.u32 %v1820, 2147483648
      %v2229 = vor.u32 1.1754944e-38, %v2228
      %v2230 = vsel %vm2227, %v2229, %v2225
      %v2231 = vmul.f32 1.0, %v2230
      %v2232 = vrcp.pop %v1821
      %v2233 = vmul.f32 %v1821, %v2232
      %v2234 = vsub.f32 1.0, %v2233
      %v2235 = vmul.f32 %v2232, %v2234
      %v2236 = vadd.f32 %v2232, %v2235
      %vm2237 = vweird.f32 %v1821
      %vm2238 = vweird.f32 %v2232
      %vm2239 = vmor %vm2237, %vm2238
      %v2240 = vsel %vm2239, %v2232, %v2236
      %v2241 = vand.u32 2147483647, %v1821
      %vm2242 = vcmp.eq.f32.partialorder %v2241, 8.507059e+37
      %v2243 = vand.u32 %v1821, 2147483648
      %v2244 = vor.u32 1.1754944e-38, %v2243
      %v2245 = vsel %vm2242, %v2244, %v2240
      %v2246 = vmul.f32 1.0, %v2245
      %v2247 = vrcp.pop %v1822
      %v2248 = vmul.f32 %v1822, %v2247
      %v2249 = vsub.f32 1.0, %v2248
      %v2250 = vmul.f32 %v2247, %v2249
      %v2251 = vadd.f32 %v2247, %v2250
      %vm2252 = vweird.f32 %v1822
      %vm2253 = vweird.f32 %v2247
      %vm2254 = vmor %vm2252, %vm2253
      %v2255 = vsel %vm2254, %v2247, %v2251
      %v2256 = vand.u32 2147483647, %v1822
      %vm2257 = vcmp.eq.f32.partialorder %v2256, 8.507059e+37
      %v2258 = vand.u32 %v1822, 2147483648
      %v2259 = vor.u32 1.1754944e-38, %v2258
      %v2260 = vsel %vm2257, %v2259, %v2255
      %v2261 = vmul.f32 1.0, %v2260
      %v2262 = vrcp.pop %v1823
      %v2263 = vmul.f32 %v1823, %v2262
      %v2264 = vsub.f32 1.0, %v2263
      %v2265 = vmul.f32 %v2262, %v2264
      %v2266 = vadd.f32 %v2262, %v2265
      %vm2267 = vweird.f32 %v1823
      %vm2268 = vweird.f32 %v2262
      %vm2269 = vmor %vm2267, %vm2268
      %v2270 = vsel %vm2269, %v2262, %v2266
      %v2271 = vand.u32 2147483647, %v1823
      %vm2272 = vcmp.eq.f32.partialorder %v2271, 8.507059e+37
      %v2273 = vand.u32 %v1823, 2147483648
      %v2274 = vor.u32 1.1754944e-38, %v2273
      %v2275 = vsel %vm2272, %v2274, %v2270
      %v2276 = vmul.f32 1.0, %v2275
      %v2277 = vrcp.pop %v1824
      %v2278 = vmul.f32 %v1824, %v2277
      %v2279 = vsub.f32 1.0, %v2278
      %v2280 = vmul.f32 %v2277, %v2279
      %v2281 = vadd.f32 %v2277, %v2280
      %vm2282 = vweird.f32 %v1824
      %vm2283 = vweird.f32 %v2277
      %vm2284 = vmor %vm2282, %vm2283
      %v2285 = vsel %vm2284, %v2277, %v2281
      %v2286 = vand.u32 2147483647, %v1824
      %vm2287 = vcmp.eq.f32.partialorder %v2286, 8.507059e+37
      %v2288 = vand.u32 %v1824, 2147483648
      %v2289 = vor.u32 1.1754944e-38, %v2288
      %v2290 = vsel %vm2287, %v2289, %v2285
      %v2291 = vmul.f32 1.0, %v2290
      %v2292 = vrcp.pop %v1825
      %v2293 = vmul.f32 %v1825, %v2292
      %v2294 = vsub.f32 1.0, %v2293
      %v2295 = vmul.f32 %v2292, %v2294
      %v2296 = vadd.f32 %v2292, %v2295
      %vm2297 = vweird.f32 %v1825
      %vm2298 = vweird.f32 %v2292
      %vm2299 = vmor %vm2297, %vm2298
      %v2300 = vsel %vm2299, %v2292, %v2296
      %v2301 = vand.u32 2147483647, %v1825
      %vm2302 = vcmp.eq.f32.partialorder %v2301, 8.507059e+37
      %v2303 = vand.u32 %v1825, 2147483648
      %v2304 = vor.u32 1.1754944e-38, %v2303
      %v2305 = vsel %vm2302, %v2304, %v2300
      %v2306 = vmul.f32 1.0, %v2305
      %v2307 = vrcp.pop %v1826
      %v2308 = vmul.f32 %v1826, %v2307
      %v2309 = vsub.f32 1.0, %v2308
      %v2310 = vmul.f32 %v2307, %v2309
      %v2311 = vadd.f32 %v2307, %v2310
      %vm2312 = vweird.f32 %v1826
      %vm2313 = vweird.f32 %v2307
      %vm2314 = vmor %vm2312, %vm2313
      %v2315 = vsel %vm2314, %v2307, %v2311
      %v2316 = vand.u32 2147483647, %v1826
      %vm2317 = vcmp.eq.f32.partialorder %v2316, 8.507059e+37
      %v2318 = vand.u32 %v1826, 2147483648
      %v2319 = vor.u32 1.1754944e-38, %v2318
      %v2320 = vsel %vm2317, %v2319, %v2315
      %v2321 = vmul.f32 1.0, %v2320
      %v2354 = vrot.slane %v1856, 4
      %v2355 = vrot.slane %v1886, 4
      %v2356 = vrot.slane %v1916, 4
      %v2357 = vrot.slane %v1946, 4
      %v2358 = vrot.slane %v1976, 4
      %v2359 = vrot.slane %v2006, 4
      %v2360 = vrot.slane %v2036, 4
      %v2361 = vrot.slane %v2066, 4
      %v2362 = vrot.slane %v2096, 4
      %v2363 = vrot.slane %v2126, 4
      %v2364 = vrot.slane %v2156, 4
      %v2365 = vrot.slane %v2186, 4
      %v2366 = vrot.slane %v2216, 4
      %v2367 = vrot.slane %v2246, 4
      %v2368 = vrot.slane %v2276, 4
      %v2369 = vrot.slane %v2306, 4
      %vm2370 = vcmask 1043456
      %v2371 = vsel %vm2370, %v1841, %v2354
      %v2372 = vsel %vm2370, %v1871, %v2355
      %v2373 = vsel %vm2370, %v1901, %v2356
      %v2374 = vsel %vm2370, %v1931, %v2357
      %v2375 = vsel %vm2370, %v1961, %v2358
      %v2376 = vsel %vm2370, %v1991, %v2359
      %v2377 = vsel %vm2370, %v2021, %v2360
      %v2378 = vsel %vm2370, %v2051, %v2361
      %v2379 = vsel %vm2370, %v2081, %v2362
      %v2380 = vsel %vm2370, %v2111, %v2363
      %v2381 = vsel %vm2370, %v2141, %v2364
      %v2382 = vsel %vm2370, %v2171, %v2365
      %v2383 = vsel %vm2370, %v2201, %v2366
      %v2384 = vsel %vm2370, %v2231, %v2367
      %v2385 = vsel %vm2370, %v2261, %v2368
      %v2386 = vsel %vm2370, %v2291, %v2369
      %2403 = vst [vmem:[%s170] sm:$0x77] %v2371
      %2404 = vst [vmem:[%s170 + $0x8] sm:$0x77] %v2372
      %2405 = vst [vmem:[%s170 + $0x10] sm:$0x77] %v2373
      %2406 = vst [vmem:[%s170 + $0x18] sm:$0x77] %v2374
      %2407 = vst [vmem:[%s170 + $0x20] sm:$0x77] %v2375
      %2408 = vst [vmem:[%s170 + $0x28] sm:$0x77] %v2376
      %2409 = vst [vmem:[%s170 + $0x30] sm:$0x77] %v2377
      %2410 = vst [vmem:[%s170 + $0x38] sm:$0x77] %v2378
      %2411 = vst [vmem:[%s170 + $0x40] sm:$0x77] %v2379
      %2412 = vst [vmem:[%s170 + $0x48] sm:$0x77] %v2380
      %2413 = vst [vmem:[%s170 + $0x50] sm:$0x77] %v2381
      %2414 = vst [vmem:[%s170 + $0x58] sm:$0x77] %v2382
      %2415 = vst [vmem:[%s170 + $0x60] sm:$0x77] %v2383
      %2416 = vst [vmem:[%s170 + $0x68] sm:$0x77] %v2384
      %2417 = vst [vmem:[%s170 + $0x70] sm:$0x77] %v2385
      %2418 = vst [vmem:[%s170 + $0x78] sm:$0x77] %v2386
      %2419 = vst [vmem:[%s170 + $0x80] sm:$0x7] %v2321
      %p2420 = scmp.lt.s32.totalorder %s14, 1
      %s2421 = scalar_select %p2420, %s14, 1
      %s2422 = smul.addr %s2421, 33
      %s2423 = smul.addr %s2422, 4
      %s2424 = scalar_lea.vmem %s3, %s2423
      // Predicated region
      $region33: #{dcgan_forward.7} parent=31 // pred_check
        %p2425 = pneg %p100
      $region34: #{dcgan_forward.7} parent=31 // pred_check_branch
        %2427 = sbr.rel (%p2425) target = $region36
      $region35: #{dcgan_forward.7} parent=31 // pred_region
        _
      $region36: #{dcgan_forward.7} parent=31 // pred_fallthru
        _
    $region32: #{dcgan_forward.7} parent=5 // pred_fallthru
      _
    %p2428 = scmp.le.s32.totalorder 2, %s9
    // Predicated region
    $region37: #{dcgan_forward.7} parent=5 // pred_check
      %p2429 = pneg %p2428
    $region38: #{dcgan_forward.7} parent=5 // pred_check_branch
      %2431 = sbr.rel (%p2429) target = $region40
    $region39: #{dcgan_forward.7} parent=5 // pred_region
      %s2432 = ssub.s32 %s9, 2
      // Predicated region
      $region41: #{dcgan_forward.7} parent=39 // pred_check
        %p2433 = pneg %p106
      $region42: #{dcgan_forward.7} parent=39 // pred_check_branch
        %2435 = sbr.rel (%p2433) target = $region44
      $region43: #{dcgan_forward.7} parent=39 // pred_region
        %p2436 = scmp.lt.s32.totalorder %s15, 1
        %s2437 = scalar_select %p2436, %s15, 1
        %s2438 = smul.addr %s2437, 33
        %s2439 = smul.addr %s2438, 4
        %s2440 = scalar_lea.vmem %s3, %s2439
      $region44: #{dcgan_forward.7} parent=39 // pred_fallthru
        _
    $region40: #{dcgan_forward.7} parent=5 // pred_fallthru
      _
  $region6: #{dcgan_forward.7} parent=0 // loop_footer
    %s13 = sadd.s32 1, %s9
  $region7: #{dcgan_forward.7} parent=0 // loop_footer_branch
    %8 = sbr.rel target = $region3
  $region8: #{dcgan_forward.7} parent=0 // loop_exit
    _

</llo_original>
